<compile_context>
chip_gen: v7x
topology: tpu7x:2x2x1
jax: 0.10.0
libtpu: 0.0.40
codegen_flags: <defaults>
</compile_context>

<pallas_src>
import functools
import math

import jax
import jax.numpy as jnp
from jax.experimental import pallas as pl
from jax.experimental.pallas import tpu as pltpu


def _vmem_limit_bytes(*buffer_bytes):
    # 2x for double-buffering + 4 MiB headroom; floor at the smallest
    # per-generation default (16 MiB) and cap safely below v7x's 64 MiB.
    est = 2 * sum(buffer_bytes) + (4 << 20)
    return int(min(max(est, 16 << 20), 48 << 20))


# ---------------------------------------------------------------------------
# Fused kernel: one batch element per grid step.
# ---------------------------------------------------------------------------
def _fused_attention_kernel(x_ref, mask_ref,
                            wq_ref, wk_ref, wv_ref, wo_ref,
                            bq_ref, bk_ref, bv_ref,
                            bo_ref, gamma_ref, beta_ref,
                            o_ref, *, num_heads, scale, eps, inv_hidden):
    x = x_ref[0].astype(jnp.float32)                        # (S, H)
    mask = mask_ref[0].astype(jnp.float32)                  # (1, S) additive

    # Accumulator for ctx @ Wo^T, summed over heads (same FLOPs as one
    # (S,H)x(H,H) matmul, avoids assembling ctx via lane-offset writes).
    acc = jnp.zeros(x.shape, jnp.float32)                   # (S, H)

    # Static (unrolled) loop over heads; all intermediates stay in VMEM.
    for h in range(num_heads):
        q = jnp.dot(x, wq_ref[h], preferred_element_type=jnp.float32) + bq_ref[h]
        k = jnp.dot(x, wk_ref[h], preferred_element_type=jnp.float32) + bk_ref[h]
        v = jnp.dot(x, wv_ref[h], preferred_element_type=jnp.float32) + bv_ref[h]
        s = jax.lax.dot_general(q, k, (((1,), (1,)), ((), ())),
                                preferred_element_type=jnp.float32)
        s = s * scale + mask                                 # (S, S)
        m = jnp.max(s, axis=-1, keepdims=True)
        p = jnp.exp(s - m)
        denom = jnp.sum(p, axis=-1, keepdims=True)
        # TODO(synk): attention-probs dropout is identity here (eval mode).
        ctx = jnp.dot(p, v, preferred_element_type=jnp.float32) / denom  # (S, dH)
        acc = acc + jnp.dot(ctx, wo_ref[h], preferred_element_type=jnp.float32)

    # Self-output: bias + residual + LayerNorm (one-pass statistics).
    # TODO(synk): hidden-state dropout is identity here (eval mode).
    y = acc + bo_ref[...] + x
    s1 = jnp.sum(y, axis=-1, keepdims=True)
    s2 = jnp.sum(y * y, axis=-1, keepdims=True)
    mean = s1 * inv_hidden
    var = s2 * inv_hidden - mean * mean
    inv = jax.lax.rsqrt(var + eps)
    out = (y - mean) * inv * gamma_ref[...] + beta_ref[...]
    o_ref[0] = out.astype(o_ref.dtype)


# ---------------------------------------------------------------------------
# RobertaAttention forward (eval mode, absolute positions, self-attention)
# ---------------------------------------------------------------------------
def roberta_attention(hidden_states, attention_mask, params, num_heads, eps):
    """hidden_states: (B, S, H); attention_mask: (B,1,1,S) additive or None;
    params: nn.Linear-style weights (out_features, in_features)."""
    B, S, H = hidden_states.shape
    dH = H // num_heads

    # Per-head weight slabs: head on the leading axis so the kernel never
    # slices along the lane dimension.
    #   wq/wk/wv:  W[h*dH+d, i]  -> (nH, H_in, dH)
    #   wo:        W[c, h*dH+d]  -> (nH, dH, H_out)
    wq_h = params["wq"].reshape(num_heads, dH, H).transpose(0, 2, 1)
    wk_h = params["wk"].reshape(num_heads, dH, H).transpose(0, 2, 1)
    wv_h = params["wv"].reshape(num_heads, dH, H).transpose(0, 2, 1)
    wo_h = params["wo"].T.reshape(num_heads, dH, H)
    bq_h = params["bq"].reshape(num_heads, 1, dH)
    bk_h = params["bk"].reshape(num_heads, 1, dH)
    bv_h = params["bv"].reshape(num_heads, 1, dH)

    if attention_mask is None:
        mask = jnp.zeros((B, 1, S), jnp.float32)
    else:
        mask = attention_mask.reshape(B, 1, S).astype(jnp.float32)

    row_spec = pl.BlockSpec((1, S, H), lambda b: (b, 0, 0))
    mask_spec = pl.BlockSpec((1, 1, S), lambda b: (b, 0, 0))
    whead_spec = pl.BlockSpec((num_heads, H, dH), lambda b: (0, 0, 0))  # resident
    wout_spec = pl.BlockSpec((num_heads, dH, H), lambda b: (0, 0, 0))   # resident
    bhead_spec = pl.BlockSpec((num_heads, 1, dH), lambda b: (0, 0, 0))
    vec_spec = pl.BlockSpec((1, H), lambda b: (0, 0))

    itemsize = hidden_states.dtype.itemsize
    vmem = _vmem_limit_bytes(
        4 * H * H * itemsize,                     # 4 resident weight slabs
        4 * S * H * itemsize,                     # x + out, double-buffered
        (S * S + 4 * S * dH + 2 * S * H) * 4,     # in-kernel f32 temporaries
    )

    kernel = functools.partial(
        _fused_attention_kernel,
        num_heads=num_heads,
        scale=1.0 / math.sqrt(dH),
        eps=float(eps),
        inv_hidden=1.0 / H)

    out = pl.pallas_call(
        kernel,
        out_shape=jax.ShapeDtypeStruct((B, S, H), hidden_states.dtype),
        grid_spec=pltpu.PrefetchScalarGridSpec(
            num_scalar_prefetch=0,
            grid=(B,),
            in_specs=[row_spec, mask_spec,
                      whead_spec, whead_spec, whead_spec, wout_spec,
                      bhead_spec, bhead_spec, bhead_spec,
                      vec_spec, vec_spec, vec_spec],
            out_specs=row_spec),
        compiler_params=pltpu.CompilerParams(
            dimension_semantics=("parallel",),
            vmem_limit_bytes=vmem),
    )(hidden_states, mask,
      wq_h, wk_h, wv_h, wo_h,
      bq_h, bk_h, bv_h,
      params["bo"].reshape(1, H),
      params["gamma"].reshape(1, H),
      params["beta"].reshape(1, H))
    return out


# ---------------------------------------------------------------------------
# Pure-JAX reference (mirrors the PyTorch module in eval mode)
# ---------------------------------------------------------------------------
def _reference(hidden_states, attention_mask, p, num_heads, eps):
    B, S, H = hidden_states.shape
    dH = H // num_heads
    dense = lambda x, w, b: x @ w.T + b
    q = dense(hidden_states, p["wq"], p["bq"])
    k = dense(hidden_states, p["wk"], p["bk"])
    v = dense(hidden_states, p["wv"], p["bv"])
    split = lambda x: x.reshape(B, S, num_heads, dH).transpose(0, 2, 1, 3)
    q, k, v = split(q), split(k), split(v)
    scores = jnp.einsum("bhqd,bhkd->bhqk", q, k) / math.sqrt(dH)
    if attention_mask is not None:
        scores = scores + attention_mask
    probs = jax.nn.softmax(scores, axis=-1)
    ctx = jnp.einsum("bhqk,bhkd->bhqd", probs, v)
    ctx = ctx.transpose(0, 2, 1, 3).reshape(B, S, H)
    y = dense(ctx, p["wo"], p["bo"]) + hidden_states
    mean = jnp.mean(y, -1, keepdims=True)
    var = jnp.mean((y - mean) ** 2, -1, keepdims=True)
    return (y - mean) / jnp.sqrt(var + eps) * p["gamma"] + p["beta"]


if __name__ == "__main__":
    B, S, H, nH = 2, 16, 128, 4
    eps = 1e-5

    key = jax.random.PRNGKey(0)
    ks = jax.random.split(key, 12)
    hidden_states = jax.random.normal(ks[0], (B, S, H), dtype=jnp.float32)
    params = {
        "wq": jax.random.normal(ks[1], (H, H), jnp.float32) * 0.02,
        "bq": jax.random.normal(ks[2], (H,), jnp.float32) * 0.02,
        "wk": jax.random.normal(ks[3], (H, H), jnp.float32) * 0.02,
        "bk": jax.random.normal(ks[4], (H,), jnp.float32) * 0.02,
        "wv": jax.random.normal(ks[5], (H, H), jnp.float32) * 0.02,
        "bv": jax.random.normal(ks[6], (H,), jnp.float32) * 0.02,
        "wo": jax.random.normal(ks[7], (H, H), jnp.float32) * 0.02,
        "bo": jax.random.normal(ks[8], (H,), jnp.float32) * 0.02,
        "gamma": 1.0 + jax.random.normal(ks[9], (H,), jnp.float32) * 0.01,
        "beta": jax.random.normal(ks[10], (H,), jnp.float32) * 0.01,
    }
    # Additive attention mask (B,1,1,S): mask out the last 4 keys of batch 1.
    attention_mask = jnp.zeros((B, 1, 1, S), jnp.float32)
    attention_mask = attention_mask.at[1, :, :, S - 4:].set(-10000.0)

    out = roberta_attention(hidden_states, attention_mask, params, nH, eps)
    out = jax.block_until_ready(out)

    ref = _reference(hidden_states, attention_mask, params, nH, eps)
    err = jnp.max(jnp.abs(out - ref))
    assert jnp.allclose(out, ref, atol=2e-4, rtol=2e-4), \
        f"max abs err = {err}"
    print("KERNEL_OK")
</pallas_src>

<mosaic_0001>
module attributes {stable_mosaic.version = 11 : i64} {
  func.func @_fused_attention_kernel(%arg0: i32, %arg1: memref<1x16x128xf32, #tpu.memory_space<vmem>>, %arg2: memref<1x1x16xf32, #tpu.memory_space<vmem>>, %arg3: memref<4x128x32xf32, #tpu.memory_space<vmem>>, %arg4: memref<4x128x32xf32, #tpu.memory_space<vmem>>, %arg5: memref<4x128x32xf32, #tpu.memory_space<vmem>>, %arg6: memref<4x32x128xf32, #tpu.memory_space<vmem>>, %arg7: memref<4x1x32xf32, #tpu.memory_space<vmem>>, %arg8: memref<4x1x32xf32, #tpu.memory_space<vmem>>, %arg9: memref<4x1x32xf32, #tpu.memory_space<vmem>>, %arg10: memref<1x128xf32, #tpu.memory_space<vmem>>, %arg11: memref<1x128xf32, #tpu.memory_space<vmem>>, %arg12: memref<1x128xf32, #tpu.memory_space<vmem>>, %arg13: memref<1x16x128xf32, #tpu.memory_space<vmem>>) attributes {dimension_semantics = [#tpu.dimension_semantics<parallel>], iteration_bounds = array<i64: 2>, scalar_prefetch = 0 : i64, scratch_operands = 0 : i64, tpu.core_type = #tpu.core_type<tc>, window_params = [{transform_indices = @transform_0, window_bounds = array<i64: 1, 16, 128>}, {transform_indices = @transform_1, window_bounds = array<i64: 1, 1, 16>}, {pipeline_mode = #tpu.pipeline_mode<synchronous>, transform_indices = @transform_2, window_bounds = array<i64: 4, 128, 32>}, {pipeline_mode = #tpu.pipeline_mode<synchronous>, transform_indices = @transform_3, window_bounds = array<i64: 4, 128, 32>}, {pipeline_mode = #tpu.pipeline_mode<synchronous>, transform_indices = @transform_4, window_bounds = array<i64: 4, 128, 32>}, {pipeline_mode = #tpu.pipeline_mode<synchronous>, transform_indices = @transform_5, window_bounds = array<i64: 4, 32, 128>}, {pipeline_mode = #tpu.pipeline_mode<synchronous>, transform_indices = @transform_6, window_bounds = array<i64: 4, 1, 32>}, {pipeline_mode = #tpu.pipeline_mode<synchronous>, transform_indices = @transform_7, window_bounds = array<i64: 4, 1, 32>}, {pipeline_mode = #tpu.pipeline_mode<synchronous>, transform_indices = @transform_8, window_bounds = array<i64: 4, 1, 32>}, {pipeline_mode = #tpu.pipeline_mode<synchronous>, transform_indices = @transform_9, window_bounds = array<i64: 1, 128>}, {pipeline_mode = #tpu.pipeline_mode<synchronous>, transform_indices = @transform_10, window_bounds = array<i64: 1, 128>}, {pipeline_mode = #tpu.pipeline_mode<synchronous>, transform_indices = @transform_11, window_bounds = array<i64: 1, 128>}, {transform_indices = @transform_12, window_bounds = array<i64: 1, 16, 128>}]} {
    %c0 = arith.constant 0 : index
    %c0_0 = arith.constant 0 : index
    %c0_1 = arith.constant 0 : index
    %0 = vector.load %arg1[%c0, %c0_0, %c0_1] : memref<1x16x128xf32, #tpu.memory_space<vmem>>, vector<1x16x128xf32>
    %1 = vector.shape_cast %0 : vector<1x16x128xf32> to vector<16x128xf32>
    %c0_2 = arith.constant 0 : index
    %c0_3 = arith.constant 0 : index
    %c0_4 = arith.constant 0 : index
    %2 = vector.load %arg2[%c0_2, %c0_3, %c0_4] : memref<1x1x16xf32, #tpu.memory_space<vmem>>, vector<1x1x16xf32>
    %3 = vector.shape_cast %2 : vector<1x1x16xf32> to vector<1x16xf32>
    %cst = arith.constant 0.000000e+00 : f32
    %4 = vector.broadcast %cst : f32 to vector<16x128xf32>
    %c0_5 = arith.constant 0 : index
    %c0_6 = arith.constant 0 : index
    %c0_7 = arith.constant 0 : index
    %5 = vector.load %arg3[%c0_5, %c0_6, %c0_7] : memref<4x128x32xf32, #tpu.memory_space<vmem>>, vector<1x128x32xf32>
    %6 = vector.shape_cast %5 : vector<1x128x32xf32> to vector<128x32xf32>
    %cst_8 = arith.constant dense<0.000000e+00> : vector<16x32xf32>
    %7 = tpu.matmul %1, %6, %cst_8 {dimension_numbers = #tpu.dot_dimension_numbers<[1], [0], [0], [1], [0, 0, 1, 1], [], []>} : vector<16x128xf32>, vector<128x32xf32>, vector<16x32xf32> -> vector<16x32xf32>
    %c0_9 = arith.constant 0 : index
    %c0_10 = arith.constant 0 : index
    %c0_11 = arith.constant 0 : index
    %8 = vector.load %arg7[%c0_9, %c0_10, %c0_11] : memref<4x1x32xf32, #tpu.memory_space<vmem>>, vector<1x1x32xf32>
    %9 = vector.shape_cast %8 : vector<1x1x32xf32> to vector<1x32xf32>
    %10 = vector.broadcast %9 : vector<1x32xf32> to vector<16x32xf32>
    %11 = arith.addf %7, %10 : vector<16x32xf32>
    %c0_12 = arith.constant 0 : index
    %c0_13 = arith.constant 0 : index
    %c0_14 = arith.constant 0 : index
    %12 = vector.load %arg4[%c0_12, %c0_13, %c0_14] : memref<4x128x32xf32, #tpu.memory_space<vmem>>, vector<1x128x32xf32>
    %13 = vector.shape_cast %12 : vector<1x128x32xf32> to vector<128x32xf32>
    %cst_15 = arith.constant dense<0.000000e+00> : vector<16x32xf32>
    %14 = tpu.matmul %1, %13, %cst_15 {dimension_numbers = #tpu.dot_dimension_numbers<[1], [0], [0], [1], [0, 0, 1, 1], [], []>} : vector<16x128xf32>, vector<128x32xf32>, vector<16x32xf32> -> vector<16x32xf32>
    %c0_16 = arith.constant 0 : index
    %c0_17 = arith.constant 0 : index
    %c0_18 = arith.constant 0 : index
    %15 = vector.load %arg8[%c0_16, %c0_17, %c0_18] : memref<4x1x32xf32, #tpu.memory_space<vmem>>, vector<1x1x32xf32>
    %16 = vector.shape_cast %15 : vector<1x1x32xf32> to vector<1x32xf32>
    %17 = vector.broadcast %16 : vector<1x32xf32> to vector<16x32xf32>
    %18 = arith.addf %14, %17 : vector<16x32xf32>
    %c0_19 = arith.constant 0 : index
    %c0_20 = arith.constant 0 : index
    %c0_21 = arith.constant 0 : index
    %19 = vector.load %arg5[%c0_19, %c0_20, %c0_21] : memref<4x128x32xf32, #tpu.memory_space<vmem>>, vector<1x128x32xf32>
    %20 = vector.shape_cast %19 : vector<1x128x32xf32> to vector<128x32xf32>
    %cst_22 = arith.constant dense<0.000000e+00> : vector<16x32xf32>
    %21 = tpu.matmul %1, %20, %cst_22 {dimension_numbers = #tpu.dot_dimension_numbers<[1], [0], [0], [1], [0, 0, 1, 1], [], []>} : vector<16x128xf32>, vector<128x32xf32>, vector<16x32xf32> -> vector<16x32xf32>
    %c0_23 = arith.constant 0 : index
    %c0_24 = arith.constant 0 : index
    %c0_25 = arith.constant 0 : index
    %22 = vector.load %arg9[%c0_23, %c0_24, %c0_25] : memref<4x1x32xf32, #tpu.memory_space<vmem>>, vector<1x1x32xf32>
    %23 = vector.shape_cast %22 : vector<1x1x32xf32> to vector<1x32xf32>
    %24 = vector.broadcast %23 : vector<1x32xf32> to vector<16x32xf32>
    %25 = arith.addf %21, %24 : vector<16x32xf32>
    %cst_26 = arith.constant dense<0.000000e+00> : vector<16x16xf32>
    %26 = tpu.matmul %11, %18, %cst_26 {dimension_numbers = #tpu.dot_dimension_numbers<[1], [1], [0], [0], [0, 0, 1, 0], [], []>} : vector<16x32xf32>, vector<16x32xf32>, vector<16x16xf32> -> vector<16x16xf32>
    %cst_27 = arith.constant 0.176776692 : f32
    %27 = vector.broadcast %cst_27 : f32 to vector<16x16xf32>
    %28 = arith.mulf %26, %27 : vector<16x16xf32>
    %29 = vector.broadcast %3 : vector<1x16xf32> to vector<16x16xf32>
    %30 = arith.addf %28, %29 : vector<16x16xf32>
    %cst_28 = arith.constant dense<0xFF800000> : vector<16xf32>
    %31 = vector.multi_reduction <maximumf>, %30, %cst_28 [1] : vector<16x16xf32> to vector<16xf32>
    %32 = vector.shape_cast %31 : vector<16xf32> to vector<16x1xf32>
    %33 = vector.broadcast %32 : vector<16x1xf32> to vector<16x16xf32>
    %34 = arith.subf %30, %33 : vector<16x16xf32>
    %35 = math.exp %34 : vector<16x16xf32>
    %cst_29 = arith.constant dense<0.000000e+00> : vector<16xf32>
    %36 = vector.multi_reduction <add>, %35, %cst_29 [1] : vector<16x16xf32> to vector<16xf32>
    %37 = vector.shape_cast %36 : vector<16xf32> to vector<16x1xf32>
    %cst_30 = arith.constant dense<0.000000e+00> : vector<16x32xf32>
    %38 = tpu.matmul %35, %25, %cst_30 {dimension_numbers = #tpu.dot_dimension_numbers<[1], [0], [0], [1], [0, 0, 1, 1], [], []>} : vector<16x16xf32>, vector<16x32xf32>, vector<16x32xf32> -> vector<16x32xf32>
    %39 = vector.broadcast %37 : vector<16x1xf32> to vector<16x32xf32>
    %40 = arith.divf %38, %39 : vector<16x32xf32>
    %c0_31 = arith.constant 0 : index
    %c0_32 = arith.constant 0 : index
    %c0_33 = arith.constant 0 : index
    %41 = vector.load %arg6[%c0_31, %c0_32, %c0_33] : memref<4x32x128xf32, #tpu.memory_space<vmem>>, vector<1x32x128xf32>
    %42 = vector.shape_cast %41 : vector<1x32x128xf32> to vector<32x128xf32>
    %cst_34 = arith.constant dense<0.000000e+00> : vector<16x128xf32>
    %43 = tpu.matmul %40, %42, %cst_34 {dimension_numbers = #tpu.dot_dimension_numbers<[1], [0], [0], [1], [0, 0, 1, 1], [], []>} : vector<16x32xf32>, vector<32x128xf32>, vector<16x128xf32> -> vector<16x128xf32>
    %44 = arith.addf %4, %43 : vector<16x128xf32>
    %c1 = arith.constant 1 : index
    %c0_35 = arith.constant 0 : index
    %c0_36 = arith.constant 0 : index
    %45 = vector.load %arg3[%c1, %c0_35, %c0_36] : memref<4x128x32xf32, #tpu.memory_space<vmem>>, vector<1x128x32xf32>
    %46 = vector.shape_cast %45 : vector<1x128x32xf32> to vector<128x32xf32>
    %cst_37 = arith.constant dense<0.000000e+00> : vector<16x32xf32>
    %47 = tpu.matmul %1, %46, %cst_37 {dimension_numbers = #tpu.dot_dimension_numbers<[1], [0], [0], [1], [0, 0, 1, 1], [], []>} : vector<16x128xf32>, vector<128x32xf32>, vector<16x32xf32> -> vector<16x32xf32>
    %c1_38 = arith.constant 1 : index
    %c0_39 = arith.constant 0 : index
    %c0_40 = arith.constant 0 : index
    %48 = vector.load %arg7[%c1_38, %c0_39, %c0_40] : memref<4x1x32xf32, #tpu.memory_space<vmem>>, vector<1x1x32xf32>
    %49 = vector.shape_cast %48 : vector<1x1x32xf32> to vector<1x32xf32>
    %50 = vector.broadcast %49 : vector<1x32xf32> to vector<16x32xf32>
    %51 = arith.addf %47, %50 : vector<16x32xf32>
    %c1_41 = arith.constant 1 : index
    %c0_42 = arith.constant 0 : index
    %c0_43 = arith.constant 0 : index
    %52 = vector.load %arg4[%c1_41, %c0_42, %c0_43] : memref<4x128x32xf32, #tpu.memory_space<vmem>>, vector<1x128x32xf32>
    %53 = vector.shape_cast %52 : vector<1x128x32xf32> to vector<128x32xf32>
    %cst_44 = arith.constant dense<0.000000e+00> : vector<16x32xf32>
    %54 = tpu.matmul %1, %53, %cst_44 {dimension_numbers = #tpu.dot_dimension_numbers<[1], [0], [0], [1], [0, 0, 1, 1], [], []>} : vector<16x128xf32>, vector<128x32xf32>, vector<16x32xf32> -> vector<16x32xf32>
    %c1_45 = arith.constant 1 : index
    %c0_46 = arith.constant 0 : index
    %c0_47 = arith.constant 0 : index
    %55 = vector.load %arg8[%c1_45, %c0_46, %c0_47] : memref<4x1x32xf32, #tpu.memory_space<vmem>>, vector<1x1x32xf32>
    %56 = vector.shape_cast %55 : vector<1x1x32xf32> to vector<1x32xf32>
    %57 = vector.broadcast %56 : vector<1x32xf32> to vector<16x32xf32>
    %58 = arith.addf %54, %57 : vector<16x32xf32>
    %c1_48 = arith.constant 1 : index
    %c0_49 = arith.constant 0 : index
    %c0_50 = arith.constant 0 : index
    %59 = vector.load %arg5[%c1_48, %c0_49, %c0_50] : memref<4x128x32xf32, #tpu.memory_space<vmem>>, vector<1x128x32xf32>
    %60 = vector.shape_cast %59 : vector<1x128x32xf32> to vector<128x32xf32>
    %cst_51 = arith.constant dense<0.000000e+00> : vector<16x32xf32>
    %61 = tpu.matmul %1, %60, %cst_51 {dimension_numbers = #tpu.dot_dimension_numbers<[1], [0], [0], [1], [0, 0, 1, 1], [], []>} : vector<16x128xf32>, vector<128x32xf32>, vector<16x32xf32> -> vector<16x32xf32>
    %c1_52 = arith.constant 1 : index
    %c0_53 = arith.constant 0 : index
    %c0_54 = arith.constant 0 : index
    %62 = vector.load %arg9[%c1_52, %c0_53, %c0_54] : memref<4x1x32xf32, #tpu.memory_space<vmem>>, vector<1x1x32xf32>
    %63 = vector.shape_cast %62 : vector<1x1x32xf32> to vector<1x32xf32>
    %64 = vector.broadcast %63 : vector<1x32xf32> to vector<16x32xf32>
    %65 = arith.addf %61, %64 : vector<16x32xf32>
    %cst_55 = arith.constant dense<0.000000e+00> : vector<16x16xf32>
    %66 = tpu.matmul %51, %58, %cst_55 {dimension_numbers = #tpu.dot_dimension_numbers<[1], [1], [0], [0], [0, 0, 1, 0], [], []>} : vector<16x32xf32>, vector<16x32xf32>, vector<16x16xf32> -> vector<16x16xf32>
    %cst_56 = arith.constant 0.176776692 : f32
    %67 = vector.broadcast %cst_56 : f32 to vector<16x16xf32>
    %68 = arith.mulf %66, %67 : vector<16x16xf32>
    %69 = vector.broadcast %3 : vector<1x16xf32> to vector<16x16xf32>
    %70 = arith.addf %68, %69 : vector<16x16xf32>
    %cst_57 = arith.constant dense<0xFF800000> : vector<16xf32>
    %71 = vector.multi_reduction <maximumf>, %70, %cst_57 [1] : vector<16x16xf32> to vector<16xf32>
    %72 = vector.shape_cast %71 : vector<16xf32> to vector<16x1xf32>
    %73 = vector.broadcast %72 : vector<16x1xf32> to vector<16x16xf32>
    %74 = arith.subf %70, %73 : vector<16x16xf32>
    %75 = math.exp %74 : vector<16x16xf32>
    %cst_58 = arith.constant dense<0.000000e+00> : vector<16xf32>
    %76 = vector.multi_reduction <add>, %75, %cst_58 [1] : vector<16x16xf32> to vector<16xf32>
    %77 = vector.shape_cast %76 : vector<16xf32> to vector<16x1xf32>
    %cst_59 = arith.constant dense<0.000000e+00> : vector<16x32xf32>
    %78 = tpu.matmul %75, %65, %cst_59 {dimension_numbers = #tpu.dot_dimension_numbers<[1], [0], [0], [1], [0, 0, 1, 1], [], []>} : vector<16x16xf32>, vector<16x32xf32>, vector<16x32xf32> -> vector<16x32xf32>
    %79 = vector.broadcast %77 : vector<16x1xf32> to vector<16x32xf32>
    %80 = arith.divf %78, %79 : vector<16x32xf32>
    %c1_60 = arith.constant 1 : index
    %c0_61 = arith.constant 0 : index
    %c0_62 = arith.constant 0 : index
    %81 = vector.load %arg6[%c1_60, %c0_61, %c0_62] : memref<4x32x128xf32, #tpu.memory_space<vmem>>, vector<1x32x128xf32>
    %82 = vector.shape_cast %81 : vector<1x32x128xf32> to vector<32x128xf32>
    %cst_63 = arith.constant dense<0.000000e+00> : vector<16x128xf32>
    %83 = tpu.matmul %80, %82, %cst_63 {dimension_numbers = #tpu.dot_dimension_numbers<[1], [0], [0], [1], [0, 0, 1, 1], [], []>} : vector<16x32xf32>, vector<32x128xf32>, vector<16x128xf32> -> vector<16x128xf32>
    %84 = arith.addf %44, %83 : vector<16x128xf32>
    %c2 = arith.constant 2 : index
    %c0_64 = arith.constant 0 : index
    %c0_65 = arith.constant 0 : index
    %85 = vector.load %arg3[%c2, %c0_64, %c0_65] : memref<4x128x32xf32, #tpu.memory_space<vmem>>, vector<1x128x32xf32>
    %86 = vector.shape_cast %85 : vector<1x128x32xf32> to vector<128x32xf32>
    %cst_66 = arith.constant dense<0.000000e+00> : vector<16x32xf32>
    %87 = tpu.matmul %1, %86, %cst_66 {dimension_numbers = #tpu.dot_dimension_numbers<[1], [0], [0], [1], [0, 0, 1, 1], [], []>} : vector<16x128xf32>, vector<128x32xf32>, vector<16x32xf32> -> vector<16x32xf32>
    %c2_67 = arith.constant 2 : index
    %c0_68 = arith.constant 0 : index
    %c0_69 = arith.constant 0 : index
    %88 = vector.load %arg7[%c2_67, %c0_68, %c0_69] : memref<4x1x32xf32, #tpu.memory_space<vmem>>, vector<1x1x32xf32>
    %89 = vector.shape_cast %88 : vector<1x1x32xf32> to vector<1x32xf32>
    %90 = vector.broadcast %89 : vector<1x32xf32> to vector<16x32xf32>
    %91 = arith.addf %87, %90 : vector<16x32xf32>
    %c2_70 = arith.constant 2 : index
    %c0_71 = arith.constant 0 : index
    %c0_72 = arith.constant 0 : index
    %92 = vector.load %arg4[%c2_70, %c0_71, %c0_72] : memref<4x128x32xf32, #tpu.memory_space<vmem>>, vector<1x128x32xf32>
    %93 = vector.shape_cast %92 : vector<1x128x32xf32> to vector<128x32xf32>
    %cst_73 = arith.constant dense<0.000000e+00> : vector<16x32xf32>
    %94 = tpu.matmul %1, %93, %cst_73 {dimension_numbers = #tpu.dot_dimension_numbers<[1], [0], [0], [1], [0, 0, 1, 1], [], []>} : vector<16x128xf32>, vector<128x32xf32>, vector<16x32xf32> -> vector<16x32xf32>
    %c2_74 = arith.constant 2 : index
    %c0_75 = arith.constant 0 : index
    %c0_76 = arith.constant 0 : index
    %95 = vector.load %arg8[%c2_74, %c0_75, %c0_76] : memref<4x1x32xf32, #tpu.memory_space<vmem>>, vector<1x1x32xf32>
    %96 = vector.shape_cast %95 : vector<1x1x32xf32> to vector<1x32xf32>
    %97 = vector.broadcast %96 : vector<1x32xf32> to vector<16x32xf32>
    %98 = arith.addf %94, %97 : vector<16x32xf32>
    %c2_77 = arith.constant 2 : index
    %c0_78 = arith.constant 0 : index
    %c0_79 = arith.constant 0 : index
    %99 = vector.load %arg5[%c2_77, %c0_78, %c0_79] : memref<4x128x32xf32, #tpu.memory_space<vmem>>, vector<1x128x32xf32>
    %100 = vector.shape_cast %99 : vector<1x128x32xf32> to vector<128x32xf32>
    %cst_80 = arith.constant dense<0.000000e+00> : vector<16x32xf32>
    %101 = tpu.matmul %1, %100, %cst_80 {dimension_numbers = #tpu.dot_dimension_numbers<[1], [0], [0], [1], [0, 0, 1, 1], [], []>} : vector<16x128xf32>, vector<128x32xf32>, vector<16x32xf32> -> vector<16x32xf32>
    %c2_81 = arith.constant 2 : index
    %c0_82 = arith.constant 0 : index
    %c0_83 = arith.constant 0 : index
    %102 = vector.load %arg9[%c2_81, %c0_82, %c0_83] : memref<4x1x32xf32, #tpu.memory_space<vmem>>, vector<1x1x32xf32>
    %103 = vector.shape_cast %102 : vector<1x1x32xf32> to vector<1x32xf32>
    %104 = vector.broadcast %103 : vector<1x32xf32> to vector<16x32xf32>
    %105 = arith.addf %101, %104 : vector<16x32xf32>
    %cst_84 = arith.constant dense<0.000000e+00> : vector<16x16xf32>
    %106 = tpu.matmul %91, %98, %cst_84 {dimension_numbers = #tpu.dot_dimension_numbers<[1], [1], [0], [0], [0, 0, 1, 0], [], []>} : vector<16x32xf32>, vector<16x32xf32>, vector<16x16xf32> -> vector<16x16xf32>
    %cst_85 = arith.constant 0.176776692 : f32
    %107 = vector.broadcast %cst_85 : f32 to vector<16x16xf32>
    %108 = arith.mulf %106, %107 : vector<16x16xf32>
    %109 = vector.broadcast %3 : vector<1x16xf32> to vector<16x16xf32>
    %110 = arith.addf %108, %109 : vector<16x16xf32>
    %cst_86 = arith.constant dense<0xFF800000> : vector<16xf32>
    %111 = vector.multi_reduction <maximumf>, %110, %cst_86 [1] : vector<16x16xf32> to vector<16xf32>
    %112 = vector.shape_cast %111 : vector<16xf32> to vector<16x1xf32>
    %113 = vector.broadcast %112 : vector<16x1xf32> to vector<16x16xf32>
    %114 = arith.subf %110, %113 : vector<16x16xf32>
    %115 = math.exp %114 : vector<16x16xf32>
    %cst_87 = arith.constant dense<0.000000e+00> : vector<16xf32>
    %116 = vector.multi_reduction <add>, %115, %cst_87 [1] : vector<16x16xf32> to vector<16xf32>
    %117 = vector.shape_cast %116 : vector<16xf32> to vector<16x1xf32>
    %cst_88 = arith.constant dense<0.000000e+00> : vector<16x32xf32>
    %118 = tpu.matmul %115, %105, %cst_88 {dimension_numbers = #tpu.dot_dimension_numbers<[1], [0], [0], [1], [0, 0, 1, 1], [], []>} : vector<16x16xf32>, vector<16x32xf32>, vector<16x32xf32> -> vector<16x32xf32>
    %119 = vector.broadcast %117 : vector<16x1xf32> to vector<16x32xf32>
    %120 = arith.divf %118, %119 : vector<16x32xf32>
    %c2_89 = arith.constant 2 : index
    %c0_90 = arith.constant 0 : index
    %c0_91 = arith.constant 0 : index
    %121 = vector.load %arg6[%c2_89, %c0_90, %c0_91] : memref<4x32x128xf32, #tpu.memory_space<vmem>>, vector<1x32x128xf32>
    %122 = vector.shape_cast %121 : vector<1x32x128xf32> to vector<32x128xf32>
    %cst_92 = arith.constant dense<0.000000e+00> : vector<16x128xf32>
    %123 = tpu.matmul %120, %122, %cst_92 {dimension_numbers = #tpu.dot_dimension_numbers<[1], [0], [0], [1], [0, 0, 1, 1], [], []>} : vector<16x32xf32>, vector<32x128xf32>, vector<16x128xf32> -> vector<16x128xf32>
    %124 = arith.addf %84, %123 : vector<16x128xf32>
    %c3 = arith.constant 3 : index
    %c0_93 = arith.constant 0 : index
    %c0_94 = arith.constant 0 : index
    %125 = vector.load %arg3[%c3, %c0_93, %c0_94] : memref<4x128x32xf32, #tpu.memory_space<vmem>>, vector<1x128x32xf32>
    %126 = vector.shape_cast %125 : vector<1x128x32xf32> to vector<128x32xf32>
    %cst_95 = arith.constant dense<0.000000e+00> : vector<16x32xf32>
    %127 = tpu.matmul %1, %126, %cst_95 {dimension_numbers = #tpu.dot_dimension_numbers<[1], [0], [0], [1], [0, 0, 1, 1], [], []>} : vector<16x128xf32>, vector<128x32xf32>, vector<16x32xf32> -> vector<16x32xf32>
    %c3_96 = arith.constant 3 : index
    %c0_97 = arith.constant 0 : index
    %c0_98 = arith.constant 0 : index
    %128 = vector.load %arg7[%c3_96, %c0_97, %c0_98] : memref<4x1x32xf32, #tpu.memory_space<vmem>>, vector<1x1x32xf32>
    %129 = vector.shape_cast %128 : vector<1x1x32xf32> to vector<1x32xf32>
    %130 = vector.broadcast %129 : vector<1x32xf32> to vector<16x32xf32>
    %131 = arith.addf %127, %130 : vector<16x32xf32>
    %c3_99 = arith.constant 3 : index
    %c0_100 = arith.constant 0 : index
    %c0_101 = arith.constant 0 : index
    %132 = vector.load %arg4[%c3_99, %c0_100, %c0_101] : memref<4x128x32xf32, #tpu.memory_space<vmem>>, vector<1x128x32xf32>
    %133 = vector.shape_cast %132 : vector<1x128x32xf32> to vector<128x32xf32>
    %cst_102 = arith.constant dense<0.000000e+00> : vector<16x32xf32>
    %134 = tpu.matmul %1, %133, %cst_102 {dimension_numbers = #tpu.dot_dimension_numbers<[1], [0], [0], [1], [0, 0, 1, 1], [], []>} : vector<16x128xf32>, vector<128x32xf32>, vector<16x32xf32> -> vector<16x32xf32>
    %c3_103 = arith.constant 3 : index
    %c0_104 = arith.constant 0 : index
    %c0_105 = arith.constant 0 : index
    %135 = vector.load %arg8[%c3_103, %c0_104, %c0_105] : memref<4x1x32xf32, #tpu.memory_space<vmem>>, vector<1x1x32xf32>
    %136 = vector.shape_cast %135 : vector<1x1x32xf32> to vector<1x32xf32>
    %137 = vector.broadcast %136 : vector<1x32xf32> to vector<16x32xf32>
    %138 = arith.addf %134, %137 : vector<16x32xf32>
    %c3_106 = arith.constant 3 : index
    %c0_107 = arith.constant 0 : index
    %c0_108 = arith.constant 0 : index
    %139 = vector.load %arg5[%c3_106, %c0_107, %c0_108] : memref<4x128x32xf32, #tpu.memory_space<vmem>>, vector<1x128x32xf32>
    %140 = vector.shape_cast %139 : vector<1x128x32xf32> to vector<128x32xf32>
    %cst_109 = arith.constant dense<0.000000e+00> : vector<16x32xf32>
    %141 = tpu.matmul %1, %140, %cst_109 {dimension_numbers = #tpu.dot_dimension_numbers<[1], [0], [0], [1], [0, 0, 1, 1], [], []>} : vector<16x128xf32>, vector<128x32xf32>, vector<16x32xf32> -> vector<16x32xf32>
    %c3_110 = arith.constant 3 : index
    %c0_111 = arith.constant 0 : index
    %c0_112 = arith.constant 0 : index
    %142 = vector.load %arg9[%c3_110, %c0_111, %c0_112] : memref<4x1x32xf32, #tpu.memory_space<vmem>>, vector<1x1x32xf32>
    %143 = vector.shape_cast %142 : vector<1x1x32xf32> to vector<1x32xf32>
    %144 = vector.broadcast %143 : vector<1x32xf32> to vector<16x32xf32>
    %145 = arith.addf %141, %144 : vector<16x32xf32>
    %cst_113 = arith.constant dense<0.000000e+00> : vector<16x16xf32>
    %146 = tpu.matmul %131, %138, %cst_113 {dimension_numbers = #tpu.dot_dimension_numbers<[1], [1], [0], [0], [0, 0, 1, 0], [], []>} : vector<16x32xf32>, vector<16x32xf32>, vector<16x16xf32> -> vector<16x16xf32>
    %cst_114 = arith.constant 0.176776692 : f32
    %147 = vector.broadcast %cst_114 : f32 to vector<16x16xf32>
    %148 = arith.mulf %146, %147 : vector<16x16xf32>
    %149 = vector.broadcast %3 : vector<1x16xf32> to vector<16x16xf32>
    %150 = arith.addf %148, %149 : vector<16x16xf32>
    %cst_115 = arith.constant dense<0xFF800000> : vector<16xf32>
    %151 = vector.multi_reduction <maximumf>, %150, %cst_115 [1] : vector<16x16xf32> to vector<16xf32>
    %152 = vector.shape_cast %151 : vector<16xf32> to vector<16x1xf32>
    %153 = vector.broadcast %152 : vector<16x1xf32> to vector<16x16xf32>
    %154 = arith.subf %150, %153 : vector<16x16xf32>
    %155 = math.exp %154 : vector<16x16xf32>
    %cst_116 = arith.constant dense<0.000000e+00> : vector<16xf32>
    %156 = vector.multi_reduction <add>, %155, %cst_116 [1] : vector<16x16xf32> to vector<16xf32>
    %157 = vector.shape_cast %156 : vector<16xf32> to vector<16x1xf32>
    %cst_117 = arith.constant dense<0.000000e+00> : vector<16x32xf32>
    %158 = tpu.matmul %155, %145, %cst_117 {dimension_numbers = #tpu.dot_dimension_numbers<[1], [0], [0], [1], [0, 0, 1, 1], [], []>} : vector<16x16xf32>, vector<16x32xf32>, vector<16x32xf32> -> vector<16x32xf32>
    %159 = vector.broadcast %157 : vector<16x1xf32> to vector<16x32xf32>
    %160 = arith.divf %158, %159 : vector<16x32xf32>
    %c3_118 = arith.constant 3 : index
    %c0_119 = arith.constant 0 : index
    %c0_120 = arith.constant 0 : index
    %161 = vector.load %arg6[%c3_118, %c0_119, %c0_120] : memref<4x32x128xf32, #tpu.memory_space<vmem>>, vector<1x32x128xf32>
    %162 = vector.shape_cast %161 : vector<1x32x128xf32> to vector<32x128xf32>
    %cst_121 = arith.constant dense<0.000000e+00> : vector<16x128xf32>
    %163 = tpu.matmul %160, %162, %cst_121 {dimension_numbers = #tpu.dot_dimension_numbers<[1], [0], [0], [1], [0, 0, 1, 1], [], []>} : vector<16x32xf32>, vector<32x128xf32>, vector<16x128xf32> -> vector<16x128xf32>
    %164 = arith.addf %124, %163 : vector<16x128xf32>
    %c0_122 = arith.constant 0 : index
    %c0_123 = arith.constant 0 : index
    %165 = vector.load %arg10[%c0_122, %c0_123] : memref<1x128xf32, #tpu.memory_space<vmem>>, vector<1x128xf32>
    %166 = vector.broadcast %165 : vector<1x128xf32> to vector<16x128xf32>
    %167 = arith.addf %164, %166 : vector<16x128xf32>
    %168 = arith.addf %167, %1 : vector<16x128xf32>
    %cst_124 = arith.constant dense<0.000000e+00> : vector<16xf32>
    %169 = vector.multi_reduction <add>, %168, %cst_124 [1] : vector<16x128xf32> to vector<16xf32>
    %170 = vector.shape_cast %169 : vector<16xf32> to vector<16x1xf32>
    %171 = arith.mulf %168, %168 : vector<16x128xf32>
    %cst_125 = arith.constant dense<0.000000e+00> : vector<16xf32>
    %172 = vector.multi_reduction <add>, %171, %cst_125 [1] : vector<16x128xf32> to vector<16xf32>
    %173 = vector.shape_cast %172 : vector<16xf32> to vector<16x1xf32>
    %cst_126 = arith.constant 7.812500e-03 : f32
    %174 = vector.broadcast %cst_126 : f32 to vector<16x1xf32>
    %175 = arith.mulf %170, %174 : vector<16x1xf32>
    %cst_127 = arith.constant 7.812500e-03 : f32
    %176 = vector.broadcast %cst_127 : f32 to vector<16x1xf32>
    %177 = arith.mulf %173, %176 : vector<16x1xf32>
    %178 = arith.mulf %175, %175 : vector<16x1xf32>
    %179 = arith.subf %177, %178 : vector<16x1xf32>
    %cst_128 = arith.constant 9.99999974E-6 : f32
    %180 = vector.broadcast %cst_128 : f32 to vector<16x1xf32>
    %181 = arith.addf %179, %180 : vector<16x1xf32>
    %182 = math.rsqrt %181 : vector<16x1xf32>
    %183 = vector.broadcast %175 : vector<16x1xf32> to vector<16x128xf32>
    %184 = arith.subf %168, %183 : vector<16x128xf32>
    %185 = vector.broadcast %182 : vector<16x1xf32> to vector<16x128xf32>
    %186 = arith.mulf %184, %185 : vector<16x128xf32>
    %c0_129 = arith.constant 0 : index
    %c0_130 = arith.constant 0 : index
    %187 = vector.load %arg11[%c0_129, %c0_130] : memref<1x128xf32, #tpu.memory_space<vmem>>, vector<1x128xf32>
    %188 = vector.broadcast %187 : vector<1x128xf32> to vector<16x128xf32>
    %189 = arith.mulf %186, %188 : vector<16x128xf32>
    %c0_131 = arith.constant 0 : index
    %c0_132 = arith.constant 0 : index
    %190 = vector.load %arg12[%c0_131, %c0_132] : memref<1x128xf32, #tpu.memory_space<vmem>>, vector<1x128xf32>
    %191 = vector.broadcast %190 : vector<1x128xf32> to vector<16x128xf32>
    %192 = arith.addf %189, %191 : vector<16x128xf32>
    %c0_133 = arith.constant 0 : index
    %c0_134 = arith.constant 0 : index
    %c0_135 = arith.constant 0 : index
    %193 = vector.load %arg13[%c0_133, %c0_134, %c0_135] : memref<1x16x128xf32, #tpu.memory_space<vmem>>, vector<1x16x128xf32>
    %194 = vector.shape_cast %193 : vector<1x16x128xf32> to vector<16x128xf32>
    %195 = vector.shape_cast %192 : vector<16x128xf32> to vector<1x16x128xf32>
    tpu.vector_store %arg13[%c0_133, %c0_134, %c0_135], %195 {strides = array<i32>} : memref<1x16x128xf32, #tpu.memory_space<vmem>>, vector<1x16x128xf32>,
    return
  }
  func.func @transform_0(%arg0: i32) -> (i32, i32, i32) {
    %c0_i32 = arith.constant 0 : i32
    %c0_i32_0 = arith.constant 0 : i32
    %c0_i32_1 = arith.constant 0 : i32
    return %arg0, %c0_i32, %c0_i32_0 : i32, i32, i32
  }
  func.func @transform_1(%arg0: i32) -> (i32, i32, i32) {
    %c0_i32 = arith.constant 0 : i32
    %c0_i32_0 = arith.constant 0 : i32
    %c0_i32_1 = arith.constant 0 : i32
    return %arg0, %c0_i32, %c0_i32_0 : i32, i32, i32
  }
  func.func @transform_2(%arg0: i32) -> (i32, i32, i32) {
    %c0_i32 = arith.constant 0 : i32
    %c0_i32_0 = arith.constant 0 : i32
    %c0_i32_1 = arith.constant 0 : i32
    %c0_i32_2 = arith.constant 0 : i32
    return %c0_i32, %c0_i32_0, %c0_i32_1 : i32, i32, i32
  }
  func.func @transform_3(%arg0: i32) -> (i32, i32, i32) {
    %c0_i32 = arith.constant 0 : i32
    %c0_i32_0 = arith.constant 0 : i32
    %c0_i32_1 = arith.constant 0 : i32
    %c0_i32_2 = arith.constant 0 : i32
    return %c0_i32, %c0_i32_0, %c0_i32_1 : i32, i32, i32
  }
  func.func @transform_4(%arg0: i32) -> (i32, i32, i32) {
    %c0_i32 = arith.constant 0 : i32
    %c0_i32_0 = arith.constant 0 : i32
    %c0_i32_1 = arith.constant 0 : i32
    %c0_i32_2 = arith.constant 0 : i32
    return %c0_i32, %c0_i32_0, %c0_i32_1 : i32, i32, i32
  }
  func.func @transform_5(%arg0: i32) -> (i32, i32, i32) {
    %c0_i32 = arith.constant 0 : i32
    %c0_i32_0 = arith.constant 0 : i32
    %c0_i32_1 = arith.constant 0 : i32
    %c0_i32_2 = arith.constant 0 : i32
    return %c0_i32, %c0_i32_0, %c0_i32_1 : i32, i32, i32
  }
  func.func @transform_6(%arg0: i32) -> (i32, i32, i32) {
    %c0_i32 = arith.constant 0 : i32
    %c0_i32_0 = arith.constant 0 : i32
    %c0_i32_1 = arith.constant 0 : i32
    %c0_i32_2 = arith.constant 0 : i32
    return %c0_i32, %c0_i32_0, %c0_i32_1 : i32, i32, i32
  }
  func.func @transform_7(%arg0: i32) -> (i32, i32, i32) {
    %c0_i32 = arith.constant 0 : i32
    %c0_i32_0 = arith.constant 0 : i32
    %c0_i32_1 = arith.constant 0 : i32
    %c0_i32_2 = arith.constant 0 : i32
    return %c0_i32, %c0_i32_0, %c0_i32_1 : i32, i32, i32
  }
  func.func @transform_8(%arg0: i32) -> (i32, i32, i32) {
    %c0_i32 = arith.constant 0 : i32
    %c0_i32_0 = arith.constant 0 : i32
    %c0_i32_1 = arith.constant 0 : i32
    %c0_i32_2 = arith.constant 0 : i32
    return %c0_i32, %c0_i32_0, %c0_i32_1 : i32, i32, i32
  }
  func.func @transform_9(%arg0: i32) -> (i32, i32) {
    %c0_i32 = arith.constant 0 : i32
    %c0_i32_0 = arith.constant 0 : i32
    %c0_i32_1 = arith.constant 0 : i32
    return %c0_i32, %c0_i32_0 : i32, i32
  }
  func.func @transform_10(%arg0: i32) -> (i32, i32) {
    %c0_i32 = arith.constant 0 : i32
    %c0_i32_0 = arith.constant 0 : i32
    %c0_i32_1 = arith.constant 0 : i32
    return %c0_i32, %c0_i32_0 : i32, i32
  }
  func.func @transform_11(%arg0: i32) -> (i32, i32) {
    %c0_i32 = arith.constant 0 : i32
    %c0_i32_0 = arith.constant 0 : i32
    %c0_i32_1 = arith.constant 0 : i32
    return %c0_i32, %c0_i32_0 : i32, i32
  }
  func.func @transform_12(%arg0: i32) -> (i32, i32, i32) {
    %c0_i32 = arith.constant 0 : i32
    %c0_i32_0 = arith.constant 0 : i32
    %c0_i32_1 = arith.constant 0 : i32
    return %arg0, %c0_i32, %c0_i32_0 : i32, i32, i32
  }
}

</mosaic_0001>

<llo_original>
// kernel: tpu_custom_call.1
$region0: #{tpu_custom_call.1}
  #allocation0 [shape = 'u32[]', space=smem, size = 0x4, offset = 0x4, fixed_abs, tag = 'smem constant byte address 0x4 - core index']
  #allocation1 [shape = 'u32[144,128]{1,0:T(1,128)}', space=vmem, size = 0x12000, scoped, tag = 'internal scratch']
  %s0 = inlined_call_operand.vmem [shape: f32[2,16,128], index: 0, kind: input, shape index: {}]
  %s1 = inlined_call_operand.vmem [shape: f32[2,1,16], index: 1, kind: input, shape index: {}]
  %s2 = inlined_call_operand.vmem [shape: f32[4,128,32], index: 2, kind: input, shape index: {}]
  %s3 = inlined_call_operand.vmem [shape: f32[4,128,32], index: 3, kind: input, shape index: {}]
  %s4 = inlined_call_operand.vmem [shape: f32[4,128,32], index: 4, kind: input, shape index: {}]
  %s5 = inlined_call_operand.vmem [shape: f32[4,32,128], index: 5, kind: input, shape index: {}]
  %s6 = inlined_call_operand.vmem [shape: f32[4,1,32], index: 6, kind: input, shape index: {}]
  %s7 = inlined_call_operand.vmem [shape: f32[4,1,32], index: 7, kind: input, shape index: {}]
  %s8 = inlined_call_operand.vmem [shape: f32[4,1,32], index: 8, kind: input, shape index: {}]
  %s9 = inlined_call_operand.vmem [shape: f32[1,128], index: 9, kind: input, shape index: {}]
  %s10 = inlined_call_operand.vmem [shape: f32[1,128], index: 10, kind: input, shape index: {}]
  %s11 = inlined_call_operand.vmem [shape: f32[1,128], index: 11, kind: input, shape index: {}]
  %s12 = inlined_call_operand.hbm [shape: f32[2,16,128], index: 12, kind: output, shape index: {}]
  %s13 = sld [smem:[#allocation0]]
  $region81: #{tpu_custom_call.1} parent=0
    _
  %s15 = ssub.s32 1, %s13
  %s16 = scalar_select 0, %s15, %s13
  $region1: #{tpu_custom_call.1} parent=0
    #allocation2 [shape = 'u8[16384]{0}', space=vmem, size = 0x4000, scoped, tag = 'output window, operand 0']
    #allocation3 [shape = 's32[2]{0}', space=sflag, size = 0x8, scoped, tag = 'scoped memory for tpu_custom_call.1']
    %17 = vsyncpa [#allocation3], 0
    %s18 = scalar_lea.sflag [#allocation3], 1
    %19 = vsyncpa %s18, 0
    loop: start=0, step=1, limit=4
    $region2: #{tpu_custom_call.1} parent=1 // loop_pre_header
      _
    $region3: #{tpu_custom_call.1} parent=1 // loop_header
      %s21 = sphi 0, %s25
      %p22 = scmp.ge.s32.totalorder %s21, 4
      %s31 = sphi 0, %s33
      %s34 = sphi 0, %s31
      %s35 = sphi 0, %s34
      %s51 = sphi 0, %s35
      %s57 = sphi 0, %s59
      %s60 = sphi 0, %s57
      %s61 = sphi 0, %s60
      %s77 = sphi 0, %s61
      %s81 = sphi 0, %s81
      %s83 = sphi 0, %s81
      %s84 = sphi 0, %s83
      %s98 = sphi 0, %s84
      %s102 = sphi 0, %s102
      %s104 = sphi 0, %s102
      %s105 = sphi 0, %s104
      %s119 = sphi 0, %s105
      %s123 = sphi 0, %s123
      %s125 = sphi 0, %s123
      %s126 = sphi 0, %s125
      %s140 = sphi 0, %s126
      %s144 = sphi 0, %s144
      %s146 = sphi 0, %s144
      %s147 = sphi 0, %s146
      %s161 = sphi 0, %s147
      %s165 = sphi 0, %s165
      %s167 = sphi 0, %s165
      %s168 = sphi 0, %s167
      %s182 = sphi 0, %s168
      %s186 = sphi 0, %s186
      %s188 = sphi 0, %s186
      %s189 = sphi 0, %s188
      %s203 = sphi 0, %s189
      %s207 = sphi 0, %s207
      %s209 = sphi 0, %s207
      %s210 = sphi 0, %s209
      %s224 = sphi 0, %s210
      %s228 = sphi 0, %s228
      %s230 = sphi 0, %s228
      %s231 = sphi 0, %s230
      %s245 = sphi 0, %s231
      %s249 = sphi 0, %s249
      %s251 = sphi 0, %s249
      %s252 = sphi 0, %s251
      %s266 = sphi 0, %s252
      %s270 = sphi 0, %s270
      %s272 = sphi 0, %s270
      %s273 = sphi 0, %s272
      %s287 = sphi 0, %s273
      %s293 = sphi 0, %s295
      %s296 = sphi 0, %s293
      %s297 = sphi 0, %s296
      %s313 = sphi 0, %s297
    $region4: #{tpu_custom_call.1} parent=1 // loop_header_branch
      %24 = sbr.rel (%p22) target = $region8
    $region5: #{tpu_custom_call.1} parent=1 // loop_body
      %s26 = ssub.s32 %s21, 1
      %s27 = ssub.s32 %s21, 2
      %s28 = sadd.s32 %s21, 1
      %s29 = ssub.s32 %s21, %s28
      %p30 = scmp.eq.s32.totalorder %s29, 0
      %s32 = sadd.s32 %s31, 1
      %s33 = scalar_select %p30, %s31, %s32
      %p36 = pneg %p30
      %p37 = scmp.eq.s32.totalorder %s21, 1
      %p38 = por %p36, %p37
      %p39 = scmp.ne.s32.totalorder %s31, %s34
      %p40 = scmp.eq.s32.totalorder %s21, 0
      %p41 = por %p39, %p40
      %p42 = scmp.ne.s32.totalorder %s31, %s34
      %p43 = scmp.eq.s32.totalorder %s26, 1
      %p44 = por %p42, %p43
      %p45 = scmp.ne.s32.totalorder %s34, %s35
      %p46 = scmp.eq.s32.totalorder %s26, 0
      %p47 = por %p45, %p46
      %p48 = scmp.ne.s32.totalorder %s34, %s35
      %p49 = scmp.eq.s32.totalorder %s27, 1
      %p50 = por %p48, %p49
      %p52 = scmp.ne.s32.totalorder %s35, %s51
      %p53 = scmp.eq.s32.totalorder %s27, 0
      %p54 = por %p52, %p53
      %s55 = ssub.s32 %s21, %s28
      %p56 = scmp.eq.s32.totalorder %s55, 0
      %s58 = sadd.s32 %s57, 1
      %s59 = scalar_select %p56, %s57, %s58
      %p62 = pneg %p56
      %p63 = scmp.eq.s32.totalorder %s21, 1
      %p64 = por %p62, %p63
      %p65 = scmp.ne.s32.totalorder %s57, %s60
      %p66 = scmp.eq.s32.totalorder %s21, 0
      %p67 = por %p65, %p66
      %p68 = scmp.ne.s32.totalorder %s57, %s60
      %p69 = scmp.eq.s32.totalorder %s26, 1
      %p70 = por %p68, %p69
      %p71 = scmp.ne.s32.totalorder %s60, %s61
      %p72 = scmp.eq.s32.totalorder %s26, 0
      %p73 = por %p71, %p72
      %p74 = scmp.ne.s32.totalorder %s60, %s61
      %p75 = scmp.eq.s32.totalorder %s27, 1
      %p76 = por %p74, %p75
      %p78 = scmp.ne.s32.totalorder %s61, %s77
      %p79 = scmp.eq.s32.totalorder %s27, 0
      %p80 = por %p78, %p79
      %s82 = sadd.s32 %s81, 1
      %p85 = scmp.eq.s32.totalorder %s21, 1
      %p86 = scmp.ne.s32.totalorder %s81, %s83
      %p87 = scmp.eq.s32.totalorder %s21, 0
      %p88 = por %p86, %p87
      %p89 = scmp.ne.s32.totalorder %s81, %s83
      %p90 = scmp.eq.s32.totalorder %s26, 1
      %p91 = por %p89, %p90
      %p92 = scmp.ne.s32.totalorder %s83, %s84
      %p93 = scmp.eq.s32.totalorder %s26, 0
      %p94 = por %p92, %p93
      %p95 = scmp.ne.s32.totalorder %s83, %s84
      %p96 = scmp.eq.s32.totalorder %s27, 1
      %p97 = por %p95, %p96
      %p99 = scmp.ne.s32.totalorder %s84, %s98
      %p100 = scmp.eq.s32.totalorder %s27, 0
      %p101 = por %p99, %p100
      %s103 = sadd.s32 %s102, 1
      %p106 = scmp.eq.s32.totalorder %s21, 1
      %p107 = scmp.ne.s32.totalorder %s102, %s104
      %p108 = scmp.eq.s32.totalorder %s21, 0
      %p109 = por %p107, %p108
      %p110 = scmp.ne.s32.totalorder %s102, %s104
      %p111 = scmp.eq.s32.totalorder %s26, 1
      %p112 = por %p110, %p111
      %p113 = scmp.ne.s32.totalorder %s104, %s105
      %p114 = scmp.eq.s32.totalorder %s26, 0
      %p115 = por %p113, %p114
      %p116 = scmp.ne.s32.totalorder %s104, %s105
      %p117 = scmp.eq.s32.totalorder %s27, 1
      %p118 = por %p116, %p117
      %p120 = scmp.ne.s32.totalorder %s105, %s119
      %p121 = scmp.eq.s32.totalorder %s27, 0
      %p122 = por %p120, %p121
      %s124 = sadd.s32 %s123, 1
      %p127 = scmp.eq.s32.totalorder %s21, 1
      %p128 = scmp.ne.s32.totalorder %s123, %s125
      %p129 = scmp.eq.s32.totalorder %s21, 0
      %p130 = por %p128, %p129
      %p131 = scmp.ne.s32.totalorder %s123, %s125
      %p132 = scmp.eq.s32.totalorder %s26, 1
      %p133 = por %p131, %p132
      %p134 = scmp.ne.s32.totalorder %s125, %s126
      %p135 = scmp.eq.s32.totalorder %s26, 0
      %p136 = por %p134, %p135
      %p137 = scmp.ne.s32.totalorder %s125, %s126
      %p138 = scmp.eq.s32.totalorder %s27, 1
      %p139 = por %p137, %p138
      %p141 = scmp.ne.s32.totalorder %s126, %s140
      %p142 = scmp.eq.s32.totalorder %s27, 0
      %p143 = por %p141, %p142
      %s145 = sadd.s32 %s144, 1
      %p148 = scmp.eq.s32.totalorder %s21, 1
      %p149 = scmp.ne.s32.totalorder %s144, %s146
      %p150 = scmp.eq.s32.totalorder %s21, 0
      %p151 = por %p149, %p150
      %p152 = scmp.ne.s32.totalorder %s144, %s146
      %p153 = scmp.eq.s32.totalorder %s26, 1
      %p154 = por %p152, %p153
      %p155 = scmp.ne.s32.totalorder %s146, %s147
      %p156 = scmp.eq.s32.totalorder %s26, 0
      %p157 = por %p155, %p156
      %p158 = scmp.ne.s32.totalorder %s146, %s147
      %p159 = scmp.eq.s32.totalorder %s27, 1
      %p160 = por %p158, %p159
      %p162 = scmp.ne.s32.totalorder %s147, %s161
      %p163 = scmp.eq.s32.totalorder %s27, 0
      %p164 = por %p162, %p163
      %s166 = sadd.s32 %s165, 1
      %p169 = scmp.eq.s32.totalorder %s21, 1
      %p170 = scmp.ne.s32.totalorder %s165, %s167
      %p171 = scmp.eq.s32.totalorder %s21, 0
      %p172 = por %p170, %p171
      %p173 = scmp.ne.s32.totalorder %s165, %s167
      %p174 = scmp.eq.s32.totalorder %s26, 1
      %p175 = por %p173, %p174
      %p176 = scmp.ne.s32.totalorder %s167, %s168
      %p177 = scmp.eq.s32.totalorder %s26, 0
      %p178 = por %p176, %p177
      %p179 = scmp.ne.s32.totalorder %s167, %s168
      %p180 = scmp.eq.s32.totalorder %s27, 1
      %p181 = por %p179, %p180
      %p183 = scmp.ne.s32.totalorder %s168, %s182
      %p184 = scmp.eq.s32.totalorder %s27, 0
      %p185 = por %p183, %p184
      %s187 = sadd.s32 %s186, 1
      %p190 = scmp.eq.s32.totalorder %s21, 1
      %p191 = scmp.ne.s32.totalorder %s186, %s188
      %p192 = scmp.eq.s32.totalorder %s21, 0
      %p193 = por %p191, %p192
      %p194 = scmp.ne.s32.totalorder %s186, %s188
      %p195 = scmp.eq.s32.totalorder %s26, 1
      %p196 = por %p194, %p195
      %p197 = scmp.ne.s32.totalorder %s188, %s189
      %p198 = scmp.eq.s32.totalorder %s26, 0
      %p199 = por %p197, %p198
      %p200 = scmp.ne.s32.totalorder %s188, %s189
      %p201 = scmp.eq.s32.totalorder %s27, 1
      %p202 = por %p200, %p201
      %p204 = scmp.ne.s32.totalorder %s189, %s203
      %p205 = scmp.eq.s32.totalorder %s27, 0
      %p206 = por %p204, %p205
      %s208 = sadd.s32 %s207, 1
      %p211 = scmp.eq.s32.totalorder %s21, 1
      %p212 = scmp.ne.s32.totalorder %s207, %s209
      %p213 = scmp.eq.s32.totalorder %s21, 0
      %p214 = por %p212, %p213
      %p215 = scmp.ne.s32.totalorder %s207, %s209
      %p216 = scmp.eq.s32.totalorder %s26, 1
      %p217 = por %p215, %p216
      %p218 = scmp.ne.s32.totalorder %s209, %s210
      %p219 = scmp.eq.s32.totalorder %s26, 0
      %p220 = por %p218, %p219
      %p221 = scmp.ne.s32.totalorder %s209, %s210
      %p222 = scmp.eq.s32.totalorder %s27, 1
      %p223 = por %p221, %p222
      %p225 = scmp.ne.s32.totalorder %s210, %s224
      %p226 = scmp.eq.s32.totalorder %s27, 0
      %p227 = por %p225, %p226
      %s229 = sadd.s32 %s228, 1
      %p232 = scmp.eq.s32.totalorder %s21, 1
      %p233 = scmp.ne.s32.totalorder %s228, %s230
      %p234 = scmp.eq.s32.totalorder %s21, 0
      %p235 = por %p233, %p234
      %p236 = scmp.ne.s32.totalorder %s228, %s230
      %p237 = scmp.eq.s32.totalorder %s26, 1
      %p238 = por %p236, %p237
      %p239 = scmp.ne.s32.totalorder %s230, %s231
      %p240 = scmp.eq.s32.totalorder %s26, 0
      %p241 = por %p239, %p240
      %p242 = scmp.ne.s32.totalorder %s230, %s231
      %p243 = scmp.eq.s32.totalorder %s27, 1
      %p244 = por %p242, %p243
      %p246 = scmp.ne.s32.totalorder %s231, %s245
      %p247 = scmp.eq.s32.totalorder %s27, 0
      %p248 = por %p246, %p247
      %s250 = sadd.s32 %s249, 1
      %p253 = scmp.eq.s32.totalorder %s21, 1
      %p254 = scmp.ne.s32.totalorder %s249, %s251
      %p255 = scmp.eq.s32.totalorder %s21, 0
      %p256 = por %p254, %p255
      %p257 = scmp.ne.s32.totalorder %s249, %s251
      %p258 = scmp.eq.s32.totalorder %s26, 1
      %p259 = por %p257, %p258
      %p260 = scmp.ne.s32.totalorder %s251, %s252
      %p261 = scmp.eq.s32.totalorder %s26, 0
      %p262 = por %p260, %p261
      %p263 = scmp.ne.s32.totalorder %s251, %s252
      %p264 = scmp.eq.s32.totalorder %s27, 1
      %p265 = por %p263, %p264
      %p267 = scmp.ne.s32.totalorder %s252, %s266
      %p268 = scmp.eq.s32.totalorder %s27, 0
      %p269 = por %p267, %p268
      %s271 = sadd.s32 %s270, 1
      %p274 = scmp.eq.s32.totalorder %s21, 1
      %p275 = scmp.ne.s32.totalorder %s270, %s272
      %p276 = scmp.eq.s32.totalorder %s21, 0
      %p277 = por %p275, %p276
      %p278 = scmp.ne.s32.totalorder %s270, %s272
      %p279 = scmp.eq.s32.totalorder %s26, 1
      %p280 = por %p278, %p279
      %p281 = scmp.ne.s32.totalorder %s272, %s273
      %p282 = scmp.eq.s32.totalorder %s26, 0
      %p283 = por %p281, %p282
      %p284 = scmp.ne.s32.totalorder %s272, %s273
      %p285 = scmp.eq.s32.totalorder %s27, 1
      %p286 = por %p284, %p285
      %p288 = scmp.ne.s32.totalorder %s273, %s287
      %p289 = scmp.eq.s32.totalorder %s27, 0
      %p290 = por %p288, %p289
      %s291 = ssub.s32 %s21, %s28
      %p292 = scmp.eq.s32.totalorder %s291, 0
      %s294 = sadd.s32 %s293, 1
      %s295 = scalar_select %p292, %s293, %s294
      %p298 = pneg %p292
      %p299 = scmp.eq.s32.totalorder %s21, 1
      %p300 = por %p298, %p299
      %p301 = scmp.ne.s32.totalorder %s293, %s296
      %p302 = scmp.eq.s32.totalorder %s21, 0
      %p303 = por %p301, %p302
      %p304 = scmp.ne.s32.totalorder %s293, %s296
      %p305 = scmp.eq.s32.totalorder %s26, 1
      %p306 = por %p304, %p305
      %p307 = scmp.ne.s32.totalorder %s296, %s297
      %p308 = scmp.eq.s32.totalorder %s26, 0
      %p309 = por %p307, %p308
      %p310 = scmp.ne.s32.totalorder %s296, %s297
      %p311 = scmp.eq.s32.totalorder %s27, 1
      %p312 = por %p310, %p311
      %p314 = scmp.ne.s32.totalorder %s297, %s313
      %p315 = scmp.eq.s32.totalorder %s27, 0
      %p316 = por %p314, %p315
      %p317 = scmp.le.s32.totalorder 1, %s21
      %p318 = scmp.lt.s32.totalorder %s21, 3
      %p319 = pnand %p317, %p318
      %p320 = pneg %p319
      // Predicated region
      $region9: #{tpu_custom_call.1} parent=5 // pred_check
        _
      $region10: #{tpu_custom_call.1} parent=5 // pred_check_branch
        %322 = sbr.rel (%p319) target = $region12
      $region11: #{tpu_custom_call.1} parent=5 // pred_region
        %s323 = ssub.s32 %s21, 1
        // Predicated region
        $region13: #{tpu_custom_call.1} parent=11 // pred_check
          %p324 = pneg %p94
        $region14: #{tpu_custom_call.1} parent=11 // pred_check_branch
          %326 = sbr.rel (%p324) target = $region16
        $region15: #{tpu_custom_call.1} parent=11 // pred_region
          _
        $region16: #{tpu_custom_call.1} parent=11 // pred_fallthru
          _
        // Predicated region
        $region17: #{tpu_custom_call.1} parent=11 // pred_check
          %p327 = pneg %p115
        $region18: #{tpu_custom_call.1} parent=11 // pred_check_branch
          %329 = sbr.rel (%p327) target = $region20
        $region19: #{tpu_custom_call.1} parent=11 // pred_region
          _
        $region20: #{tpu_custom_call.1} parent=11 // pred_fallthru
          _
        // Predicated region
        $region21: #{tpu_custom_call.1} parent=11 // pred_check
          %p330 = pneg %p136
        $region22: #{tpu_custom_call.1} parent=11 // pred_check_branch
          %332 = sbr.rel (%p330) target = $region24
        $region23: #{tpu_custom_call.1} parent=11 // pred_region
          _
        $region24: #{tpu_custom_call.1} parent=11 // pred_fallthru
          _
        // Predicated region
        $region25: #{tpu_custom_call.1} parent=11 // pred_check
          %p333 = pneg %p157
        $region26: #{tpu_custom_call.1} parent=11 // pred_check_branch
          %335 = sbr.rel (%p333) target = $region28
        $region27: #{tpu_custom_call.1} parent=11 // pred_region
          _
        $region28: #{tpu_custom_call.1} parent=11 // pred_fallthru
          _
        // Predicated region
        $region29: #{tpu_custom_call.1} parent=11 // pred_check
          %p336 = pneg %p178
        $region30: #{tpu_custom_call.1} parent=11 // pred_check_branch
          %338 = sbr.rel (%p336) target = $region32
        $region31: #{tpu_custom_call.1} parent=11 // pred_region
          _
        $region32: #{tpu_custom_call.1} parent=11 // pred_fallthru
          _
        // Predicated region
        $region33: #{tpu_custom_call.1} parent=11 // pred_check
          %p339 = pneg %p199
        $region34: #{tpu_custom_call.1} parent=11 // pred_check_branch
          %341 = sbr.rel (%p339) target = $region36
        $region35: #{tpu_custom_call.1} parent=11 // pred_region
          _
        $region36: #{tpu_custom_call.1} parent=11 // pred_fallthru
          _
        // Predicated region
        $region37: #{tpu_custom_call.1} parent=11 // pred_check
          %p342 = pneg %p220
        $region38: #{tpu_custom_call.1} parent=11 // pred_check_branch
          %344 = sbr.rel (%p342) target = $region40
        $region39: #{tpu_custom_call.1} parent=11 // pred_region
          _
        $region40: #{tpu_custom_call.1} parent=11 // pred_fallthru
          _
        // Predicated region
        $region41: #{tpu_custom_call.1} parent=11 // pred_check
          %p345 = pneg %p241
        $region42: #{tpu_custom_call.1} parent=11 // pred_check_branch
          %347 = sbr.rel (%p345) target = $region44
        $region43: #{tpu_custom_call.1} parent=11 // pred_region
          _
        $region44: #{tpu_custom_call.1} parent=11 // pred_fallthru
          _
        // Predicated region
        $region45: #{tpu_custom_call.1} parent=11 // pred_check
          %p348 = pneg %p262
        $region46: #{tpu_custom_call.1} parent=11 // pred_check_branch
          %350 = sbr.rel (%p348) target = $region48
        $region47: #{tpu_custom_call.1} parent=11 // pred_region
          _
        $region48: #{tpu_custom_call.1} parent=11 // pred_fallthru
          _
        // Predicated region
        $region49: #{tpu_custom_call.1} parent=11 // pred_check
          %p351 = pneg %p283
        $region50: #{tpu_custom_call.1} parent=11 // pred_check_branch
          %353 = sbr.rel (%p351) target = $region52
        $region51: #{tpu_custom_call.1} parent=11 // pred_region
          _
        $region52: #{tpu_custom_call.1} parent=11 // pred_fallthru
          _
      $region12: #{tpu_custom_call.1} parent=5 // pred_fallthru
        _
      %p354 = scmp.lt.s32.totalorder %s21, 2
      // Predicated region
      $region53: #{tpu_custom_call.1} parent=5 // pred_check
        %p355 = pneg %p354
      $region54: #{tpu_custom_call.1} parent=5 // pred_check_branch
        %357 = sbr.rel (%p355) target = $region56
      $region55: #{tpu_custom_call.1} parent=5 // pred_region
        // Predicated region
        $region57: #{tpu_custom_call.1} parent=55 // pred_check
          %p358 = pneg %p41
        $region58: #{tpu_custom_call.1} parent=55 // pred_check_branch
          %360 = sbr.rel (%p358) target = $region60
        $region59: #{tpu_custom_call.1} parent=55 // pred_region
          %p361 = scmp.lt.s32.totalorder %s21, 1
          %s362 = scalar_select %p361, %s21, 1
          %s363 = smul.addr %s362, 2
          %s364 = smul.addr %s363, 8
          %s365 = scalar_lea.vmem %s0, %s364
        $region60: #{tpu_custom_call.1} parent=55 // pred_fallthru
          _
        // Predicated region
        $region61: #{tpu_custom_call.1} parent=55 // pred_check
          %p366 = pneg %p67
        $region62: #{tpu_custom_call.1} parent=55 // pred_check_branch
          %368 = sbr.rel (%p366) target = $region64
        $region63: #{tpu_custom_call.1} parent=55 // pred_region
          %p369 = scmp.lt.s32.totalorder %s21, 1
          %s370 = scalar_select %p369, %s21, 1
          %s371 = scalar_lea.vmem %s1, %s370
        $region64: #{tpu_custom_call.1} parent=55 // pred_fallthru
          _
      $region56: #{tpu_custom_call.1} parent=5 // pred_fallthru
        _
      %p372 = scmp.le.s32.totalorder 1, %s21
      %p373 = scmp.lt.s32.totalorder %s21, 3
      %p374 = pnand %p372, %p373
      %p375 = pneg %p374
      // Predicated region
      $region65: #{tpu_custom_call.1} parent=5 // pred_check
        _
      $region66: #{tpu_custom_call.1} parent=5 // pred_check_branch
        %377 = sbr.rel (%p374) target = $region68
      $region67: #{tpu_custom_call.1} parent=5 // pred_region
        %s378 = ssub.s32 %s21, 1
        %p379 = scmp.lt.s32.totalorder %s26, 1
        %s380 = scalar_select %p379, %s26, 1
        %s381 = smul.addr %s380, 2
        %s382 = smul.addr %s381, 8
        %s383 = scalar_lea.vmem %s0, %s382
        %p384 = pneg %p47
        %p385 = pneg %p44
        %p386 = scmp.lt.s32.totalorder %s26, 1
        %s387 = scalar_select %p386, %s26, 1
        %s388 = scalar_lea.vmem %s1, %s387
        %p389 = pneg %p73
        %p390 = pneg %p70
        %p391 = pneg %p94
        %p392 = pneg %p91
        %p393 = pneg %p115
        %p394 = pneg %p112
        %p395 = pneg %p136
        %p396 = pneg %p133
        %p397 = pneg %p157
        %p398 = pneg %p154
        %p399 = pneg %p178
        %p400 = pneg %p175
        %p401 = pneg %p199
        %p402 = pneg %p196
        %p403 = pneg %p220
        %p404 = pneg %p217
        %p405 = pneg %p241
        %p406 = pneg %p238
        %p407 = pneg %p262
        %p408 = pneg %p259
        %p409 = pneg %p283
        %p410 = pneg %p280
        %p411 = pneg %p309
        %p412 = pneg %p306
        %s413 = sand.u32 %s296, 1
        %s414 = scalar_lea.sflag [#allocation3], %s413
        %s415 = sand.u32 %s296, 1
        %s416 = smul.addr %s415, 16
        %s417 = scalar_lea.vmem [#allocation2], %s416
        %p418 = scmp.lt.s32.totalorder %s26, 1
        %s419 = scalar_select %p418, %s26, 1
        %s420 = smul.addr %s419, 2
        %s421 = smul.addr %s420, 8
        %s422 = scalar_lea.vmem %s0, %s421
        %p423 = scmp.lt.s32.totalorder %s26, 1
        %s424 = scalar_select %p423, %s26, 1
        %s425 = scalar_lea.vmem %s1, %s424
        %v426 = vld [vmem:[%s422] sm:$0xff]
        %v427 = vld [vmem:[%s422 + $0x8] sm:$0xff]
        %v428 = vld [vmem:[%s425] sm:$0x1]
        %v429 = vld [vmem:[%s2] sm:$0xff]
        %v430 = vld [vmem:[%s2 + $0x8] sm:$0xff]
        %v431 = vld [vmem:[%s2 + $0x10] sm:$0xff]
        %v432 = vld [vmem:[%s2 + $0x18] sm:$0xff]
        %v433 = vld [vmem:[%s2 + $0x20] sm:$0xff]
        %v434 = vld [vmem:[%s2 + $0x28] sm:$0xff]
        %v435 = vld [vmem:[%s2 + $0x30] sm:$0xff]
        %v436 = vld [vmem:[%s2 + $0x38] sm:$0xff]
        %v437 = vld [vmem:[%s2 + $0x40] sm:$0xff]
        %v438 = vld [vmem:[%s2 + $0x48] sm:$0xff]
        %v439 = vld [vmem:[%s2 + $0x50] sm:$0xff]
        %v440 = vld [vmem:[%s2 + $0x58] sm:$0xff]
        %v441 = vld [vmem:[%s2 + $0x60] sm:$0xff]
        %v442 = vld [vmem:[%s2 + $0x68] sm:$0xff]
        %v443 = vld [vmem:[%s2 + $0x70] sm:$0xff]
        %v444 = vld [vmem:[%s2 + $0x78] sm:$0xff]
        %v445 = vld [vmem:[%s6] sm:$0x1]
        %v447 = vlaneseq
        %v448 = vshrl.u32 %v447, 7
        %v449 = vsub.s32 0, %v448
        %v450 = vrot.slane %v445, %v449
        %452 = vmatprep.subr.mxu0 0.0
        %453 = vmatpush1.msra.mxu0 %v429
        %454 = vmatprep.subr.mxu0 0.0
        %455 = vmatpush1.msra.mxu0 %v430
        %456 = vmatprep.subr.mxu0 0.0
        %457 = vmatpush1.msra.mxu0 %v431
        %458 = vmatprep.subr.mxu0 0.0
        %459 = vmatpush1.msra.mxu0 %v432
        %460 = vmatprep.subr.mxu0 0.0
        %461 = vmatpush1.msra.mxu0 %v433
        %462 = vmatprep.subr.mxu0 0.0
        %463 = vmatpush1.msra.mxu0 %v434
        %464 = vmatprep.subr.mxu0 0.0
        %465 = vmatpush1.msra.mxu0 %v435
        %466 = vmatprep.subr.mxu0 0.0
        %467 = vmatpush1.msra.mxu0 %v436
        %468 = vmatprep.subr.mxu0 0.0
        %469 = vmatpush1.msra.mxu0 %v437
        %470 = vmatprep.subr.mxu0 0.0
        %471 = vmatpush1.msra.mxu0 %v438
        %472 = vmatprep.subr.mxu0 0.0
        %473 = vmatpush1.msra.mxu0 %v439
        %474 = vmatprep.subr.mxu0 0.0
        %475 = vmatpush1.msra.mxu0 %v440
        %476 = vmatprep.subr.mxu0 0.0
        %477 = vmatpush1.msra.mxu0 %v441
        %478 = vmatprep.subr.mxu0 0.0
        %479 = vmatpush1.msra.mxu0 %v442
        %480 = vmatprep.subr.mxu0 0.0
        %481 = vmatpush1.msra.mxu0 %v443
        %482 = vmatprep.subr.mxu0 0.0
        %483 = vmatpush1.msra.mxu0 %v444
        %484 = vmatprep.subr.mxu0 0.0
        %485 = vmatpush1.msra.mxu0 0.0
        %486 = vmatprep.subr.mxu0 0.0
        %487 = vmatpush1.msra.mxu0 0.0
        %488 = vmatprep.subr.mxu0 0.0
        %489 = vmatpush1.msra.mxu0 0.0
        %490 = vmatprep.subr.mxu0 0.0
        %491 = vmatpush1.msra.mxu0 0.0
        %492 = vmatprep.subr.mxu0 0.0
        %493 = vmatpush1.msra.mxu0 0.0
        %494 = vmatprep.subr.mxu0 0.0
        %495 = vmatpush1.msra.mxu0 0.0
        %496 = vmatprep.subr.mxu0 0.0
        %497 = vmatpush1.msra.mxu0 0.0
        %498 = vmatprep.subr.mxu0 0.0
        %499 = vmatpush1.msra.mxu0 0.0
        %500 = vmatprep.subr.mxu0 0.0
        %501 = vmatpush1.msra.mxu0 0.0
        %502 = vmatprep.subr.mxu0 0.0
        %503 = vmatpush1.msra.mxu0 0.0
        %504 = vmatprep.subr.mxu0 0.0
        %505 = vmatpush1.msra.mxu0 0.0
        %506 = vmatprep.subr.mxu0 0.0
        %507 = vmatpush1.msra.mxu0 0.0
        %508 = vmatprep.subr.mxu0 0.0
        %509 = vmatpush1.msra.mxu0 0.0
        %510 = vmatprep.subr.mxu0 0.0
        %511 = vmatpush1.msra.mxu0 0.0
        %512 = vmatprep.subr.mxu0 0.0
        %513 = vmatpush1.msra.mxu0 0.0
        %514 = vmatprep.subr.mxu0 0.0
        %515 = vmatpush1.msra.mxu0 0.0
        %516 = vmatprep.mubr.f32.mxu0 0.0
        %517 = vmatmul.mubr.f32.gmra.mrb[0].mxu0 %v426
        %v518 = vpop.f32.mrb[0].mxu0
        %v519 = vadd.f32 %v450, %v518
        %v520 = vpop.f32.mrb[0].mxu0
        %521 = vmatprep.mubr.f32.mxu0 0.0
        %522 = vmatmul.mubr.f32.gmra.mrb[0].mxu0 %v427
        %v523 = vpop.f32.mrb[0].mxu0
        %v524 = vadd.f32 %v450, %v523
        %v525 = vpop.f32.mrb[0].mxu0
        %526 = vdwg.mxu0
        %v527 = vld [vmem:[%s3] sm:$0xff]
        %v528 = vld [vmem:[%s3 + $0x8] sm:$0xff]
        %v529 = vld [vmem:[%s3 + $0x10] sm:$0xff]
        %v530 = vld [vmem:[%s3 + $0x18] sm:$0xff]
        %v531 = vld [vmem:[%s3 + $0x20] sm:$0xff]
        %v532 = vld [vmem:[%s3 + $0x28] sm:$0xff]
        %v533 = vld [vmem:[%s3 + $0x30] sm:$0xff]
        %v534 = vld [vmem:[%s3 + $0x38] sm:$0xff]
        %v535 = vld [vmem:[%s3 + $0x40] sm:$0xff]
        %v536 = vld [vmem:[%s3 + $0x48] sm:$0xff]
        %v537 = vld [vmem:[%s3 + $0x50] sm:$0xff]
        %v538 = vld [vmem:[%s3 + $0x58] sm:$0xff]
        %v539 = vld [vmem:[%s3 + $0x60] sm:$0xff]
        %v540 = vld [vmem:[%s3 + $0x68] sm:$0xff]
        %v541 = vld [vmem:[%s3 + $0x70] sm:$0xff]
        %v542 = vld [vmem:[%s3 + $0x78] sm:$0xff]
        %v543 = vld [vmem:[%s7] sm:$0x1]
        %v545 = vlaneseq
        %v546 = vshrl.u32 %v545, 7
        %v547 = vsub.s32 0, %v546
        %v548 = vrot.slane %v543, %v547
        %550 = vmatprep.subr.mxu0 0.0
        %551 = vmatpush1.msra.mxu0 %v527
        %552 = vmatprep.subr.mxu0 0.0
        %553 = vmatpush1.msra.mxu0 %v528
        %554 = vmatprep.subr.mxu0 0.0
        %555 = vmatpush1.msra.mxu0 %v529
        %556 = vmatprep.subr.mxu0 0.0
        %557 = vmatpush1.msra.mxu0 %v530
        %558 = vmatprep.subr.mxu0 0.0
        %559 = vmatpush1.msra.mxu0 %v531
        %560 = vmatprep.subr.mxu0 0.0
        %561 = vmatpush1.msra.mxu0 %v532
        %562 = vmatprep.subr.mxu0 0.0
        %563 = vmatpush1.msra.mxu0 %v533
        %564 = vmatprep.subr.mxu0 0.0
        %565 = vmatpush1.msra.mxu0 %v534
        %566 = vmatprep.subr.mxu0 0.0
        %567 = vmatpush1.msra.mxu0 %v535
        %568 = vmatprep.subr.mxu0 0.0
        %569 = vmatpush1.msra.mxu0 %v536
        %570 = vmatprep.subr.mxu0 0.0
        %571 = vmatpush1.msra.mxu0 %v537
        %572 = vmatprep.subr.mxu0 0.0
        %573 = vmatpush1.msra.mxu0 %v538
        %574 = vmatprep.subr.mxu0 0.0
        %575 = vmatpush1.msra.mxu0 %v539
        %576 = vmatprep.subr.mxu0 0.0
        %577 = vmatpush1.msra.mxu0 %v540
        %578 = vmatprep.subr.mxu0 0.0
        %579 = vmatpush1.msra.mxu0 %v541
        %580 = vmatprep.subr.mxu0 0.0
        %581 = vmatpush1.msra.mxu0 %v542
        %582 = vmatprep.subr.mxu0 0.0
        %583 = vmatpush1.msra.mxu0 0.0
        %584 = vmatprep.subr.mxu0 0.0
        %585 = vmatpush1.msra.mxu0 0.0
        %586 = vmatprep.subr.mxu0 0.0
        %587 = vmatpush1.msra.mxu0 0.0
        %588 = vmatprep.subr.mxu0 0.0
        %589 = vmatpush1.msra.mxu0 0.0
        %590 = vmatprep.subr.mxu0 0.0
        %591 = vmatpush1.msra.mxu0 0.0
        %592 = vmatprep.subr.mxu0 0.0
        %593 = vmatpush1.msra.mxu0 0.0
        %594 = vmatprep.subr.mxu0 0.0
        %595 = vmatpush1.msra.mxu0 0.0
        %596 = vmatprep.subr.mxu0 0.0
        %597 = vmatpush1.msra.mxu0 0.0
        %598 = vmatprep.subr.mxu0 0.0
        %599 = vmatpush1.msra.mxu0 0.0
        %600 = vmatprep.subr.mxu0 0.0
        %601 = vmatpush1.msra.mxu0 0.0
        %602 = vmatprep.subr.mxu0 0.0
        %603 = vmatpush1.msra.mxu0 0.0
        %604 = vmatprep.subr.mxu0 0.0
        %605 = vmatpush1.msra.mxu0 0.0
        %606 = vmatprep.subr.mxu0 0.0
        %607 = vmatpush1.msra.mxu0 0.0
        %608 = vmatprep.subr.mxu0 0.0
        %609 = vmatpush1.msra.mxu0 0.0
        %610 = vmatprep.subr.mxu0 0.0
        %611 = vmatpush1.msra.mxu0 0.0
        %612 = vmatprep.subr.mxu0 0.0
        %613 = vmatpush1.msra.mxu0 0.0
        %614 = vmatprep.mubr.f32.mxu0 0.0
        %615 = vmatmul.mubr.f32.gmra.mrb[0].mxu0 %v426
        %v616 = vpop.f32.mrb[0].mxu0
        %v617 = vadd.f32 %v548, %v616
        %v618 = vpop.f32.mrb[0].mxu0
        %619 = vmatprep.mubr.f32.mxu0 0.0
        %620 = vmatmul.mubr.f32.gmra.mrb[0].mxu0 %v427
        %v621 = vpop.f32.mrb[0].mxu0
        %v622 = vadd.f32 %v548, %v621
        %v623 = vpop.f32.mrb[0].mxu0
        %624 = vdwg.mxu0
        %v625 = vld [vmem:[%s4] sm:$0xff]
        %v626 = vld [vmem:[%s4 + $0x8] sm:$0xff]
        %v627 = vld [vmem:[%s4 + $0x10] sm:$0xff]
        %v628 = vld [vmem:[%s4 + $0x18] sm:$0xff]
        %v629 = vld [vmem:[%s4 + $0x20] sm:$0xff]
        %v630 = vld [vmem:[%s4 + $0x28] sm:$0xff]
        %v631 = vld [vmem:[%s4 + $0x30] sm:$0xff]
        %v632 = vld [vmem:[%s4 + $0x38] sm:$0xff]
        %v633 = vld [vmem:[%s4 + $0x40] sm:$0xff]
        %v634 = vld [vmem:[%s4 + $0x48] sm:$0xff]
        %v635 = vld [vmem:[%s4 + $0x50] sm:$0xff]
        %v636 = vld [vmem:[%s4 + $0x58] sm:$0xff]
        %v637 = vld [vmem:[%s4 + $0x60] sm:$0xff]
        %v638 = vld [vmem:[%s4 + $0x68] sm:$0xff]
        %v639 = vld [vmem:[%s4 + $0x70] sm:$0xff]
        %v640 = vld [vmem:[%s4 + $0x78] sm:$0xff]
        %v641 = vld [vmem:[%s8] sm:$0x1]
        %v643 = vlaneseq
        %v644 = vshrl.u32 %v643, 7
        %v645 = vsub.s32 0, %v644
        %v646 = vrot.slane %v641, %v645
        %648 = vmatprep.subr.mxu0 0.0
        %649 = vmatpush1.msra.mxu0 %v625
        %650 = vmatprep.subr.mxu0 0.0
        %651 = vmatpush1.msra.mxu0 %v626
        %652 = vmatprep.subr.mxu0 0.0
        %653 = vmatpush1.msra.mxu0 %v627
        %654 = vmatprep.subr.mxu0 0.0
        %655 = vmatpush1.msra.mxu0 %v628
        %656 = vmatprep.subr.mxu0 0.0
        %657 = vmatpush1.msra.mxu0 %v629
        %658 = vmatprep.subr.mxu0 0.0
        %659 = vmatpush1.msra.mxu0 %v630
        %660 = vmatprep.subr.mxu0 0.0
        %661 = vmatpush1.msra.mxu0 %v631
        %662 = vmatprep.subr.mxu0 0.0
        %663 = vmatpush1.msra.mxu0 %v632
        %664 = vmatprep.subr.mxu0 0.0
        %665 = vmatpush1.msra.mxu0 %v633
        %666 = vmatprep.subr.mxu0 0.0
        %667 = vmatpush1.msra.mxu0 %v634
        %668 = vmatprep.subr.mxu0 0.0
        %669 = vmatpush1.msra.mxu0 %v635
        %670 = vmatprep.subr.mxu0 0.0
        %671 = vmatpush1.msra.mxu0 %v636
        %672 = vmatprep.subr.mxu0 0.0
        %673 = vmatpush1.msra.mxu0 %v637
        %674 = vmatprep.subr.mxu0 0.0
        %675 = vmatpush1.msra.mxu0 %v638
        %676 = vmatprep.subr.mxu0 0.0
        %677 = vmatpush1.msra.mxu0 %v639
        %678 = vmatprep.subr.mxu0 0.0
        %679 = vmatpush1.msra.mxu0 %v640
        %680 = vmatprep.subr.mxu0 0.0
        %681 = vmatpush1.msra.mxu0 0.0
        %682 = vmatprep.subr.mxu0 0.0
        %683 = vmatpush1.msra.mxu0 0.0
        %684 = vmatprep.subr.mxu0 0.0
        %685 = vmatpush1.msra.mxu0 0.0
        %686 = vmatprep.subr.mxu0 0.0
        %687 = vmatpush1.msra.mxu0 0.0
        %688 = vmatprep.subr.mxu0 0.0
        %689 = vmatpush1.msra.mxu0 0.0
        %690 = vmatprep.subr.mxu0 0.0
        %691 = vmatpush1.msra.mxu0 0.0
        %692 = vmatprep.subr.mxu0 0.0
        %693 = vmatpush1.msra.mxu0 0.0
        %694 = vmatprep.subr.mxu0 0.0
        %695 = vmatpush1.msra.mxu0 0.0
        %696 = vmatprep.subr.mxu0 0.0
        %697 = vmatpush1.msra.mxu0 0.0
        %698 = vmatprep.subr.mxu0 0.0
        %699 = vmatpush1.msra.mxu0 0.0
        %700 = vmatprep.subr.mxu0 0.0
        %701 = vmatpush1.msra.mxu0 0.0
        %702 = vmatprep.subr.mxu0 0.0
        %703 = vmatpush1.msra.mxu0 0.0
        %704 = vmatprep.subr.mxu0 0.0
        %705 = vmatpush1.msra.mxu0 0.0
        %706 = vmatprep.subr.mxu0 0.0
        %707 = vmatpush1.msra.mxu0 0.0
        %708 = vmatprep.subr.mxu0 0.0
        %709 = vmatpush1.msra.mxu0 0.0
        %710 = vmatprep.subr.mxu0 0.0
        %711 = vmatpush1.msra.mxu0 0.0
        %712 = vmatprep.mubr.f32.mxu0 0.0
        %713 = vmatmul.mubr.f32.gmra.mrb[0].mxu0 %v426
        %v714 = vpop.f32.mrb[0].mxu0
        %v715 = vadd.f32 %v646, %v714
        %v716 = vpop.f32.mrb[0].mxu0
        %717 = vmatprep.mubr.f32.mxu0 0.0
        %718 = vmatmul.mubr.f32.gmra.mrb[0].mxu0 %v427
        %v719 = vpop.f32.mrb[0].mxu0
        %v720 = vadd.f32 %v646, %v719
        %v721 = vpop.f32.mrb[0].mxu0
        %722 = vdwg.mxu0
        %vm723 = vcmask 261120
        %v725 = vsel %vm723, %v519, 0
        %v728 = vsel %vm723, %v524, 0
        %v731 = vsel %vm723, %v617, 0
        %v734 = vsel %vm723, %v622, 0
        %736 = vmatprep.subr.mxu0 0.0
        %737 = vmatpush1.xpose.msra.mxu0 %v731
        %738 = vmatprep.subr.mxu0 0.0
        %739 = vmatpush1.xpose.msra.mxu0 %v734
        %740 = vmatprep.subr.mxu0 0.0
        %741 = vmatpush1.xpose.msra.mxu0 0.0
        %742 = vmatprep.subr.mxu0 0.0
        %743 = vmatpush1.xpose.msra.mxu0 0.0
        %744 = vmatprep.subr.mxu0 0.0
        %745 = vmatpush1.xpose.msra.mxu0 0.0
        %746 = vmatprep.subr.mxu0 0.0
        %747 = vmatpush1.xpose.msra.mxu0 0.0
        %748 = vmatprep.subr.mxu0 0.0
        %749 = vmatpush1.xpose.msra.mxu0 0.0
        %750 = vmatprep.subr.mxu0 0.0
        %751 = vmatpush1.xpose.msra.mxu0 0.0
        %752 = vmatprep.subr.mxu0 0.0
        %753 = vmatpush1.xpose.msra.mxu0 0.0
        %754 = vmatprep.subr.mxu0 0.0
        %755 = vmatpush1.xpose.msra.mxu0 0.0
        %756 = vmatprep.subr.mxu0 0.0
        %757 = vmatpush1.xpose.msra.mxu0 0.0
        %758 = vmatprep.subr.mxu0 0.0
        %759 = vmatpush1.xpose.msra.mxu0 0.0
        %760 = vmatprep.subr.mxu0 0.0
        %761 = vmatpush1.xpose.msra.mxu0 0.0
        %762 = vmatprep.subr.mxu0 0.0
        %763 = vmatpush1.xpose.msra.mxu0 0.0
        %764 = vmatprep.subr.mxu0 0.0
        %765 = vmatpush1.xpose.msra.mxu0 0.0
        %766 = vmatprep.subr.mxu0 0.0
        %767 = vmatpush1.xpose.msra.mxu0 0.0
        %768 = vmatprep.subr.mxu0 0.0
        %769 = vmatpush1.xpose.msra.mxu0 0.0
        %770 = vmatprep.subr.mxu0 0.0
        %771 = vmatpush1.xpose.msra.mxu0 0.0
        %772 = vmatprep.subr.mxu0 0.0
        %773 = vmatpush1.xpose.msra.mxu0 0.0
        %774 = vmatprep.subr.mxu0 0.0
        %775 = vmatpush1.xpose.msra.mxu0 0.0
        %776 = vmatprep.subr.mxu0 0.0
        %777 = vmatpush1.xpose.msra.mxu0 0.0
        %778 = vmatprep.subr.mxu0 0.0
        %779 = vmatpush1.xpose.msra.mxu0 0.0
        %780 = vmatprep.subr.mxu0 0.0
        %781 = vmatpush1.xpose.msra.mxu0 0.0
        %782 = vmatprep.subr.mxu0 0.0
        %783 = vmatpush1.xpose.msra.mxu0 0.0
        %784 = vmatprep.subr.mxu0 0.0
        %785 = vmatpush1.xpose.msra.mxu0 0.0
        %786 = vmatprep.subr.mxu0 0.0
        %787 = vmatpush1.xpose.msra.mxu0 0.0
        %788 = vmatprep.subr.mxu0 0.0
        %789 = vmatpush1.xpose.msra.mxu0 0.0
        %790 = vmatprep.subr.mxu0 0.0
        %791 = vmatpush1.xpose.msra.mxu0 0.0
        %792 = vmatprep.subr.mxu0 0.0
        %793 = vmatpush1.xpose.msra.mxu0 0.0
        %794 = vmatprep.subr.mxu0 0.0
        %795 = vmatpush1.xpose.msra.mxu0 0.0
        %796 = vmatprep.subr.mxu0 0.0
        %797 = vmatpush1.xpose.msra.mxu0 0.0
        %798 = vmatprep.subr.mxu0 0.0
        %799 = vmatpush1.xpose.msra.mxu0 0.0
        %800 = vmatprep.mubr.f32.mxu0 0.0
        %801 = vmatmul.mubr.f32.gmra.mrb[0].mxu0 %v725
        %v802 = vpop.f32.mrb[0].mxu0
        %v803 = vadd.f32 0.0, %v802
        %v804 = vpop.f32.mrb[0].mxu0
        %805 = vmatprep.mubr.f32.mxu0 0.0
        %806 = vmatmul.mubr.f32.gmra.mrb[0].mxu0 %v728
        %v807 = vpop.f32.mrb[0].mxu0
        %v808 = vadd.f32 0.0, %v807
        %v809 = vpop.f32.mrb[0].mxu0
        %810 = vdwg.mxu0
        %v811 = vmul.f32 %v803, 0.17677669
        %v812 = vmul.f32 %v808, 0.17677669
        %v814 = vlaneseq
        %v815 = vshrl.u32 %v814, 7
        %v816 = vsub.s32 0, %v815
        %v817 = vrot.slane %v428, %v816
        %v819 = vadd.f32 %v811, %v817
        %v820 = vadd.f32 %v812, %v817
        %vm821 = vcmask 130048
        %v822 = vsel %vm821, %v819, -inf
        %823 = vmax.xlane.f32.xlu0 %v822
        %v824 = vpop.xlane.xlu0 %823
        %v825 = vsel %vm821, %v820, -inf
        %826 = vmax.xlane.f32.xlu0 %v825
        %v827 = vpop.xlane.xlu0 %826
        %v828 = vsub.f32 %v819, %v824
        %v829 = vsub.f32 %v820, %v827
        %v830 = vmul.f32 %v828, 1.442695
        %v831 = vpow.pop %v830
        %v832 = vmul.f32 %v829, 1.442695
        %v833 = vpow.pop %v832
        %v834 = vsel %vm821, %v831, 0.0
        %835 = vadd.xlane.f32.xlu0 %v834
        %v836 = vpop.xlane.xlu0 %835
        %v837 = vsel %vm821, %v833, 0.0
        %838 = vadd.xlane.f32.xlu0 %v837
        %v839 = vpop.xlane.xlu0 %838
        %v841 = vsel %vm821, %v831, 0
        %v844 = vsel %vm821, %v833, 0
        %846 = vmatprep.subr.mxu0 0.0
        %847 = vmatpush1.msra.mxu0 %v715
        %848 = vmatprep.subr.mxu0 0.0
        %849 = vmatpush1.msra.mxu0 %v720
        %850 = vmatprep.subr.mxu0 0.0
        %851 = vmatpush1.msra.mxu0 0.0
        %852 = vmatprep.subr.mxu0 0.0
        %853 = vmatpush1.msra.mxu0 0.0
        %854 = vmatprep.subr.mxu0 0.0
        %855 = vmatpush1.msra.mxu0 0.0
        %856 = vmatprep.subr.mxu0 0.0
        %857 = vmatpush1.msra.mxu0 0.0
        %858 = vmatprep.subr.mxu0 0.0
        %859 = vmatpush1.msra.mxu0 0.0
        %860 = vmatprep.subr.mxu0 0.0
        %861 = vmatpush1.msra.mxu0 0.0
        %862 = vmatprep.subr.mxu0 0.0
        %863 = vmatpush1.msra.mxu0 0.0
        %864 = vmatprep.subr.mxu0 0.0
        %865 = vmatpush1.msra.mxu0 0.0
        %866 = vmatprep.subr.mxu0 0.0
        %867 = vmatpush1.msra.mxu0 0.0
        %868 = vmatprep.subr.mxu0 0.0
        %869 = vmatpush1.msra.mxu0 0.0
        %870 = vmatprep.subr.mxu0 0.0
        %871 = vmatpush1.msra.mxu0 0.0
        %872 = vmatprep.subr.mxu0 0.0
        %873 = vmatpush1.msra.mxu0 0.0
        %874 = vmatprep.subr.mxu0 0.0
        %875 = vmatpush1.msra.mxu0 0.0
        %876 = vmatprep.subr.mxu0 0.0
        %877 = vmatpush1.msra.mxu0 0.0
        %878 = vmatprep.subr.mxu0 0.0
        %879 = vmatpush1.msra.mxu0 0.0
        %880 = vmatprep.subr.mxu0 0.0
        %881 = vmatpush1.msra.mxu0 0.0
        %882 = vmatprep.subr.mxu0 0.0
        %883 = vmatpush1.msra.mxu0 0.0
        %884 = vmatprep.subr.mxu0 0.0
        %885 = vmatpush1.msra.mxu0 0.0
        %886 = vmatprep.subr.mxu0 0.0
        %887 = vmatpush1.msra.mxu0 0.0
        %888 = vmatprep.subr.mxu0 0.0
        %889 = vmatpush1.msra.mxu0 0.0
        %890 = vmatprep.subr.mxu0 0.0
        %891 = vmatpush1.msra.mxu0 0.0
        %892 = vmatprep.subr.mxu0 0.0
        %893 = vmatpush1.msra.mxu0 0.0
        %894 = vmatprep.subr.mxu0 0.0
        %895 = vmatpush1.msra.mxu0 0.0
        %896 = vmatprep.subr.mxu0 0.0
        %897 = vmatpush1.msra.mxu0 0.0
        %898 = vmatprep.subr.mxu0 0.0
        %899 = vmatpush1.msra.mxu0 0.0
        %900 = vmatprep.subr.mxu0 0.0
        %901 = vmatpush1.msra.mxu0 0.0
        %902 = vmatprep.subr.mxu0 0.0
        %903 = vmatpush1.msra.mxu0 0.0
        %904 = vmatprep.subr.mxu0 0.0
        %905 = vmatpush1.msra.mxu0 0.0
        %906 = vmatprep.subr.mxu0 0.0
        %907 = vmatpush1.msra.mxu0 0.0
        %908 = vmatprep.subr.mxu0 0.0
        %909 = vmatpush1.msra.mxu0 0.0
        %910 = vmatprep.mubr.f32.mxu0 0.0
        %911 = vmatmul.mubr.f32.gmra.mrb[0].mxu0 %v841
        %v912 = vpop.f32.mrb[0].mxu0
        %v913 = vadd.f32 0.0, %v912
        %v914 = vpop.f32.mrb[0].mxu0
        %915 = vmatprep.mubr.f32.mxu0 0.0
        %916 = vmatmul.mubr.f32.gmra.mrb[0].mxu0 %v844
        %v917 = vpop.f32.mrb[0].mxu0
        %v918 = vadd.f32 0.0, %v917
        %v919 = vpop.f32.mrb[0].mxu0
        %920 = vdwg.mxu0
        %v921 = vrcp.pop %v836
        %v922 = vmul.f32 %v913, %v921
        %v923 = vrcp.pop %v839
        %v924 = vmul.f32 %v918, %v923
        %v925 = vld [vmem:[%s5] sm:$0xff]
        %v926 = vld [vmem:[%s5 + $0x8] sm:$0xff]
        %v927 = vld [vmem:[%s5 + $0x10] sm:$0xff]
        %v928 = vld [vmem:[%s5 + $0x18] sm:$0xff]
        %s929 = scalar_lea.vmem %s2, 128
        %v930 = vld [vmem:[%s929] sm:$0xff]
        %v931 = vld [vmem:[%s929 + $0x8] sm:$0xff]
        %v932 = vld [vmem:[%s929 + $0x10] sm:$0xff]
        %v933 = vld [vmem:[%s929 + $0x18] sm:$0xff]
        %v934 = vld [vmem:[%s929 + $0x20] sm:$0xff]
        %v935 = vld [vmem:[%s929 + $0x28] sm:$0xff]
        %v936 = vld [vmem:[%s929 + $0x30] sm:$0xff]
        %v937 = vld [vmem:[%s929 + $0x38] sm:$0xff]
        %v938 = vld [vmem:[%s929 + $0x40] sm:$0xff]
        %v939 = vld [vmem:[%s929 + $0x48] sm:$0xff]
        %v940 = vld [vmem:[%s929 + $0x50] sm:$0xff]
        %v941 = vld [vmem:[%s929 + $0x58] sm:$0xff]
        %v942 = vld [vmem:[%s929 + $0x60] sm:$0xff]
        %v943 = vld [vmem:[%s929 + $0x68] sm:$0xff]
        %v944 = vld [vmem:[%s929 + $0x70] sm:$0xff]
        %v945 = vld [vmem:[%s929 + $0x78] sm:$0xff]
        %s946 = scalar_lea.vmem %s6, 1
        %v947 = vld [vmem:[%s946] sm:$0x1]
        %v949 = vlaneseq
        %v950 = vshrl.u32 %v949, 7
        %v951 = vsub.s32 0, %v950
        %v952 = vrot.slane %v947, %v951
        %954 = vmatprep.subr.mxu0 0.0
        %955 = vmatpush1.msra.mxu0 %v930
        %956 = vmatprep.subr.mxu0 0.0
        %957 = vmatpush1.msra.mxu0 %v931
        %958 = vmatprep.subr.mxu0 0.0
        %959 = vmatpush1.msra.mxu0 %v932
        %960 = vmatprep.subr.mxu0 0.0
        %961 = vmatpush1.msra.mxu0 %v933
        %962 = vmatprep.subr.mxu0 0.0
        %963 = vmatpush1.msra.mxu0 %v934
        %964 = vmatprep.subr.mxu0 0.0
        %965 = vmatpush1.msra.mxu0 %v935
        %966 = vmatprep.subr.mxu0 0.0
        %967 = vmatpush1.msra.mxu0 %v936
        %968 = vmatprep.subr.mxu0 0.0
        %969 = vmatpush1.msra.mxu0 %v937
        %970 = vmatprep.subr.mxu0 0.0
        %971 = vmatpush1.msra.mxu0 %v938
        %972 = vmatprep.subr.mxu0 0.0
        %973 = vmatpush1.msra.mxu0 %v939
        %974 = vmatprep.subr.mxu0 0.0
        %975 = vmatpush1.msra.mxu0 %v940
        %976 = vmatprep.subr.mxu0 0.0
        %977 = vmatpush1.msra.mxu0 %v941
        %978 = vmatprep.subr.mxu0 0.0
        %979 = vmatpush1.msra.mxu0 %v942
        %980 = vmatprep.subr.mxu0 0.0
        %981 = vmatpush1.msra.mxu0 %v943
        %982 = vmatprep.subr.mxu0 0.0
        %983 = vmatpush1.msra.mxu0 %v944
        %984 = vmatprep.subr.mxu0 0.0
        %985 = vmatpush1.msra.mxu0 %v945
        %986 = vmatprep.subr.mxu0 0.0
        %987 = vmatpush1.msra.mxu0 0.0
        %988 = vmatprep.subr.mxu0 0.0
        %989 = vmatpush1.msra.mxu0 0.0
        %990 = vmatprep.subr.mxu0 0.0
        %991 = vmatpush1.msra.mxu0 0.0
        %992 = vmatprep.subr.mxu0 0.0
        %993 = vmatpush1.msra.mxu0 0.0
        %994 = vmatprep.subr.mxu0 0.0
        %995 = vmatpush1.msra.mxu0 0.0
        %996 = vmatprep.subr.mxu0 0.0
        %997 = vmatpush1.msra.mxu0 0.0
        %998 = vmatprep.subr.mxu0 0.0
        %999 = vmatpush1.msra.mxu0 0.0
        %1000 = vmatprep.subr.mxu0 0.0
        %1001 = vmatpush1.msra.mxu0 0.0
        %1002 = vmatprep.subr.mxu0 0.0
        %1003 = vmatpush1.msra.mxu0 0.0
        %1004 = vmatprep.subr.mxu0 0.0
        %1005 = vmatpush1.msra.mxu0 0.0
        %1006 = vmatprep.subr.mxu0 0.0
        %1007 = vmatpush1.msra.mxu0 0.0
        %1008 = vmatprep.subr.mxu0 0.0
        %1009 = vmatpush1.msra.mxu0 0.0
        %1010 = vmatprep.subr.mxu0 0.0
        %1011 = vmatpush1.msra.mxu0 0.0
        %1012 = vmatprep.subr.mxu0 0.0
        %1013 = vmatpush1.msra.mxu0 0.0
        %1014 = vmatprep.subr.mxu0 0.0
        %1015 = vmatpush1.msra.mxu0 0.0
        %1016 = vmatprep.subr.mxu0 0.0
        %1017 = vmatpush1.msra.mxu0 0.0
        %1018 = vmatprep.mubr.f32.mxu0 0.0
        %1019 = vmatmul.mubr.f32.gmra.mrb[0].mxu0 %v426
        %v1020 = vpop.f32.mrb[0].mxu0
        %v1021 = vadd.f32 %v952, %v1020
        %v1022 = vpop.f32.mrb[0].mxu0
        %1023 = vmatprep.mubr.f32.mxu0 0.0
        %1024 = vmatmul.mubr.f32.gmra.mrb[0].mxu0 %v427
        %v1025 = vpop.f32.mrb[0].mxu0
        %v1026 = vadd.f32 %v952, %v1025
        %v1027 = vpop.f32.mrb[0].mxu0
        %1028 = vdwg.mxu0
        %s1029 = scalar_lea.vmem %s3, 128
        %v1030 = vld [vmem:[%s1029] sm:$0xff]
        %v1031 = vld [vmem:[%s1029 + $0x8] sm:$0xff]
        %v1032 = vld [vmem:[%s1029 + $0x10] sm:$0xff]
        %v1033 = vld [vmem:[%s1029 + $0x18] sm:$0xff]
        %v1034 = vld [vmem:[%s1029 + $0x20] sm:$0xff]
        %v1035 = vld [vmem:[%s1029 + $0x28] sm:$0xff]
        %v1036 = vld [vmem:[%s1029 + $0x30] sm:$0xff]
        %v1037 = vld [vmem:[%s1029 + $0x38] sm:$0xff]
        %v1038 = vld [vmem:[%s1029 + $0x40] sm:$0xff]
        %v1039 = vld [vmem:[%s1029 + $0x48] sm:$0xff]
        %v1040 = vld [vmem:[%s1029 + $0x50] sm:$0xff]
        %v1041 = vld [vmem:[%s1029 + $0x58] sm:$0xff]
        %v1042 = vld [vmem:[%s1029 + $0x60] sm:$0xff]
        %v1043 = vld [vmem:[%s1029 + $0x68] sm:$0xff]
        %v1044 = vld [vmem:[%s1029 + $0x70] sm:$0xff]
        %v1045 = vld [vmem:[%s1029 + $0x78] sm:$0xff]
        %s1046 = scalar_lea.vmem %s7, 1
        %v1047 = vld [vmem:[%s1046] sm:$0x1]
        %v1049 = vlaneseq
        %v1050 = vshrl.u32 %v1049, 7
        %v1051 = vsub.s32 0, %v1050
        %v1052 = vrot.slane %v1047, %v1051
        %1054 = vmatprep.subr.mxu0 0.0
        %1055 = vmatpush1.msra.mxu0 %v1030
        %1056 = vmatprep.subr.mxu0 0.0
        %1057 = vmatpush1.msra.mxu0 %v1031
        %1058 = vmatprep.subr.mxu0 0.0
        %1059 = vmatpush1.msra.mxu0 %v1032
        %1060 = vmatprep.subr.mxu0 0.0
        %1061 = vmatpush1.msra.mxu0 %v1033
        %1062 = vmatprep.subr.mxu0 0.0
        %1063 = vmatpush1.msra.mxu0 %v1034
        %1064 = vmatprep.subr.mxu0 0.0
        %1065 = vmatpush1.msra.mxu0 %v1035
        %1066 = vmatprep.subr.mxu0 0.0
        %1067 = vmatpush1.msra.mxu0 %v1036
        %1068 = vmatprep.subr.mxu0 0.0
        %1069 = vmatpush1.msra.mxu0 %v1037
        %1070 = vmatprep.subr.mxu0 0.0
        %1071 = vmatpush1.msra.mxu0 %v1038
        %1072 = vmatprep.subr.mxu0 0.0
        %1073 = vmatpush1.msra.mxu0 %v1039
        %1074 = vmatprep.subr.mxu0 0.0
        %1075 = vmatpush1.msra.mxu0 %v1040
        %1076 = vmatprep.subr.mxu0 0.0
        %1077 = vmatpush1.msra.mxu0 %v1041
        %1078 = vmatprep.subr.mxu0 0.0
        %1079 = vmatpush1.msra.mxu0 %v1042
        %1080 = vmatprep.subr.mxu0 0.0
        %1081 = vmatpush1.msra.mxu0 %v1043
        %1082 = vmatprep.subr.mxu0 0.0
        %1083 = vmatpush1.msra.mxu0 %v1044
        %1084 = vmatprep.subr.mxu0 0.0
        %1085 = vmatpush1.msra.mxu0 %v1045
        %1086 = vmatprep.subr.mxu0 0.0
        %1087 = vmatpush1.msra.mxu0 0.0
        %1088 = vmatprep.subr.mxu0 0.0
        %1089 = vmatpush1.msra.mxu0 0.0
        %1090 = vmatprep.subr.mxu0 0.0
        %1091 = vmatpush1.msra.mxu0 0.0
        %1092 = vmatprep.subr.mxu0 0.0
        %1093 = vmatpush1.msra.mxu0 0.0
        %1094 = vmatprep.subr.mxu0 0.0
        %1095 = vmatpush1.msra.mxu0 0.0
        %1096 = vmatprep.subr.mxu0 0.0
        %1097 = vmatpush1.msra.mxu0 0.0
        %1098 = vmatprep.subr.mxu0 0.0
        %1099 = vmatpush1.msra.mxu0 0.0
        %1100 = vmatprep.subr.mxu0 0.0
        %1101 = vmatpush1.msra.mxu0 0.0
        %1102 = vmatprep.subr.mxu0 0.0
        %1103 = vmatpush1.msra.mxu0 0.0
        %1104 = vmatprep.subr.mxu0 0.0
        %1105 = vmatpush1.msra.mxu0 0.0
        %1106 = vmatprep.subr.mxu0 0.0
        %1107 = vmatpush1.msra.mxu0 0.0
        %1108 = vmatprep.subr.mxu0 0.0
        %1109 = vmatpush1.msra.mxu0 0.0
        %1110 = vmatprep.subr.mxu0 0.0
        %1111 = vmatpush1.msra.mxu0 0.0
        %1112 = vmatprep.subr.mxu0 0.0
        %1113 = vmatpush1.msra.mxu0 0.0
        %1114 = vmatprep.subr.mxu0 0.0
        %1115 = vmatpush1.msra.mxu0 0.0
        %1116 = vmatprep.subr.mxu0 0.0
        %1117 = vmatpush1.msra.mxu0 0.0
        %1118 = vmatprep.mubr.f32.mxu0 0.0
        %1119 = vmatmul.mubr.f32.gmra.mrb[0].mxu0 %v426
        %v1120 = vpop.f32.mrb[0].mxu0
        %v1121 = vadd.f32 %v1052, %v1120
        %v1122 = vpop.f32.mrb[0].mxu0
        %1123 = vmatprep.mubr.f32.mxu0 0.0
        %1124 = vmatmul.mubr.f32.gmra.mrb[0].mxu0 %v427
        %v1125 = vpop.f32.mrb[0].mxu0
        %v1126 = vadd.f32 %v1052, %v1125
        %v1127 = vpop.f32.mrb[0].mxu0
        %1128 = vdwg.mxu0
        %s1129 = scalar_lea.vmem %s4, 128
        %v1130 = vld [vmem:[%s1129] sm:$0xff]
        %v1131 = vld [vmem:[%s1129 + $0x8] sm:$0xff]
        %v1132 = vld [vmem:[%s1129 + $0x10] sm:$0xff]
        %v1133 = vld [vmem:[%s1129 + $0x18] sm:$0xff]
        %v1134 = vld [vmem:[%s1129 + $0x20] sm:$0xff]
        %v1135 = vld [vmem:[%s1129 + $0x28] sm:$0xff]
        %v1136 = vld [vmem:[%s1129 + $0x30] sm:$0xff]
        %v1137 = vld [vmem:[%s1129 + $0x38] sm:$0xff]
        %v1138 = vld [vmem:[%s1129 + $0x40] sm:$0xff]
        %v1139 = vld [vmem:[%s1129 + $0x48] sm:$0xff]
        %v1140 = vld [vmem:[%s1129 + $0x50] sm:$0xff]
        %v1141 = vld [vmem:[%s1129 + $0x58] sm:$0xff]
        %v1142 = vld [vmem:[%s1129 + $0x60] sm:$0xff]
        %v1143 = vld [vmem:[%s1129 + $0x68] sm:$0xff]
        %v1144 = vld [vmem:[%s1129 + $0x70] sm:$0xff]
        %v1145 = vld [vmem:[%s1129 + $0x78] sm:$0xff]
        %s1146 = scalar_lea.vmem %s8, 1
        %v1147 = vld [vmem:[%s1146] sm:$0x1]
        %v1149 = vlaneseq
        %v1150 = vshrl.u32 %v1149, 7
        %v1151 = vsub.s32 0, %v1150
        %v1152 = vrot.slane %v1147, %v1151
        %1154 = vmatprep.subr.mxu0 0.0
        %1155 = vmatpush1.msra.mxu0 %v1130
        %1156 = vmatprep.subr.mxu0 0.0
        %1157 = vmatpush1.msra.mxu0 %v1131
        %1158 = vmatprep.subr.mxu0 0.0
        %1159 = vmatpush1.msra.mxu0 %v1132
        %1160 = vmatprep.subr.mxu0 0.0
        %1161 = vmatpush1.msra.mxu0 %v1133
        %1162 = vmatprep.subr.mxu0 0.0
        %1163 = vmatpush1.msra.mxu0 %v1134
        %1164 = vmatprep.subr.mxu0 0.0
        %1165 = vmatpush1.msra.mxu0 %v1135
        %1166 = vmatprep.subr.mxu0 0.0
        %1167 = vmatpush1.msra.mxu0 %v1136
        %1168 = vmatprep.subr.mxu0 0.0
        %1169 = vmatpush1.msra.mxu0 %v1137
        %1170 = vmatprep.subr.mxu0 0.0
        %1171 = vmatpush1.msra.mxu0 %v1138
        %1172 = vmatprep.subr.mxu0 0.0
        %1173 = vmatpush1.msra.mxu0 %v1139
        %1174 = vmatprep.subr.mxu0 0.0
        %1175 = vmatpush1.msra.mxu0 %v1140
        %1176 = vmatprep.subr.mxu0 0.0
        %1177 = vmatpush1.msra.mxu0 %v1141
        %1178 = vmatprep.subr.mxu0 0.0
        %1179 = vmatpush1.msra.mxu0 %v1142
        %1180 = vmatprep.subr.mxu0 0.0
        %1181 = vmatpush1.msra.mxu0 %v1143
        %1182 = vmatprep.subr.mxu0 0.0
        %1183 = vmatpush1.msra.mxu0 %v1144
        %1184 = vmatprep.subr.mxu0 0.0
        %1185 = vmatpush1.msra.mxu0 %v1145
        %1186 = vmatprep.subr.mxu0 0.0
        %1187 = vmatpush1.msra.mxu0 0.0
        %1188 = vmatprep.subr.mxu0 0.0
        %1189 = vmatpush1.msra.mxu0 0.0
        %1190 = vmatprep.subr.mxu0 0.0
        %1191 = vmatpush1.msra.mxu0 0.0
        %1192 = vmatprep.subr.mxu0 0.0
        %1193 = vmatpush1.msra.mxu0 0.0
        %1194 = vmatprep.subr.mxu0 0.0
        %1195 = vmatpush1.msra.mxu0 0.0
        %1196 = vmatprep.subr.mxu0 0.0
        %1197 = vmatpush1.msra.mxu0 0.0
        %1198 = vmatprep.subr.mxu0 0.0
        %1199 = vmatpush1.msra.mxu0 0.0
        %1200 = vmatprep.subr.mxu0 0.0
        %1201 = vmatpush1.msra.mxu0 0.0
        %1202 = vmatprep.subr.mxu0 0.0
        %1203 = vmatpush1.msra.mxu0 0.0
        %1204 = vmatprep.subr.mxu0 0.0
        %1205 = vmatpush1.msra.mxu0 0.0
        %1206 = vmatprep.subr.mxu0 0.0
        %1207 = vmatpush1.msra.mxu0 0.0
        %1208 = vmatprep.subr.mxu0 0.0
        %1209 = vmatpush1.msra.mxu0 0.0
        %1210 = vmatprep.subr.mxu0 0.0
        %1211 = vmatpush1.msra.mxu0 0.0
        %1212 = vmatprep.subr.mxu0 0.0
        %1213 = vmatpush1.msra.mxu0 0.0
        %1214 = vmatprep.subr.mxu0 0.0
        %1215 = vmatpush1.msra.mxu0 0.0
        %1216 = vmatprep.subr.mxu0 0.0
        %1217 = vmatpush1.msra.mxu0 0.0
        %1218 = vmatprep.mubr.f32.mxu0 0.0
        %1219 = vmatmul.mubr.f32.gmra.mrb[0].mxu0 %v426
        %v1220 = vpop.f32.mrb[0].mxu0
        %v1221 = vadd.f32 %v1152, %v1220
        %v1222 = vpop.f32.mrb[0].mxu0
        %1223 = vmatprep.mubr.f32.mxu0 0.0
        %1224 = vmatmul.mubr.f32.gmra.mrb[0].mxu0 %v427
        %v1225 = vpop.f32.mrb[0].mxu0
        %v1226 = vadd.f32 %v1152, %v1225
        %v1227 = vpop.f32.mrb[0].mxu0
        %1228 = vdwg.mxu0
        %v1230 = vsel %vm723, %v1021, 0
        %v1233 = vsel %vm723, %v1026, 0
        %v1236 = vsel %vm723, %v1121, 0
        %v1239 = vsel %vm723, %v1126, 0
        %1241 = vmatprep.subr.mxu0 0.0
        %1242 = vmatpush1.xpose.msra.mxu0 %v1236
        %1243 = vmatprep.subr.mxu0 0.0
        %1244 = vmatpush1.xpose.msra.mxu0 %v1239
        %1245 = vmatprep.subr.mxu0 0.0
        %1246 = vmatpush1.xpose.msra.mxu0 0.0
        %1247 = vmatprep.subr.mxu0 0.0
        %1248 = vmatpush1.xpose.msra.mxu0 0.0
        %1249 = vmatprep.subr.mxu0 0.0
        %1250 = vmatpush1.xpose.msra.mxu0 0.0
        %1251 = vmatprep.subr.mxu0 0.0
        %1252 = vmatpush1.xpose.msra.mxu0 0.0
        %1253 = vmatprep.subr.mxu0 0.0
        %1254 = vmatpush1.xpose.msra.mxu0 0.0
        %1255 = vmatprep.subr.mxu0 0.0
        %1256 = vmatpush1.xpose.msra.mxu0 0.0
        %1257 = vmatprep.subr.mxu0 0.0
        %1258 = vmatpush1.xpose.msra.mxu0 0.0
        %1259 = vmatprep.subr.mxu0 0.0
        %1260 = vmatpush1.xpose.msra.mxu0 0.0
        %1261 = vmatprep.subr.mxu0 0.0
        %1262 = vmatpush1.xpose.msra.mxu0 0.0
        %1263 = vmatprep.subr.mxu0 0.0
        %1264 = vmatpush1.xpose.msra.mxu0 0.0
        %1265 = vmatprep.subr.mxu0 0.0
        %1266 = vmatpush1.xpose.msra.mxu0 0.0
        %1267 = vmatprep.subr.mxu0 0.0
        %1268 = vmatpush1.xpose.msra.mxu0 0.0
        %1269 = vmatprep.subr.mxu0 0.0
        %1270 = vmatpush1.xpose.msra.mxu0 0.0
        %1271 = vmatprep.subr.mxu0 0.0
        %1272 = vmatpush1.xpose.msra.mxu0 0.0
        %1273 = vmatprep.subr.mxu0 0.0
        %1274 = vmatpush1.xpose.msra.mxu0 0.0
        %1275 = vmatprep.subr.mxu0 0.0
        %1276 = vmatpush1.xpose.msra.mxu0 0.0
        %1277 = vmatprep.subr.mxu0 0.0
        %1278 = vmatpush1.xpose.msra.mxu0 0.0
        %1279 = vmatprep.subr.mxu0 0.0
        %1280 = vmatpush1.xpose.msra.mxu0 0.0
        %1281 = vmatprep.subr.mxu0 0.0
        %1282 = vmatpush1.xpose.msra.mxu0 0.0
        %1283 = vmatprep.subr.mxu0 0.0
        %1284 = vmatpush1.xpose.msra.mxu0 0.0
        %1285 = vmatprep.subr.mxu0 0.0
        %1286 = vmatpush1.xpose.msra.mxu0 0.0
        %1287 = vmatprep.subr.mxu0 0.0
        %1288 = vmatpush1.xpose.msra.mxu0 0.0
        %1289 = vmatprep.subr.mxu0 0.0
        %1290 = vmatpush1.xpose.msra.mxu0 0.0
        %1291 = vmatprep.subr.mxu0 0.0
        %1292 = vmatpush1.xpose.msra.mxu0 0.0
        %1293 = vmatprep.subr.mxu0 0.0
        %1294 = vmatpush1.xpose.msra.mxu0 0.0
        %1295 = vmatprep.subr.mxu0 0.0
        %1296 = vmatpush1.xpose.msra.mxu0 0.0
        %1297 = vmatprep.subr.mxu0 0.0
        %1298 = vmatpush1.xpose.msra.mxu0 0.0
        %1299 = vmatprep.subr.mxu0 0.0
        %1300 = vmatpush1.xpose.msra.mxu0 0.0
        %1301 = vmatprep.subr.mxu0 0.0
        %1302 = vmatpush1.xpose.msra.mxu0 0.0
        %1303 = vmatprep.subr.mxu0 0.0
        %1304 = vmatpush1.xpose.msra.mxu0 0.0
        %1305 = vmatprep.mubr.f32.mxu0 0.0
        %1306 = vmatmul.mubr.f32.gmra.mrb[0].mxu0 %v1230
        %v1307 = vpop.f32.mrb[0].mxu0
        %v1308 = vadd.f32 0.0, %v1307
        %v1309 = vpop.f32.mrb[0].mxu0
        %1310 = vmatprep.mubr.f32.mxu0 0.0
        %1311 = vmatmul.mubr.f32.gmra.mrb[0].mxu0 %v1233
        %v1312 = vpop.f32.mrb[0].mxu0
        %v1313 = vadd.f32 0.0, %v1312
        %v1314 = vpop.f32.mrb[0].mxu0
        %1315 = vdwg.mxu0
        %v1316 = vmul.f32 %v1308, 0.17677669
        %v1317 = vmul.f32 %v1313, 0.17677669
        %v1318 = vadd.f32 %v1316, %v817
        %v1319 = vadd.f32 %v1317, %v817
        %v1320 = vsel %vm821, %v1318, -inf
        %1321 = vmax.xlane.f32.xlu0 %v1320
        %v1322 = vpop.xlane.xlu0 %1321
        %v1323 = vsel %vm821, %v1319, -inf
        %1324 = vmax.xlane.f32.xlu0 %v1323
        %v1325 = vpop.xlane.xlu0 %1324
        %v1326 = vsub.f32 %v1318, %v1322
        %v1327 = vsub.f32 %v1319, %v1325
        %v1328 = vmul.f32 %v1326, 1.442695
        %v1329 = vpow.pop %v1328
        %v1330 = vmul.f32 %v1327, 1.442695
        %v1331 = vpow.pop %v1330
        %v1332 = vsel %vm821, %v1329, 0.0
        %1333 = vadd.xlane.f32.xlu0 %v1332
        %v1334 = vpop.xlane.xlu0 %1333
        %v1335 = vsel %vm821, %v1331, 0.0
        %1336 = vadd.xlane.f32.xlu0 %v1335
        %v1337 = vpop.xlane.xlu0 %1336
        %v1339 = vsel %vm821, %v1329, 0
        %v1342 = vsel %vm821, %v1331, 0
        %1344 = vmatprep.subr.mxu0 0.0
        %1345 = vmatpush1.msra.mxu0 %v1221
        %1346 = vmatprep.subr.mxu0 0.0
        %1347 = vmatpush1.msra.mxu0 %v1226
        %1348 = vmatprep.subr.mxu0 0.0
        %1349 = vmatpush1.msra.mxu0 0.0
        %1350 = vmatprep.subr.mxu0 0.0
        %1351 = vmatpush1.msra.mxu0 0.0
        %1352 = vmatprep.subr.mxu0 0.0
        %1353 = vmatpush1.msra.mxu0 0.0
        %1354 = vmatprep.subr.mxu0 0.0
        %1355 = vmatpush1.msra.mxu0 0.0
        %1356 = vmatprep.subr.mxu0 0.0
        %1357 = vmatpush1.msra.mxu0 0.0
        %1358 = vmatprep.subr.mxu0 0.0
        %1359 = vmatpush1.msra.mxu0 0.0
        %1360 = vmatprep.subr.mxu0 0.0
        %1361 = vmatpush1.msra.mxu0 0.0
        %1362 = vmatprep.subr.mxu0 0.0
        %1363 = vmatpush1.msra.mxu0 0.0
        %1364 = vmatprep.subr.mxu0 0.0
        %1365 = vmatpush1.msra.mxu0 0.0
        %1366 = vmatprep.subr.mxu0 0.0
        %1367 = vmatpush1.msra.mxu0 0.0
        %1368 = vmatprep.subr.mxu0 0.0
        %1369 = vmatpush1.msra.mxu0 0.0
        %1370 = vmatprep.subr.mxu0 0.0
        %1371 = vmatpush1.msra.mxu0 0.0
        %1372 = vmatprep.subr.mxu0 0.0
        %1373 = vmatpush1.msra.mxu0 0.0
        %1374 = vmatprep.subr.mxu0 0.0
        %1375 = vmatpush1.msra.mxu0 0.0
        %1376 = vmatprep.subr.mxu0 0.0
        %1377 = vmatpush1.msra.mxu0 0.0
        %1378 = vmatprep.subr.mxu0 0.0
        %1379 = vmatpush1.msra.mxu0 0.0
        %1380 = vmatprep.subr.mxu0 0.0
        %1381 = vmatpush1.msra.mxu0 0.0
        %1382 = vmatprep.subr.mxu0 0.0
        %1383 = vmatpush1.msra.mxu0 0.0
        %1384 = vmatprep.subr.mxu0 0.0
        %1385 = vmatpush1.msra.mxu0 0.0
        %1386 = vmatprep.subr.mxu0 0.0
        %1387 = vmatpush1.msra.mxu0 0.0
        %1388 = vmatprep.subr.mxu0 0.0
        %1389 = vmatpush1.msra.mxu0 0.0
        %1390 = vmatprep.subr.mxu0 0.0
        %1391 = vmatpush1.msra.mxu0 0.0
        %1392 = vmatprep.subr.mxu0 0.0
        %1393 = vmatpush1.msra.mxu0 0.0
        %1394 = vmatprep.subr.mxu0 0.0
        %1395 = vmatpush1.msra.mxu0 0.0
        %1396 = vmatprep.subr.mxu0 0.0
        %1397 = vmatpush1.msra.mxu0 0.0
        %1398 = vmatprep.subr.mxu0 0.0
        %1399 = vmatpush1.msra.mxu0 0.0
        %1400 = vmatprep.subr.mxu0 0.0
        %1401 = vmatpush1.msra.mxu0 0.0
        %1402 = vmatprep.subr.mxu0 0.0
        %1403 = vmatpush1.msra.mxu0 0.0
        %1404 = vmatprep.subr.mxu0 0.0
        %1405 = vmatpush1.msra.mxu0 0.0
        %1406 = vmatprep.subr.mxu0 0.0
        %1407 = vmatpush1.msra.mxu0 0.0
        %1408 = vmatprep.mubr.f32.mxu0 0.0
        %1409 = vmatmul.mubr.f32.gmra.mrb[0].mxu0 %v1339
        %v1410 = vpop.f32.mrb[0].mxu0
        %v1411 = vadd.f32 0.0, %v1410
        %v1412 = vpop.f32.mrb[0].mxu0
        %1413 = vmatprep.mubr.f32.mxu0 0.0
        %1414 = vmatmul.mubr.f32.gmra.mrb[0].mxu0 %v1342
        %v1415 = vpop.f32.mrb[0].mxu0
        %v1416 = vadd.f32 0.0, %v1415
        %v1417 = vpop.f32.mrb[0].mxu0
        %1418 = vdwg.mxu0
        %v1419 = vrcp.pop %v1334
        %v1420 = vmul.f32 %v1411, %v1419
        %v1421 = vrcp.pop %v1337
        %v1422 = vmul.f32 %v1416, %v1421
        %s1423 = scalar_lea.vmem %s5, 32
        %v1424 = vld [vmem:[%s1423] sm:$0xff]
        %v1425 = vld [vmem:[%s1423 + $0x8] sm:$0xff]
        %v1426 = vld [vmem:[%s1423 + $0x10] sm:$0xff]
        %v1427 = vld [vmem:[%s1423 + $0x18] sm:$0xff]
        %v1429 = vsel %vm723, %v1420, 0
        %v1432 = vsel %vm723, %v1422, 0
        %1434 = vmatprep.subr.mxu0 0.0
        %1435 = vmatpush1.msra.mxu0 %v1424
        %1436 = vmatprep.subr.mxu0 0.0
        %1437 = vmatpush1.msra.mxu0 %v1425
        %1438 = vmatprep.subr.mxu0 0.0
        %1439 = vmatpush1.msra.mxu0 %v1426
        %1440 = vmatprep.subr.mxu0 0.0
        %1441 = vmatpush1.msra.mxu0 %v1427
        %1442 = vmatprep.subr.mxu0 0.0
        %1443 = vmatpush1.msra.mxu0 0.0
        %1444 = vmatprep.subr.mxu0 0.0
        %1445 = vmatpush1.msra.mxu0 0.0
        %1446 = vmatprep.subr.mxu0 0.0
        %1447 = vmatpush1.msra.mxu0 0.0
        %1448 = vmatprep.subr.mxu0 0.0
        %1449 = vmatpush1.msra.mxu0 0.0
        %1450 = vmatprep.subr.mxu0 0.0
        %1451 = vmatpush1.msra.mxu0 0.0
        %1452 = vmatprep.subr.mxu0 0.0
        %1453 = vmatpush1.msra.mxu0 0.0
        %1454 = vmatprep.subr.mxu0 0.0
        %1455 = vmatpush1.msra.mxu0 0.0
        %1456 = vmatprep.subr.mxu0 0.0
        %1457 = vmatpush1.msra.mxu0 0.0
        %1458 = vmatprep.subr.mxu0 0.0
        %1459 = vmatpush1.msra.mxu0 0.0
        %1460 = vmatprep.subr.mxu0 0.0
        %1461 = vmatpush1.msra.mxu0 0.0
        %1462 = vmatprep.subr.mxu0 0.0
        %1463 = vmatpush1.msra.mxu0 0.0
        %1464 = vmatprep.subr.mxu0 0.0
        %1465 = vmatpush1.msra.mxu0 0.0
        %1466 = vmatprep.subr.mxu0 0.0
        %1467 = vmatpush1.msra.mxu0 0.0
        %1468 = vmatprep.subr.mxu0 0.0
        %1469 = vmatpush1.msra.mxu0 0.0
        %1470 = vmatprep.subr.mxu0 0.0
        %1471 = vmatpush1.msra.mxu0 0.0
        %1472 = vmatprep.subr.mxu0 0.0
        %1473 = vmatpush1.msra.mxu0 0.0
        %1474 = vmatprep.subr.mxu0 0.0
        %1475 = vmatpush1.msra.mxu0 0.0
        %1476 = vmatprep.subr.mxu0 0.0
        %1477 = vmatpush1.msra.mxu0 0.0
        %1478 = vmatprep.subr.mxu0 0.0
        %1479 = vmatpush1.msra.mxu0 0.0
        %1480 = vmatprep.subr.mxu0 0.0
        %1481 = vmatpush1.msra.mxu0 0.0
        %1482 = vmatprep.subr.mxu0 0.0
        %1483 = vmatpush1.msra.mxu0 0.0
        %1484 = vmatprep.subr.mxu0 0.0
        %1485 = vmatpush1.msra.mxu0 0.0
        %1486 = vmatprep.subr.mxu0 0.0
        %1487 = vmatpush1.msra.mxu0 0.0
        %1488 = vmatprep.subr.mxu0 0.0
        %1489 = vmatpush1.msra.mxu0 0.0
        %1490 = vmatprep.subr.mxu0 0.0
        %1491 = vmatpush1.msra.mxu0 0.0
        %1492 = vmatprep.subr.mxu0 0.0
        %1493 = vmatpush1.msra.mxu0 0.0
        %1494 = vmatprep.subr.mxu0 0.0
        %1495 = vmatpush1.msra.mxu0 0.0
        %1496 = vmatprep.subr.mxu0 0.0
        %1497 = vmatpush1.msra.mxu0 0.0
        %1498 = vmatprep.mubr.f32.mxu0 0.0
        %1499 = vmatmul.mubr.f32.gmra.mrb[0].mxu0 %v1429
        %v1500 = vpop.f32.mrb[0].mxu0
        %v1501 = vadd.f32 0.0, %v1500
        %v1502 = vpop.f32.mrb[0].mxu0
        %1503 = vmatprep.mubr.f32.mxu0 0.0
        %1504 = vmatmul.mubr.f32.gmra.mrb[0].mxu0 %v1432
        %v1505 = vpop.f32.mrb[0].mxu0
        %v1506 = vadd.f32 0.0, %v1505
        %v1507 = vpop.f32.mrb[0].mxu0
        %1508 = vdwg.mxu0
        %v1510 = vsel %vm723, %v922, 0
        %v1513 = vsel %vm723, %v924, 0
        %1515 = vmatprep.subr.mxu0 0.0
        %1516 = vmatpush1.msra.mxu0 %v925
        %1517 = vmatprep.subr.mxu0 0.0
        %1518 = vmatpush1.msra.mxu0 %v926
        %1519 = vmatprep.subr.mxu0 0.0
        %1520 = vmatpush1.msra.mxu0 %v927
        %1521 = vmatprep.subr.mxu0 0.0
        %1522 = vmatpush1.msra.mxu0 %v928
        %1523 = vmatprep.subr.mxu0 0.0
        %1524 = vmatpush1.msra.mxu0 0.0
        %1525 = vmatprep.subr.mxu0 0.0
        %1526 = vmatpush1.msra.mxu0 0.0
        %1527 = vmatprep.subr.mxu0 0.0
        %1528 = vmatpush1.msra.mxu0 0.0
        %1529 = vmatprep.subr.mxu0 0.0
        %1530 = vmatpush1.msra.mxu0 0.0
        %1531 = vmatprep.subr.mxu0 0.0
        %1532 = vmatpush1.msra.mxu0 0.0
        %1533 = vmatprep.subr.mxu0 0.0
        %1534 = vmatpush1.msra.mxu0 0.0
        %1535 = vmatprep.subr.mxu0 0.0
        %1536 = vmatpush1.msra.mxu0 0.0
        %1537 = vmatprep.subr.mxu0 0.0
        %1538 = vmatpush1.msra.mxu0 0.0
        %1539 = vmatprep.subr.mxu0 0.0
        %1540 = vmatpush1.msra.mxu0 0.0
        %1541 = vmatprep.subr.mxu0 0.0
        %1542 = vmatpush1.msra.mxu0 0.0
        %1543 = vmatprep.subr.mxu0 0.0
        %1544 = vmatpush1.msra.mxu0 0.0
        %1545 = vmatprep.subr.mxu0 0.0
        %1546 = vmatpush1.msra.mxu0 0.0
        %1547 = vmatprep.subr.mxu0 0.0
        %1548 = vmatpush1.msra.mxu0 0.0
        %1549 = vmatprep.subr.mxu0 0.0
        %1550 = vmatpush1.msra.mxu0 0.0
        %1551 = vmatprep.subr.mxu0 0.0
        %1552 = vmatpush1.msra.mxu0 0.0
        %1553 = vmatprep.subr.mxu0 0.0
        %1554 = vmatpush1.msra.mxu0 0.0
        %1555 = vmatprep.subr.mxu0 0.0
        %1556 = vmatpush1.msra.mxu0 0.0
        %1557 = vmatprep.subr.mxu0 0.0
        %1558 = vmatpush1.msra.mxu0 0.0
        %1559 = vmatprep.subr.mxu0 0.0
        %1560 = vmatpush1.msra.mxu0 0.0
        %1561 = vmatprep.subr.mxu0 0.0
        %1562 = vmatpush1.msra.mxu0 0.0
        %1563 = vmatprep.subr.mxu0 0.0
        %1564 = vmatpush1.msra.mxu0 0.0
        %1565 = vmatprep.subr.mxu0 0.0
        %1566 = vmatpush1.msra.mxu0 0.0
        %1567 = vmatprep.subr.mxu0 0.0
        %1568 = vmatpush1.msra.mxu0 0.0
        %1569 = vmatprep.subr.mxu0 0.0
        %1570 = vmatpush1.msra.mxu0 0.0
        %1571 = vmatprep.subr.mxu0 0.0
        %1572 = vmatpush1.msra.mxu0 0.0
        %1573 = vmatprep.subr.mxu0 0.0
        %1574 = vmatpush1.msra.mxu0 0.0
        %1575 = vmatprep.subr.mxu0 0.0
        %1576 = vmatpush1.msra.mxu0 0.0
        %1577 = vmatprep.subr.mxu0 0.0
        %1578 = vmatpush1.msra.mxu0 0.0
        %1579 = vmatprep.mubr.f32.mxu0 0.0
        %1580 = vmatmul.mubr.f32.gmra.mrb[0].mxu0 %v1510
        %v1581 = vpop.f32.mrb[0].mxu0
        %v1582 = vadd.f32 %v1501, %v1581
        %v1583 = vpop.f32.mrb[0].mxu0
        %1584 = vmatprep.mubr.f32.mxu0 0.0
        %1585 = vmatmul.mubr.f32.gmra.mrb[0].mxu0 %v1513
        %v1586 = vpop.f32.mrb[0].mxu0
        %v1587 = vadd.f32 %v1506, %v1586
        %v1588 = vpop.f32.mrb[0].mxu0
        %1589 = vdwg.mxu0
        %s1590 = scalar_lea.vmem %s2, 256
        %v1591 = vld [vmem:[%s1590] sm:$0xff]
        %v1592 = vld [vmem:[%s1590 + $0x8] sm:$0xff]
        %v1593 = vld [vmem:[%s1590 + $0x10] sm:$0xff]
        %v1594 = vld [vmem:[%s1590 + $0x18] sm:$0xff]
        %v1595 = vld [vmem:[%s1590 + $0x20] sm:$0xff]
        %v1596 = vld [vmem:[%s1590 + $0x28] sm:$0xff]
        %v1597 = vld [vmem:[%s1590 + $0x30] sm:$0xff]
        %v1598 = vld [vmem:[%s1590 + $0x38] sm:$0xff]
        %v1599 = vld [vmem:[%s1590 + $0x40] sm:$0xff]
        %v1600 = vld [vmem:[%s1590 + $0x48] sm:$0xff]
        %v1601 = vld [vmem:[%s1590 + $0x50] sm:$0xff]
        %v1602 = vld [vmem:[%s1590 + $0x58] sm:$0xff]
        %v1603 = vld [vmem:[%s1590 + $0x60] sm:$0xff]
        %v1604 = vld [vmem:[%s1590 + $0x68] sm:$0xff]
        %v1605 = vld [vmem:[%s1590 + $0x70] sm:$0xff]
        %v1606 = vld [vmem:[%s1590 + $0x78] sm:$0xff]
        %s1607 = scalar_lea.vmem %s6, 2
        %v1608 = vld [vmem:[%s1607] sm:$0x1]
        %v1610 = vlaneseq
        %v1611 = vshrl.u32 %v1610, 7
        %v1612 = vsub.s32 0, %v1611
        %v1613 = vrot.slane %v1608, %v1612
        %1615 = vmatprep.subr.mxu0 0.0
        %1616 = vmatpush1.msra.mxu0 %v1591
        %1617 = vmatprep.subr.mxu0 0.0
        %1618 = vmatpush1.msra.mxu0 %v1592
        %1619 = vmatprep.subr.mxu0 0.0
        %1620 = vmatpush1.msra.mxu0 %v1593
        %1621 = vmatprep.subr.mxu0 0.0
        %1622 = vmatpush1.msra.mxu0 %v1594
        %1623 = vmatprep.subr.mxu0 0.0
        %1624 = vmatpush1.msra.mxu0 %v1595
        %1625 = vmatprep.subr.mxu0 0.0
        %1626 = vmatpush1.msra.mxu0 %v1596
        %1627 = vmatprep.subr.mxu0 0.0
        %1628 = vmatpush1.msra.mxu0 %v1597
        %1629 = vmatprep.subr.mxu0 0.0
        %1630 = vmatpush1.msra.mxu0 %v1598
        %1631 = vmatprep.subr.mxu0 0.0
        %1632 = vmatpush1.msra.mxu0 %v1599
        %1633 = vmatprep.subr.mxu0 0.0
        %1634 = vmatpush1.msra.mxu0 %v1600
        %1635 = vmatprep.subr.mxu0 0.0
        %1636 = vmatpush1.msra.mxu0 %v1601
        %1637 = vmatprep.subr.mxu0 0.0
        %1638 = vmatpush1.msra.mxu0 %v1602
        %1639 = vmatprep.subr.mxu0 0.0
        %1640 = vmatpush1.msra.mxu0 %v1603
        %1641 = vmatprep.subr.mxu0 0.0
        %1642 = vmatpush1.msra.mxu0 %v1604
        %1643 = vmatprep.subr.mxu0 0.0
        %1644 = vmatpush1.msra.mxu0 %v1605
        %1645 = vmatprep.subr.mxu0 0.0
        %1646 = vmatpush1.msra.mxu0 %v1606
        %1647 = vmatprep.subr.mxu0 0.0
        %1648 = vmatpush1.msra.mxu0 0.0
        %1649 = vmatprep.subr.mxu0 0.0
        %1650 = vmatpush1.msra.mxu0 0.0
        %1651 = vmatprep.subr.mxu0 0.0
        %1652 = vmatpush1.msra.mxu0 0.0
        %1653 = vmatprep.subr.mxu0 0.0
        %1654 = vmatpush1.msra.mxu0 0.0
        %1655 = vmatprep.subr.mxu0 0.0
        %1656 = vmatpush1.msra.mxu0 0.0
        %1657 = vmatprep.subr.mxu0 0.0
        %1658 = vmatpush1.msra.mxu0 0.0
        %1659 = vmatprep.subr.mxu0 0.0
        %1660 = vmatpush1.msra.mxu0 0.0
        %1661 = vmatprep.subr.mxu0 0.0
        %1662 = vmatpush1.msra.mxu0 0.0
        %1663 = vmatprep.subr.mxu0 0.0
        %1664 = vmatpush1.msra.mxu0 0.0
        %1665 = vmatprep.subr.mxu0 0.0
        %1666 = vmatpush1.msra.mxu0 0.0
        %1667 = vmatprep.subr.mxu0 0.0
        %1668 = vmatpush1.msra.mxu0 0.0
        %1669 = vmatprep.subr.mxu0 0.0
        %1670 = vmatpush1.msra.mxu0 0.0
        %1671 = vmatprep.subr.mxu0 0.0
        %1672 = vmatpush1.msra.mxu0 0.0
        %1673 = vmatprep.subr.mxu0 0.0
        %1674 = vmatpush1.msra.mxu0 0.0
        %1675 = vmatprep.subr.mxu0 0.0
        %1676 = vmatpush1.msra.mxu0 0.0
        %1677 = vmatprep.subr.mxu0 0.0
        %1678 = vmatpush1.msra.mxu0 0.0
        %1679 = vmatprep.mubr.f32.mxu0 0.0
        %1680 = vmatmul.mubr.f32.gmra.mrb[0].mxu0 %v426
        %v1681 = vpop.f32.mrb[0].mxu0
        %v1682 = vadd.f32 %v1613, %v1681
        %v1683 = vpop.f32.mrb[0].mxu0
        %1684 = vmatprep.mubr.f32.mxu0 0.0
        %1685 = vmatmul.mubr.f32.gmra.mrb[0].mxu0 %v427
        %v1686 = vpop.f32.mrb[0].mxu0
        %v1687 = vadd.f32 %v1613, %v1686
        %v1688 = vpop.f32.mrb[0].mxu0
        %1689 = vdwg.mxu0
        %s1690 = scalar_lea.vmem %s3, 256
        %v1691 = vld [vmem:[%s1690] sm:$0xff]
        %v1692 = vld [vmem:[%s1690 + $0x8] sm:$0xff]
        %v1693 = vld [vmem:[%s1690 + $0x10] sm:$0xff]
        %v1694 = vld [vmem:[%s1690 + $0x18] sm:$0xff]
        %v1695 = vld [vmem:[%s1690 + $0x20] sm:$0xff]
        %v1696 = vld [vmem:[%s1690 + $0x28] sm:$0xff]
        %v1697 = vld [vmem:[%s1690 + $0x30] sm:$0xff]
        %v1698 = vld [vmem:[%s1690 + $0x38] sm:$0xff]
        %v1699 = vld [vmem:[%s1690 + $0x40] sm:$0xff]
        %v1700 = vld [vmem:[%s1690 + $0x48] sm:$0xff]
        %v1701 = vld [vmem:[%s1690 + $0x50] sm:$0xff]
        %v1702 = vld [vmem:[%s1690 + $0x58] sm:$0xff]
        %v1703 = vld [vmem:[%s1690 + $0x60] sm:$0xff]
        %v1704 = vld [vmem:[%s1690 + $0x68] sm:$0xff]
        %v1705 = vld [vmem:[%s1690 + $0x70] sm:$0xff]
        %v1706 = vld [vmem:[%s1690 + $0x78] sm:$0xff]
        %s1707 = scalar_lea.vmem %s7, 2
        %v1708 = vld [vmem:[%s1707] sm:$0x1]
        %v1710 = vlaneseq
        %v1711 = vshrl.u32 %v1710, 7
        %v1712 = vsub.s32 0, %v1711
        %v1713 = vrot.slane %v1708, %v1712
        %1715 = vmatprep.subr.mxu0 0.0
        %1716 = vmatpush1.msra.mxu0 %v1691
        %1717 = vmatprep.subr.mxu0 0.0
        %1718 = vmatpush1.msra.mxu0 %v1692
        %1719 = vmatprep.subr.mxu0 0.0
        %1720 = vmatpush1.msra.mxu0 %v1693
        %1721 = vmatprep.subr.mxu0 0.0
        %1722 = vmatpush1.msra.mxu0 %v1694
        %1723 = vmatprep.subr.mxu0 0.0
        %1724 = vmatpush1.msra.mxu0 %v1695
        %1725 = vmatprep.subr.mxu0 0.0
        %1726 = vmatpush1.msra.mxu0 %v1696
        %1727 = vmatprep.subr.mxu0 0.0
        %1728 = vmatpush1.msra.mxu0 %v1697
        %1729 = vmatprep.subr.mxu0 0.0
        %1730 = vmatpush1.msra.mxu0 %v1698
        %1731 = vmatprep.subr.mxu0 0.0
        %1732 = vmatpush1.msra.mxu0 %v1699
        %1733 = vmatprep.subr.mxu0 0.0
        %1734 = vmatpush1.msra.mxu0 %v1700
        %1735 = vmatprep.subr.mxu0 0.0
        %1736 = vmatpush1.msra.mxu0 %v1701
        %1737 = vmatprep.subr.mxu0 0.0
        %1738 = vmatpush1.msra.mxu0 %v1702
        %1739 = vmatprep.subr.mxu0 0.0
        %1740 = vmatpush1.msra.mxu0 %v1703
        %1741 = vmatprep.subr.mxu0 0.0
        %1742 = vmatpush1.msra.mxu0 %v1704
        %1743 = vmatprep.subr.mxu0 0.0
        %1744 = vmatpush1.msra.mxu0 %v1705
        %1745 = vmatprep.subr.mxu0 0.0
        %1746 = vmatpush1.msra.mxu0 %v1706
        %1747 = vmatprep.subr.mxu0 0.0
        %1748 = vmatpush1.msra.mxu0 0.0
        %1749 = vmatprep.subr.mxu0 0.0
        %1750 = vmatpush1.msra.mxu0 0.0
        %1751 = vmatprep.subr.mxu0 0.0
        %1752 = vmatpush1.msra.mxu0 0.0
        %1753 = vmatprep.subr.mxu0 0.0
        %1754 = vmatpush1.msra.mxu0 0.0
        %1755 = vmatprep.subr.mxu0 0.0
        %1756 = vmatpush1.msra.mxu0 0.0
        %1757 = vmatprep.subr.mxu0 0.0
        %1758 = vmatpush1.msra.mxu0 0.0
        %1759 = vmatprep.subr.mxu0 0.0
        %1760 = vmatpush1.msra.mxu0 0.0
        %1761 = vmatprep.subr.mxu0 0.0
        %1762 = vmatpush1.msra.mxu0 0.0
        %1763 = vmatprep.subr.mxu0 0.0
        %1764 = vmatpush1.msra.mxu0 0.0
        %1765 = vmatprep.subr.mxu0 0.0
        %1766 = vmatpush1.msra.mxu0 0.0
        %1767 = vmatprep.subr.mxu0 0.0
        %1768 = vmatpush1.msra.mxu0 0.0
        %1769 = vmatprep.subr.mxu0 0.0
        %1770 = vmatpush1.msra.mxu0 0.0
        %1771 = vmatprep.subr.mxu0 0.0
        %1772 = vmatpush1.msra.mxu0 0.0
        %1773 = vmatprep.subr.mxu0 0.0
        %1774 = vmatpush1.msra.mxu0 0.0
        %1775 = vmatprep.subr.mxu0 0.0
        %1776 = vmatpush1.msra.mxu0 0.0
        %1777 = vmatprep.subr.mxu0 0.0
        %1778 = vmatpush1.msra.mxu0 0.0
        %1779 = vmatprep.mubr.f32.mxu0 0.0
        %1780 = vmatmul.mubr.f32.gmra.mrb[0].mxu0 %v426
        %v1781 = vpop.f32.mrb[0].mxu0
        %v1782 = vadd.f32 %v1713, %v1781
        %v1783 = vpop.f32.mrb[0].mxu0
        %1784 = vmatprep.mubr.f32.mxu0 0.0
        %1785 = vmatmul.mubr.f32.gmra.mrb[0].mxu0 %v427
        %v1786 = vpop.f32.mrb[0].mxu0
        %v1787 = vadd.f32 %v1713, %v1786
        %v1788 = vpop.f32.mrb[0].mxu0
        %1789 = vdwg.mxu0
        %s1790 = scalar_lea.vmem %s4, 256
        %v1791 = vld [vmem:[%s1790] sm:$0xff]
        %v1792 = vld [vmem:[%s1790 + $0x8] sm:$0xff]
        %v1793 = vld [vmem:[%s1790 + $0x10] sm:$0xff]
        %v1794 = vld [vmem:[%s1790 + $0x18] sm:$0xff]
        %v1795 = vld [vmem:[%s1790 + $0x20] sm:$0xff]
        %v1796 = vld [vmem:[%s1790 + $0x28] sm:$0xff]
        %v1797 = vld [vmem:[%s1790 + $0x30] sm:$0xff]
        %v1798 = vld [vmem:[%s1790 + $0x38] sm:$0xff]
        %v1799 = vld [vmem:[%s1790 + $0x40] sm:$0xff]
        %v1800 = vld [vmem:[%s1790 + $0x48] sm:$0xff]
        %v1801 = vld [vmem:[%s1790 + $0x50] sm:$0xff]
        %v1802 = vld [vmem:[%s1790 + $0x58] sm:$0xff]
        %v1803 = vld [vmem:[%s1790 + $0x60] sm:$0xff]
        %v1804 = vld [vmem:[%s1790 + $0x68] sm:$0xff]
        %v1805 = vld [vmem:[%s1790 + $0x70] sm:$0xff]
        %v1806 = vld [vmem:[%s1790 + $0x78] sm:$0xff]
        %s1807 = scalar_lea.vmem %s8, 2
        %v1808 = vld [vmem:[%s1807] sm:$0x1]
        %v1810 = vlaneseq
        %v1811 = vshrl.u32 %v1810, 7
        %v1812 = vsub.s32 0, %v1811
        %v1813 = vrot.slane %v1808, %v1812
        %1815 = vmatprep.subr.mxu0 0.0
        %1816 = vmatpush1.msra.mxu0 %v1791
        %1817 = vmatprep.subr.mxu0 0.0
        %1818 = vmatpush1.msra.mxu0 %v1792
        %1819 = vmatprep.subr.mxu0 0.0
        %1820 = vmatpush1.msra.mxu0 %v1793
        %1821 = vmatprep.subr.mxu0 0.0
        %1822 = vmatpush1.msra.mxu0 %v1794
        %1823 = vmatprep.subr.mxu0 0.0
        %1824 = vmatpush1.msra.mxu0 %v1795
        %1825 = vmatprep.subr.mxu0 0.0
        %1826 = vmatpush1.msra.mxu0 %v1796
        %1827 = vmatprep.subr.mxu0 0.0
        %1828 = vmatpush1.msra.mxu0 %v1797
        %1829 = vmatprep.subr.mxu0 0.0
        %1830 = vmatpush1.msra.mxu0 %v1798
        %1831 = vmatprep.subr.mxu0 0.0
        %1832 = vmatpush1.msra.mxu0 %v1799
        %1833 = vmatprep.subr.mxu0 0.0
        %1834 = vmatpush1.msra.mxu0 %v1800
        %1835 = vmatprep.subr.mxu0 0.0
        %1836 = vmatpush1.msra.mxu0 %v1801
        %1837 = vmatprep.subr.mxu0 0.0
        %1838 = vmatpush1.msra.mxu0 %v1802
        %1839 = vmatprep.subr.mxu0 0.0
        %1840 = vmatpush1.msra.mxu0 %v1803
        %1841 = vmatprep.subr.mxu0 0.0
        %1842 = vmatpush1.msra.mxu0 %v1804
        %1843 = vmatprep.subr.mxu0 0.0
        %1844 = vmatpush1.msra.mxu0 %v1805
        %1845 = vmatprep.subr.mxu0 0.0
        %1846 = vmatpush1.msra.mxu0 %v1806
        %1847 = vmatprep.subr.mxu0 0.0
        %1848 = vmatpush1.msra.mxu0 0.0
        %1849 = vmatprep.subr.mxu0 0.0
        %1850 = vmatpush1.msra.mxu0 0.0
        %1851 = vmatprep.subr.mxu0 0.0
        %1852 = vmatpush1.msra.mxu0 0.0
        %1853 = vmatprep.subr.mxu0 0.0
        %1854 = vmatpush1.msra.mxu0 0.0
        %1855 = vmatprep.subr.mxu0 0.0
        %1856 = vmatpush1.msra.mxu0 0.0
        %1857 = vmatprep.subr.mxu0 0.0
        %1858 = vmatpush1.msra.mxu0 0.0
        %1859 = vmatprep.subr.mxu0 0.0
        %1860 = vmatpush1.msra.mxu0 0.0
        %1861 = vmatprep.subr.mxu0 0.0
        %1862 = vmatpush1.msra.mxu0 0.0
        %1863 = vmatprep.subr.mxu0 0.0
        %1864 = vmatpush1.msra.mxu0 0.0
        %1865 = vmatprep.subr.mxu0 0.0
        %1866 = vmatpush1.msra.mxu0 0.0
        %1867 = vmatprep.subr.mxu0 0.0
        %1868 = vmatpush1.msra.mxu0 0.0
        %1869 = vmatprep.subr.mxu0 0.0
        %1870 = vmatpush1.msra.mxu0 0.0
        %1871 = vmatprep.subr.mxu0 0.0
        %1872 = vmatpush1.msra.mxu0 0.0
        %1873 = vmatprep.subr.mxu0 0.0
        %1874 = vmatpush1.msra.mxu0 0.0
        %1875 = vmatprep.subr.mxu0 0.0
        %1876 = vmatpush1.msra.mxu0 0.0
        %1877 = vmatprep.subr.mxu0 0.0
        %1878 = vmatpush1.msra.mxu0 0.0
        %1879 = vmatprep.mubr.f32.mxu0 0.0
        %1880 = vmatmul.mubr.f32.gmra.mrb[0].mxu0 %v426
        %v1881 = vpop.f32.mrb[0].mxu0
        %v1882 = vadd.f32 %v1813, %v1881
        %v1883 = vpop.f32.mrb[0].mxu0
        %1884 = vmatprep.mubr.f32.mxu0 0.0
        %1885 = vmatmul.mubr.f32.gmra.mrb[0].mxu0 %v427
        %v1886 = vpop.f32.mrb[0].mxu0
        %v1887 = vadd.f32 %v1813, %v1886
        %v1888 = vpop.f32.mrb[0].mxu0
        %1889 = vdwg.mxu0
        %v1891 = vsel %vm723, %v1682, 0
        %v1894 = vsel %vm723, %v1687, 0
        %v1897 = vsel %vm723, %v1782, 0
        %v1900 = vsel %vm723, %v1787, 0
        %1902 = vmatprep.subr.mxu0 0.0
        %1903 = vmatpush1.xpose.msra.mxu0 %v1897
        %1904 = vmatprep.subr.mxu0 0.0
        %1905 = vmatpush1.xpose.msra.mxu0 %v1900
        %1906 = vmatprep.subr.mxu0 0.0
        %1907 = vmatpush1.xpose.msra.mxu0 0.0
        %1908 = vmatprep.subr.mxu0 0.0
        %1909 = vmatpush1.xpose.msra.mxu0 0.0
        %1910 = vmatprep.subr.mxu0 0.0
        %1911 = vmatpush1.xpose.msra.mxu0 0.0
        %1912 = vmatprep.subr.mxu0 0.0
        %1913 = vmatpush1.xpose.msra.mxu0 0.0
        %1914 = vmatprep.subr.mxu0 0.0
        %1915 = vmatpush1.xpose.msra.mxu0 0.0
        %1916 = vmatprep.subr.mxu0 0.0
        %1917 = vmatpush1.xpose.msra.mxu0 0.0
        %1918 = vmatprep.subr.mxu0 0.0
        %1919 = vmatpush1.xpose.msra.mxu0 0.0
        %1920 = vmatprep.subr.mxu0 0.0
        %1921 = vmatpush1.xpose.msra.mxu0 0.0
        %1922 = vmatprep.subr.mxu0 0.0
        %1923 = vmatpush1.xpose.msra.mxu0 0.0
        %1924 = vmatprep.subr.mxu0 0.0
        %1925 = vmatpush1.xpose.msra.mxu0 0.0
        %1926 = vmatprep.subr.mxu0 0.0
        %1927 = vmatpush1.xpose.msra.mxu0 0.0
        %1928 = vmatprep.subr.mxu0 0.0
        %1929 = vmatpush1.xpose.msra.mxu0 0.0
        %1930 = vmatprep.subr.mxu0 0.0
        %1931 = vmatpush1.xpose.msra.mxu0 0.0
        %1932 = vmatprep.subr.mxu0 0.0
        %1933 = vmatpush1.xpose.msra.mxu0 0.0
        %1934 = vmatprep.subr.mxu0 0.0
        %1935 = vmatpush1.xpose.msra.mxu0 0.0
        %1936 = vmatprep.subr.mxu0 0.0
        %1937 = vmatpush1.xpose.msra.mxu0 0.0
        %1938 = vmatprep.subr.mxu0 0.0
        %1939 = vmatpush1.xpose.msra.mxu0 0.0
        %1940 = vmatprep.subr.mxu0 0.0
        %1941 = vmatpush1.xpose.msra.mxu0 0.0
        %1942 = vmatprep.subr.mxu0 0.0
        %1943 = vmatpush1.xpose.msra.mxu0 0.0
        %1944 = vmatprep.subr.mxu0 0.0
        %1945 = vmatpush1.xpose.msra.mxu0 0.0
        %1946 = vmatprep.subr.mxu0 0.0
        %1947 = vmatpush1.xpose.msra.mxu0 0.0
        %1948 = vmatprep.subr.mxu0 0.0
        %1949 = vmatpush1.xpose.msra.mxu0 0.0
        %1950 = vmatprep.subr.mxu0 0.0
        %1951 = vmatpush1.xpose.msra.mxu0 0.0
        %1952 = vmatprep.subr.mxu0 0.0
        %1953 = vmatpush1.xpose.msra.mxu0 0.0
        %1954 = vmatprep.subr.mxu0 0.0
        %1955 = vmatpush1.xpose.msra.mxu0 0.0
        %1956 = vmatprep.subr.mxu0 0.0
        %1957 = vmatpush1.xpose.msra.mxu0 0.0
        %1958 = vmatprep.subr.mxu0 0.0
        %1959 = vmatpush1.xpose.msra.mxu0 0.0
        %1960 = vmatprep.subr.mxu0 0.0
        %1961 = vmatpush1.xpose.msra.mxu0 0.0
        %1962 = vmatprep.subr.mxu0 0.0
        %1963 = vmatpush1.xpose.msra.mxu0 0.0
        %1964 = vmatprep.subr.mxu0 0.0
        %1965 = vmatpush1.xpose.msra.mxu0 0.0
        %1966 = vmatprep.mubr.f32.mxu0 0.0
        %1967 = vmatmul.mubr.f32.gmra.mrb[0].mxu0 %v1891
        %v1968 = vpop.f32.mrb[0].mxu0
        %v1969 = vadd.f32 0.0, %v1968
        %v1970 = vpop.f32.mrb[0].mxu0
        %1971 = vmatprep.mubr.f32.mxu0 0.0
        %1972 = vmatmul.mubr.f32.gmra.mrb[0].mxu0 %v1894
        %v1973 = vpop.f32.mrb[0].mxu0
        %v1974 = vadd.f32 0.0, %v1973
        %v1975 = vpop.f32.mrb[0].mxu0
        %1976 = vdwg.mxu0
        %v1977 = vmul.f32 %v1969, 0.17677669
        %v1978 = vmul.f32 %v1974, 0.17677669
        %v1979 = vadd.f32 %v1977, %v817
        %v1980 = vadd.f32 %v1978, %v817
        %v1981 = vsel %vm821, %v1979, -inf
        %1982 = vmax.xlane.f32.xlu0 %v1981
        %v1983 = vpop.xlane.xlu0 %1982
        %v1984 = vsel %vm821, %v1980, -inf
        %1985 = vmax.xlane.f32.xlu0 %v1984
        %v1986 = vpop.xlane.xlu0 %1985
        %v1987 = vsub.f32 %v1979, %v1983
        %v1988 = vsub.f32 %v1980, %v1986
        %v1989 = vmul.f32 %v1987, 1.442695
        %v1990 = vpow.pop %v1989
        %v1991 = vmul.f32 %v1988, 1.442695
        %v1992 = vpow.pop %v1991
        %v1993 = vsel %vm821, %v1990, 0.0
        %1994 = vadd.xlane.f32.xlu0 %v1993
        %v1995 = vpop.xlane.xlu0 %1994
        %v1996 = vsel %vm821, %v1992, 0.0
        %1997 = vadd.xlane.f32.xlu0 %v1996
        %v1998 = vpop.xlane.xlu0 %1997
        %v2000 = vsel %vm821, %v1990, 0
        %v2003 = vsel %vm821, %v1992, 0
        %2005 = vmatprep.subr.mxu0 0.0
        %2006 = vmatpush1.msra.mxu0 %v1882
        %2007 = vmatprep.subr.mxu0 0.0
        %2008 = vmatpush1.msra.mxu0 %v1887
        %2009 = vmatprep.subr.mxu0 0.0
        %2010 = vmatpush1.msra.mxu0 0.0
        %2011 = vmatprep.subr.mxu0 0.0
        %2012 = vmatpush1.msra.mxu0 0.0
        %2013 = vmatprep.subr.mxu0 0.0
        %2014 = vmatpush1.msra.mxu0 0.0
        %2015 = vmatprep.subr.mxu0 0.0
        %2016 = vmatpush1.msra.mxu0 0.0
        %2017 = vmatprep.subr.mxu0 0.0
        %2018 = vmatpush1.msra.mxu0 0.0
        %2019 = vmatprep.subr.mxu0 0.0
        %2020 = vmatpush1.msra.mxu0 0.0
        %2021 = vmatprep.subr.mxu0 0.0
        %2022 = vmatpush1.msra.mxu0 0.0
        %2023 = vmatprep.subr.mxu0 0.0
        %2024 = vmatpush1.msra.mxu0 0.0
        %2025 = vmatprep.subr.mxu0 0.0
        %2026 = vmatpush1.msra.mxu0 0.0
        %2027 = vmatprep.subr.mxu0 0.0
        %2028 = vmatpush1.msra.mxu0 0.0
        %2029 = vmatprep.subr.mxu0 0.0
        %2030 = vmatpush1.msra.mxu0 0.0
        %2031 = vmatprep.subr.mxu0 0.0
        %2032 = vmatpush1.msra.mxu0 0.0
        %2033 = vmatprep.subr.mxu0 0.0
        %2034 = vmatpush1.msra.mxu0 0.0
        %2035 = vmatprep.subr.mxu0 0.0
        %2036 = vmatpush1.msra.mxu0 0.0
        %2037 = vmatprep.subr.mxu0 0.0
        %2038 = vmatpush1.msra.mxu0 0.0
        %2039 = vmatprep.subr.mxu0 0.0
        %2040 = vmatpush1.msra.mxu0 0.0
        %2041 = vmatprep.subr.mxu0 0.0
        %2042 = vmatpush1.msra.mxu0 0.0
        %2043 = vmatprep.subr.mxu0 0.0
        %2044 = vmatpush1.msra.mxu0 0.0
        %2045 = vmatprep.subr.mxu0 0.0
        %2046 = vmatpush1.msra.mxu0 0.0
        %2047 = vmatprep.subr.mxu0 0.0
        %2048 = vmatpush1.msra.mxu0 0.0
        %2049 = vmatprep.subr.mxu0 0.0
        %2050 = vmatpush1.msra.mxu0 0.0
        %2051 = vmatprep.subr.mxu0 0.0
        %2052 = vmatpush1.msra.mxu0 0.0
        %2053 = vmatprep.subr.mxu0 0.0
        %2054 = vmatpush1.msra.mxu0 0.0
        %2055 = vmatprep.subr.mxu0 0.0
        %2056 = vmatpush1.msra.mxu0 0.0
        %2057 = vmatprep.subr.mxu0 0.0
        %2058 = vmatpush1.msra.mxu0 0.0
        %2059 = vmatprep.subr.mxu0 0.0
        %2060 = vmatpush1.msra.mxu0 0.0
        %2061 = vmatprep.subr.mxu0 0.0
        %2062 = vmatpush1.msra.mxu0 0.0
        %2063 = vmatprep.subr.mxu0 0.0
        %2064 = vmatpush1.msra.mxu0 0.0
        %2065 = vmatprep.subr.mxu0 0.0
        %2066 = vmatpush1.msra.mxu0 0.0
        %2067 = vmatprep.subr.mxu0 0.0
        %2068 = vmatpush1.msra.mxu0 0.0
        %2069 = vmatprep.mubr.f32.mxu0 0.0
        %2070 = vmatmul.mubr.f32.gmra.mrb[0].mxu0 %v2000
        %v2071 = vpop.f32.mrb[0].mxu0
        %v2072 = vadd.f32 0.0, %v2071
        %v2073 = vpop.f32.mrb[0].mxu0
        %2074 = vmatprep.mubr.f32.mxu0 0.0
        %2075 = vmatmul.mubr.f32.gmra.mrb[0].mxu0 %v2003
        %v2076 = vpop.f32.mrb[0].mxu0
        %v2077 = vadd.f32 0.0, %v2076
        %v2078 = vpop.f32.mrb[0].mxu0
        %2079 = vdwg.mxu0
        %v2080 = vrcp.pop %v1995
        %v2081 = vmul.f32 %v2072, %v2080
        %v2082 = vrcp.pop %v1998
        %v2083 = vmul.f32 %v2077, %v2082
        %s2084 = scalar_lea.vmem %s5, 64
        %v2085 = vld [vmem:[%s2084] sm:$0xff]
        %v2086 = vld [vmem:[%s2084 + $0x8] sm:$0xff]
        %v2087 = vld [vmem:[%s2084 + $0x10] sm:$0xff]
        %v2088 = vld [vmem:[%s2084 + $0x18] sm:$0xff]
        %v2090 = vsel %vm723, %v2081, 0
        %v2093 = vsel %vm723, %v2083, 0
        %2095 = vmatprep.subr.mxu0 0.0
        %2096 = vmatpush1.msra.mxu0 %v2085
        %2097 = vmatprep.subr.mxu0 0.0
        %2098 = vmatpush1.msra.mxu0 %v2086
        %2099 = vmatprep.subr.mxu0 0.0
        %2100 = vmatpush1.msra.mxu0 %v2087
        %2101 = vmatprep.subr.mxu0 0.0
        %2102 = vmatpush1.msra.mxu0 %v2088
        %2103 = vmatprep.subr.mxu0 0.0
        %2104 = vmatpush1.msra.mxu0 0.0
        %2105 = vmatprep.subr.mxu0 0.0
        %2106 = vmatpush1.msra.mxu0 0.0
        %2107 = vmatprep.subr.mxu0 0.0
        %2108 = vmatpush1.msra.mxu0 0.0
        %2109 = vmatprep.subr.mxu0 0.0
        %2110 = vmatpush1.msra.mxu0 0.0
        %2111 = vmatprep.subr.mxu0 0.0
        %2112 = vmatpush1.msra.mxu0 0.0
        %2113 = vmatprep.subr.mxu0 0.0
        %2114 = vmatpush1.msra.mxu0 0.0
        %2115 = vmatprep.subr.mxu0 0.0
        %2116 = vmatpush1.msra.mxu0 0.0
        %2117 = vmatprep.subr.mxu0 0.0
        %2118 = vmatpush1.msra.mxu0 0.0
        %2119 = vmatprep.subr.mxu0 0.0
        %2120 = vmatpush1.msra.mxu0 0.0
        %2121 = vmatprep.subr.mxu0 0.0
        %2122 = vmatpush1.msra.mxu0 0.0
        %2123 = vmatprep.subr.mxu0 0.0
        %2124 = vmatpush1.msra.mxu0 0.0
        %2125 = vmatprep.subr.mxu0 0.0
        %2126 = vmatpush1.msra.mxu0 0.0
        %2127 = vmatprep.subr.mxu0 0.0
        %2128 = vmatpush1.msra.mxu0 0.0
        %2129 = vmatprep.subr.mxu0 0.0
        %2130 = vmatpush1.msra.mxu0 0.0
        %2131 = vmatprep.subr.mxu0 0.0
        %2132 = vmatpush1.msra.mxu0 0.0
        %2133 = vmatprep.subr.mxu0 0.0
        %2134 = vmatpush1.msra.mxu0 0.0
        %2135 = vmatprep.subr.mxu0 0.0
        %2136 = vmatpush1.msra.mxu0 0.0
        %2137 = vmatprep.subr.mxu0 0.0
        %2138 = vmatpush1.msra.mxu0 0.0
        %2139 = vmatprep.subr.mxu0 0.0
        %2140 = vmatpush1.msra.mxu0 0.0
        %2141 = vmatprep.subr.mxu0 0.0
        %2142 = vmatpush1.msra.mxu0 0.0
        %2143 = vmatprep.subr.mxu0 0.0
        %2144 = vmatpush1.msra.mxu0 0.0
        %2145 = vmatprep.subr.mxu0 0.0
        %2146 = vmatpush1.msra.mxu0 0.0
        %2147 = vmatprep.subr.mxu0 0.0
        %2148 = vmatpush1.msra.mxu0 0.0
        %2149 = vmatprep.subr.mxu0 0.0
        %2150 = vmatpush1.msra.mxu0 0.0
        %2151 = vmatprep.subr.mxu0 0.0
        %2152 = vmatpush1.msra.mxu0 0.0
        %2153 = vmatprep.subr.mxu0 0.0
        %2154 = vmatpush1.msra.mxu0 0.0
        %2155 = vmatprep.subr.mxu0 0.0
        %2156 = vmatpush1.msra.mxu0 0.0
        %2157 = vmatprep.subr.mxu0 0.0
        %2158 = vmatpush1.msra.mxu0 0.0
        %2159 = vmatprep.mubr.f32.mxu0 0.0
        %2160 = vmatmul.mubr.f32.gmra.mrb[0].mxu0 %v2090
        %v2161 = vpop.f32.mrb[0].mxu0
        %v2162 = vadd.f32 0.0, %v2161
        %v2163 = vpop.f32.mrb[0].mxu0
        %2164 = vmatprep.mubr.f32.mxu0 0.0
        %2165 = vmatmul.mubr.f32.gmra.mrb[0].mxu0 %v2093
        %v2166 = vpop.f32.mrb[0].mxu0
        %v2167 = vadd.f32 0.0, %v2166
        %v2168 = vpop.f32.mrb[0].mxu0
        %2169 = vdwg.mxu0
        %v2170 = vadd.f32 %v1582, %v2162
        %v2171 = vadd.f32 %v1587, %v2167
        %s2172 = scalar_lea.vmem %s2, 384
        %v2173 = vld [vmem:[%s2172] sm:$0xff]
        %v2174 = vld [vmem:[%s2172 + $0x8] sm:$0xff]
        %v2175 = vld [vmem:[%s2172 + $0x10] sm:$0xff]
        %v2176 = vld [vmem:[%s2172 + $0x18] sm:$0xff]
        %v2177 = vld [vmem:[%s2172 + $0x20] sm:$0xff]
        %v2178 = vld [vmem:[%s2172 + $0x28] sm:$0xff]
        %v2179 = vld [vmem:[%s2172 + $0x30] sm:$0xff]
        %v2180 = vld [vmem:[%s2172 + $0x38] sm:$0xff]
        %v2181 = vld [vmem:[%s2172 + $0x40] sm:$0xff]
        %v2182 = vld [vmem:[%s2172 + $0x48] sm:$0xff]
        %v2183 = vld [vmem:[%s2172 + $0x50] sm:$0xff]
        %v2184 = vld [vmem:[%s2172 + $0x58] sm:$0xff]
        %v2185 = vld [vmem:[%s2172 + $0x60] sm:$0xff]
        %v2186 = vld [vmem:[%s2172 + $0x68] sm:$0xff]
        %v2187 = vld [vmem:[%s2172 + $0x70] sm:$0xff]
        %v2188 = vld [vmem:[%s2172 + $0x78] sm:$0xff]
        %s2189 = scalar_lea.vmem %s6, 3
        %v2190 = vld [vmem:[%s2189] sm:$0x1]
        %v2192 = vlaneseq
        %v2193 = vshrl.u32 %v2192, 7
        %v2194 = vsub.s32 0, %v2193
        %v2195 = vrot.slane %v2190, %v2194
        %2197 = vmatprep.subr.mxu0 0.0
        %2198 = vmatpush1.msra.mxu0 %v2173
        %2199 = vmatprep.subr.mxu0 0.0
        %2200 = vmatpush1.msra.mxu0 %v2174
        %2201 = vmatprep.subr.mxu0 0.0
        %2202 = vmatpush1.msra.mxu0 %v2175
        %2203 = vmatprep.subr.mxu0 0.0
        %2204 = vmatpush1.msra.mxu0 %v2176
        %2205 = vmatprep.subr.mxu0 0.0
        %2206 = vmatpush1.msra.mxu0 %v2177
        %2207 = vmatprep.subr.mxu0 0.0
        %2208 = vmatpush1.msra.mxu0 %v2178
        %2209 = vmatprep.subr.mxu0 0.0
        %2210 = vmatpush1.msra.mxu0 %v2179
        %2211 = vmatprep.subr.mxu0 0.0
        %2212 = vmatpush1.msra.mxu0 %v2180
        %2213 = vmatprep.subr.mxu0 0.0
        %2214 = vmatpush1.msra.mxu0 %v2181
        %2215 = vmatprep.subr.mxu0 0.0
        %2216 = vmatpush1.msra.mxu0 %v2182
        %2217 = vmatprep.subr.mxu0 0.0
        %2218 = vmatpush1.msra.mxu0 %v2183
        %2219 = vmatprep.subr.mxu0 0.0
        %2220 = vmatpush1.msra.mxu0 %v2184
        %2221 = vmatprep.subr.mxu0 0.0
        %2222 = vmatpush1.msra.mxu0 %v2185
        %2223 = vmatprep.subr.mxu0 0.0
        %2224 = vmatpush1.msra.mxu0 %v2186
        %2225 = vmatprep.subr.mxu0 0.0
        %2226 = vmatpush1.msra.mxu0 %v2187
        %2227 = vmatprep.subr.mxu0 0.0
        %2228 = vmatpush1.msra.mxu0 %v2188
        %2229 = vmatprep.subr.mxu0 0.0
        %2230 = vmatpush1.msra.mxu0 0.0
        %2231 = vmatprep.subr.mxu0 0.0
        %2232 = vmatpush1.msra.mxu0 0.0
        %2233 = vmatprep.subr.mxu0 0.0
        %2234 = vmatpush1.msra.mxu0 0.0
        %2235 = vmatprep.subr.mxu0 0.0
        %2236 = vmatpush1.msra.mxu0 0.0
        %2237 = vmatprep.subr.mxu0 0.0
        %2238 = vmatpush1.msra.mxu0 0.0
        %2239 = vmatprep.subr.mxu0 0.0
        %2240 = vmatpush1.msra.mxu0 0.0
        %2241 = vmatprep.subr.mxu0 0.0
        %2242 = vmatpush1.msra.mxu0 0.0
        %2243 = vmatprep.subr.mxu0 0.0
        %2244 = vmatpush1.msra.mxu0 0.0
        %2245 = vmatprep.subr.mxu0 0.0
        %2246 = vmatpush1.msra.mxu0 0.0
        %2247 = vmatprep.subr.mxu0 0.0
        %2248 = vmatpush1.msra.mxu0 0.0
        %2249 = vmatprep.subr.mxu0 0.0
        %2250 = vmatpush1.msra.mxu0 0.0
        %2251 = vmatprep.subr.mxu0 0.0
        %2252 = vmatpush1.msra.mxu0 0.0
        %2253 = vmatprep.subr.mxu0 0.0
        %2254 = vmatpush1.msra.mxu0 0.0
        %2255 = vmatprep.subr.mxu0 0.0
        %2256 = vmatpush1.msra.mxu0 0.0
        %2257 = vmatprep.subr.mxu0 0.0
        %2258 = vmatpush1.msra.mxu0 0.0
        %2259 = vmatprep.subr.mxu0 0.0
        %2260 = vmatpush1.msra.mxu0 0.0
        %2261 = vmatprep.mubr.f32.mxu0 0.0
        %2262 = vmatmul.mubr.f32.gmra.mrb[0].mxu0 %v426
        %v2263 = vpop.f32.mrb[0].mxu0
        %v2264 = vadd.f32 %v2195, %v2263
        %v2265 = vpop.f32.mrb[0].mxu0
        %2266 = vmatprep.mubr.f32.mxu0 0.0
        %2267 = vmatmul.mubr.f32.gmra.mrb[0].mxu0 %v427
        %v2268 = vpop.f32.mrb[0].mxu0
        %v2269 = vadd.f32 %v2195, %v2268
        %v2270 = vpop.f32.mrb[0].mxu0
        %2271 = vdwg.mxu0
        %s2272 = scalar_lea.vmem %s3, 384
        %v2273 = vld [vmem:[%s2272] sm:$0xff]
        %v2274 = vld [vmem:[%s2272 + $0x8] sm:$0xff]
        %v2275 = vld [vmem:[%s2272 + $0x10] sm:$0xff]
        %v2276 = vld [vmem:[%s2272 + $0x18] sm:$0xff]
        %v2277 = vld [vmem:[%s2272 + $0x20] sm:$0xff]
        %v2278 = vld [vmem:[%s2272 + $0x28] sm:$0xff]
        %v2279 = vld [vmem:[%s2272 + $0x30] sm:$0xff]
        %v2280 = vld [vmem:[%s2272 + $0x38] sm:$0xff]
        %v2281 = vld [vmem:[%s2272 + $0x40] sm:$0xff]
        %v2282 = vld [vmem:[%s2272 + $0x48] sm:$0xff]
        %v2283 = vld [vmem:[%s2272 + $0x50] sm:$0xff]
        %v2284 = vld [vmem:[%s2272 + $0x58] sm:$0xff]
        %v2285 = vld [vmem:[%s2272 + $0x60] sm:$0xff]
        %v2286 = vld [vmem:[%s2272 + $0x68] sm:$0xff]
        %v2287 = vld [vmem:[%s2272 + $0x70] sm:$0xff]
        %v2288 = vld [vmem:[%s2272 + $0x78] sm:$0xff]
        %s2289 = scalar_lea.vmem %s7, 3
        %v2290 = vld [vmem:[%s2289] sm:$0x1]
        %v2292 = vlaneseq
        %v2293 = vshrl.u32 %v2292, 7
        %v2294 = vsub.s32 0, %v2293
        %v2295 = vrot.slane %v2290, %v2294
        %2297 = vmatprep.subr.mxu0 0.0
        %2298 = vmatpush1.msra.mxu0 %v2273
        %2299 = vmatprep.subr.mxu0 0.0
        %2300 = vmatpush1.msra.mxu0 %v2274
        %2301 = vmatprep.subr.mxu0 0.0
        %2302 = vmatpush1.msra.mxu0 %v2275
        %2303 = vmatprep.subr.mxu0 0.0
        %2304 = vmatpush1.msra.mxu0 %v2276
        %2305 = vmatprep.subr.mxu0 0.0
        %2306 = vmatpush1.msra.mxu0 %v2277
        %2307 = vmatprep.subr.mxu0 0.0
        %2308 = vmatpush1.msra.mxu0 %v2278
        %2309 = vmatprep.subr.mxu0 0.0
        %2310 = vmatpush1.msra.mxu0 %v2279
        %2311 = vmatprep.subr.mxu0 0.0
        %2312 = vmatpush1.msra.mxu0 %v2280
        %2313 = vmatprep.subr.mxu0 0.0
        %2314 = vmatpush1.msra.mxu0 %v2281
        %2315 = vmatprep.subr.mxu0 0.0
        %2316 = vmatpush1.msra.mxu0 %v2282
        %2317 = vmatprep.subr.mxu0 0.0
        %2318 = vmatpush1.msra.mxu0 %v2283
        %2319 = vmatprep.subr.mxu0 0.0
        %2320 = vmatpush1.msra.mxu0 %v2284
        %2321 = vmatprep.subr.mxu0 0.0
        %2322 = vmatpush1.msra.mxu0 %v2285
        %2323 = vmatprep.subr.mxu0 0.0
        %2324 = vmatpush1.msra.mxu0 %v2286
        %2325 = vmatprep.subr.mxu0 0.0
        %2326 = vmatpush1.msra.mxu0 %v2287
        %2327 = vmatprep.subr.mxu0 0.0
        %2328 = vmatpush1.msra.mxu0 %v2288
        %2329 = vmatprep.subr.mxu0 0.0
        %2330 = vmatpush1.msra.mxu0 0.0
        %2331 = vmatprep.subr.mxu0 0.0
        %2332 = vmatpush1.msra.mxu0 0.0
        %2333 = vmatprep.subr.mxu0 0.0
        %2334 = vmatpush1.msra.mxu0 0.0
        %2335 = vmatprep.subr.mxu0 0.0
        %2336 = vmatpush1.msra.mxu0 0.0
        %2337 = vmatprep.subr.mxu0 0.0
        %2338 = vmatpush1.msra.mxu0 0.0
        %2339 = vmatprep.subr.mxu0 0.0
        %2340 = vmatpush1.msra.mxu0 0.0
        %2341 = vmatprep.subr.mxu0 0.0
        %2342 = vmatpush1.msra.mxu0 0.0
        %2343 = vmatprep.subr.mxu0 0.0
        %2344 = vmatpush1.msra.mxu0 0.0
        %2345 = vmatprep.subr.mxu0 0.0
        %2346 = vmatpush1.msra.mxu0 0.0
        %2347 = vmatprep.subr.mxu0 0.0
        %2348 = vmatpush1.msra.mxu0 0.0
        %2349 = vmatprep.subr.mxu0 0.0
        %2350 = vmatpush1.msra.mxu0 0.0
        %2351 = vmatprep.subr.mxu0 0.0
        %2352 = vmatpush1.msra.mxu0 0.0
        %2353 = vmatprep.subr.mxu0 0.0
        %2354 = vmatpush1.msra.mxu0 0.0
        %2355 = vmatprep.subr.mxu0 0.0
        %2356 = vmatpush1.msra.mxu0 0.0
        %2357 = vmatprep.subr.mxu0 0.0
        %2358 = vmatpush1.msra.mxu0 0.0
        %2359 = vmatprep.subr.mxu0 0.0
        %2360 = vmatpush1.msra.mxu0 0.0
        %2361 = vmatprep.mubr.f32.mxu0 0.0
        %2362 = vmatmul.mubr.f32.gmra.mrb[0].mxu0 %v426
        %v2363 = vpop.f32.mrb[0].mxu0
        %v2364 = vadd.f32 %v2295, %v2363
        %v2365 = vpop.f32.mrb[0].mxu0
        %2366 = vmatprep.mubr.f32.mxu0 0.0
        %2367 = vmatmul.mubr.f32.gmra.mrb[0].mxu0 %v427
        %v2368 = vpop.f32.mrb[0].mxu0
        %v2369 = vadd.f32 %v2295, %v2368
        %v2370 = vpop.f32.mrb[0].mxu0
        %2371 = vdwg.mxu0
        %s2372 = scalar_lea.vmem %s4, 384
        %v2373 = vld [vmem:[%s2372] sm:$0xff]
        %v2374 = vld [vmem:[%s2372 + $0x8] sm:$0xff]
        %v2375 = vld [vmem:[%s2372 + $0x10] sm:$0xff]
        %v2376 = vld [vmem:[%s2372 + $0x18] sm:$0xff]
        %v2377 = vld [vmem:[%s2372 + $0x20] sm:$0xff]
        %v2378 = vld [vmem:[%s2372 + $0x28] sm:$0xff]
        %v2379 = vld [vmem:[%s2372 + $0x30] sm:$0xff]
        %v2380 = vld [vmem:[%s2372 + $0x38] sm:$0xff]
        %v2381 = vld [vmem:[%s2372 + $0x40] sm:$0xff]
        %v2382 = vld [vmem:[%s2372 + $0x48] sm:$0xff]
        %v2383 = vld [vmem:[%s2372 + $0x50] sm:$0xff]
        %v2384 = vld [vmem:[%s2372 + $0x58] sm:$0xff]
        %v2385 = vld [vmem:[%s2372 + $0x60] sm:$0xff]
        %v2386 = vld [vmem:[%s2372 + $0x68] sm:$0xff]
        %v2387 = vld [vmem:[%s2372 + $0x70] sm:$0xff]
        %v2388 = vld [vmem:[%s2372 + $0x78] sm:$0xff]
        %s2389 = scalar_lea.vmem %s8, 3
        %v2390 = vld [vmem:[%s2389] sm:$0x1]
        %v2392 = vlaneseq
        %v2393 = vshrl.u32 %v2392, 7
        %v2394 = vsub.s32 0, %v2393
        %v2395 = vrot.slane %v2390, %v2394
        %2397 = vmatprep.subr.mxu0 0.0
        %2398 = vmatpush1.msra.mxu0 %v2373
        %2399 = vmatprep.subr.mxu0 0.0
        %2400 = vmatpush1.msra.mxu0 %v2374
        %2401 = vmatprep.subr.mxu0 0.0
        %2402 = vmatpush1.msra.mxu0 %v2375
        %2403 = vmatprep.subr.mxu0 0.0
        %2404 = vmatpush1.msra.mxu0 %v2376
        %2405 = vmatprep.subr.mxu0 0.0
        %2406 = vmatpush1.msra.mxu0 %v2377
        %2407 = vmatprep.subr.mxu0 0.0
        %2408 = vmatpush1.msra.mxu0 %v2378
        %2409 = vmatprep.subr.mxu0 0.0
        %2410 = vmatpush1.msra.mxu0 %v2379
        %2411 = vmatprep.subr.mxu0 0.0
        %2412 = vmatpush1.msra.mxu0 %v2380
        %2413 = vmatprep.subr.mxu0 0.0
        %2414 = vmatpush1.msra.mxu0 %v2381
        %2415 = vmatprep.subr.mxu0 0.0
        %2416 = vmatpush1.msra.mxu0 %v2382
        %2417 = vmatprep.subr.mxu0 0.0
        %2418 = vmatpush1.msra.mxu0 %v2383
        %2419 = vmatprep.subr.mxu0 0.0
        %2420 = vmatpush1.msra.mxu0 %v2384
        %2421 = vmatprep.subr.mxu0 0.0
        %2422 = vmatpush1.msra.mxu0 %v2385
        %2423 = vmatprep.subr.mxu0 0.0
        %2424 = vmatpush1.msra.mxu0 %v2386
        %2425 = vmatprep.subr.mxu0 0.0
        %2426 = vmatpush1.msra.mxu0 %v2387
        %2427 = vmatprep.subr.mxu0 0.0
        %2428 = vmatpush1.msra.mxu0 %v2388
        %2429 = vmatprep.subr.mxu0 0.0
        %2430 = vmatpush1.msra.mxu0 0.0
        %2431 = vmatprep.subr.mxu0 0.0
        %2432 = vmatpush1.msra.mxu0 0.0
        %2433 = vmatprep.subr.mxu0 0.0
        %2434 = vmatpush1.msra.mxu0 0.0
        %2435 = vmatprep.subr.mxu0 0.0
        %2436 = vmatpush1.msra.mxu0 0.0
        %2437 = vmatprep.subr.mxu0 0.0
        %2438 = vmatpush1.msra.mxu0 0.0
        %2439 = vmatprep.subr.mxu0 0.0
        %2440 = vmatpush1.msra.mxu0 0.0
        %2441 = vmatprep.subr.mxu0 0.0
        %2442 = vmatpush1.msra.mxu0 0.0
        %2443 = vmatprep.subr.mxu0 0.0
        %2444 = vmatpush1.msra.mxu0 0.0
        %2445 = vmatprep.subr.mxu0 0.0
        %2446 = vmatpush1.msra.mxu0 0.0
        %2447 = vmatprep.subr.mxu0 0.0
        %2448 = vmatpush1.msra.mxu0 0.0
        %2449 = vmatprep.subr.mxu0 0.0
        %2450 = vmatpush1.msra.mxu0 0.0
        %2451 = vmatprep.subr.mxu0 0.0
        %2452 = vmatpush1.msra.mxu0 0.0
        %2453 = vmatprep.subr.mxu0 0.0
        %2454 = vmatpush1.msra.mxu0 0.0
        %2455 = vmatprep.subr.mxu0 0.0
        %2456 = vmatpush1.msra.mxu0 0.0
        %2457 = vmatprep.subr.mxu0 0.0
        %2458 = vmatpush1.msra.mxu0 0.0
        %2459 = vmatprep.subr.mxu0 0.0
        %2460 = vmatpush1.msra.mxu0 0.0
        %2461 = vmatprep.mubr.f32.mxu0 0.0
        %2462 = vmatmul.mubr.f32.gmra.mrb[0].mxu0 %v426
        %v2463 = vpop.f32.mrb[0].mxu0
        %v2464 = vadd.f32 %v2395, %v2463
        %v2465 = vpop.f32.mrb[0].mxu0
        %2466 = vmatprep.mubr.f32.mxu0 0.0
        %2467 = vmatmul.mubr.f32.gmra.mrb[0].mxu0 %v427
        %v2468 = vpop.f32.mrb[0].mxu0
        %v2469 = vadd.f32 %v2395, %v2468
        %v2470 = vpop.f32.mrb[0].mxu0
        %2471 = vdwg.mxu0
        %v2473 = vsel %vm723, %v2264, 0
        %v2476 = vsel %vm723, %v2269, 0
        %v2479 = vsel %vm723, %v2364, 0
        %v2482 = vsel %vm723, %v2369, 0
        %2484 = vmatprep.subr.mxu0 0.0
        %2485 = vmatpush1.xpose.msra.mxu0 %v2479
        %2486 = vmatprep.subr.mxu0 0.0
        %2487 = vmatpush1.xpose.msra.mxu0 %v2482
        %2488 = vmatprep.subr.mxu0 0.0
        %2489 = vmatpush1.xpose.msra.mxu0 0.0
        %2490 = vmatprep.subr.mxu0 0.0
        %2491 = vmatpush1.xpose.msra.mxu0 0.0
        %2492 = vmatprep.subr.mxu0 0.0
        %2493 = vmatpush1.xpose.msra.mxu0 0.0
        %2494 = vmatprep.subr.mxu0 0.0
        %2495 = vmatpush1.xpose.msra.mxu0 0.0
        %2496 = vmatprep.subr.mxu0 0.0
        %2497 = vmatpush1.xpose.msra.mxu0 0.0
        %2498 = vmatprep.subr.mxu0 0.0
        %2499 = vmatpush1.xpose.msra.mxu0 0.0
        %2500 = vmatprep.subr.mxu0 0.0
        %2501 = vmatpush1.xpose.msra.mxu0 0.0
        %2502 = vmatprep.subr.mxu0 0.0
        %2503 = vmatpush1.xpose.msra.mxu0 0.0
        %2504 = vmatprep.subr.mxu0 0.0
        %2505 = vmatpush1.xpose.msra.mxu0 0.0
        %2506 = vmatprep.subr.mxu0 0.0
        %2507 = vmatpush1.xpose.msra.mxu0 0.0
        %2508 = vmatprep.subr.mxu0 0.0
        %2509 = vmatpush1.xpose.msra.mxu0 0.0
        %2510 = vmatprep.subr.mxu0 0.0
        %2511 = vmatpush1.xpose.msra.mxu0 0.0
        %2512 = vmatprep.subr.mxu0 0.0
        %2513 = vmatpush1.xpose.msra.mxu0 0.0
        %2514 = vmatprep.subr.mxu0 0.0
        %2515 = vmatpush1.xpose.msra.mxu0 0.0
        %2516 = vmatprep.subr.mxu0 0.0
        %2517 = vmatpush1.xpose.msra.mxu0 0.0
        %2518 = vmatprep.subr.mxu0 0.0
        %2519 = vmatpush1.xpose.msra.mxu0 0.0
        %2520 = vmatprep.subr.mxu0 0.0
        %2521 = vmatpush1.xpose.msra.mxu0 0.0
        %2522 = vmatprep.subr.mxu0 0.0
        %2523 = vmatpush1.xpose.msra.mxu0 0.0
        %2524 = vmatprep.subr.mxu0 0.0
        %2525 = vmatpush1.xpose.msra.mxu0 0.0
        %2526 = vmatprep.subr.mxu0 0.0
        %2527 = vmatpush1.xpose.msra.mxu0 0.0
        %2528 = vmatprep.subr.mxu0 0.0
        %2529 = vmatpush1.xpose.msra.mxu0 0.0
        %2530 = vmatprep.subr.mxu0 0.0
        %2531 = vmatpush1.xpose.msra.mxu0 0.0
        %2532 = vmatprep.subr.mxu0 0.0
        %2533 = vmatpush1.xpose.msra.mxu0 0.0
        %2534 = vmatprep.subr.mxu0 0.0
        %2535 = vmatpush1.xpose.msra.mxu0 0.0
        %2536 = vmatprep.subr.mxu0 0.0
        %2537 = vmatpush1.xpose.msra.mxu0 0.0
        %2538 = vmatprep.subr.mxu0 0.0
        %2539 = vmatpush1.xpose.msra.mxu0 0.0
        %2540 = vmatprep.subr.mxu0 0.0
        %2541 = vmatpush1.xpose.msra.mxu0 0.0
        %2542 = vmatprep.subr.mxu0 0.0
        %2543 = vmatpush1.xpose.msra.mxu0 0.0
        %2544 = vmatprep.subr.mxu0 0.0
        %2545 = vmatpush1.xpose.msra.mxu0 0.0
        %2546 = vmatprep.subr.mxu0 0.0
        %2547 = vmatpush1.xpose.msra.mxu0 0.0
        %2548 = vmatprep.mubr.f32.mxu0 0.0
        %2549 = vmatmul.mubr.f32.gmra.mrb[0].mxu0 %v2473
        %v2550 = vpop.f32.mrb[0].mxu0
        %v2551 = vadd.f32 0.0, %v2550
        %v2552 = vpop.f32.mrb[0].mxu0
        %2553 = vmatprep.mubr.f32.mxu0 0.0
        %2554 = vmatmul.mubr.f32.gmra.mrb[0].mxu0 %v2476
        %v2555 = vpop.f32.mrb[0].mxu0
        %v2556 = vadd.f32 0.0, %v2555
        %v2557 = vpop.f32.mrb[0].mxu0
        %2558 = vdwg.mxu0
        %v2559 = vmul.f32 %v2551, 0.17677669
        %v2560 = vmul.f32 %v2556, 0.17677669
        %v2561 = vadd.f32 %v2559, %v817
        %v2562 = vadd.f32 %v2560, %v817
        %v2563 = vsel %vm821, %v2561, -inf
        %2564 = vmax.xlane.f32.xlu0 %v2563
        %v2565 = vpop.xlane.xlu0 %2564
        %v2566 = vsel %vm821, %v2562, -inf
        %2567 = vmax.xlane.f32.xlu0 %v2566
        %v2568 = vpop.xlane.xlu0 %2567
        %v2569 = vsub.f32 %v2561, %v2565
        %v2570 = vsub.f32 %v2562, %v2568
        %v2571 = vmul.f32 %v2569, 1.442695
        %v2572 = vpow.pop %v2571
        %v2573 = vmul.f32 %v2570, 1.442695
        %v2574 = vpow.pop %v2573
        %v2575 = vsel %vm821, %v2572, 0.0
        %2576 = vadd.xlane.f32.xlu0 %v2575
        %v2577 = vpop.xlane.xlu0 %2576
        %v2578 = vsel %vm821, %v2574, 0.0
        %2579 = vadd.xlane.f32.xlu0 %v2578
        %v2580 = vpop.xlane.xlu0 %2579
        %v2582 = vsel %vm821, %v2572, 0
        %v2585 = vsel %vm821, %v2574, 0
        %2587 = vmatprep.subr.mxu0 0.0
        %2588 = vmatpush1.msra.mxu0 %v2464
        %2589 = vmatprep.subr.mxu0 0.0
        %2590 = vmatpush1.msra.mxu0 %v2469
        %2591 = vmatprep.subr.mxu0 0.0
        %2592 = vmatpush1.msra.mxu0 0.0
        %2593 = vmatprep.subr.mxu0 0.0
        %2594 = vmatpush1.msra.mxu0 0.0
        %2595 = vmatprep.subr.mxu0 0.0
        %2596 = vmatpush1.msra.mxu0 0.0
        %2597 = vmatprep.subr.mxu0 0.0
        %2598 = vmatpush1.msra.mxu0 0.0
        %2599 = vmatprep.subr.mxu0 0.0
        %2600 = vmatpush1.msra.mxu0 0.0
        %2601 = vmatprep.subr.mxu0 0.0
        %2602 = vmatpush1.msra.mxu0 0.0
        %2603 = vmatprep.subr.mxu0 0.0
        %2604 = vmatpush1.msra.mxu0 0.0
        %2605 = vmatprep.subr.mxu0 0.0
        %2606 = vmatpush1.msra.mxu0 0.0
        %2607 = vmatprep.subr.mxu0 0.0
        %2608 = vmatpush1.msra.mxu0 0.0
        %2609 = vmatprep.subr.mxu0 0.0
        %2610 = vmatpush1.msra.mxu0 0.0
        %2611 = vmatprep.subr.mxu0 0.0
        %2612 = vmatpush1.msra.mxu0 0.0
        %2613 = vmatprep.subr.mxu0 0.0
        %2614 = vmatpush1.msra.mxu0 0.0
        %2615 = vmatprep.subr.mxu0 0.0
        %2616 = vmatpush1.msra.mxu0 0.0
        %2617 = vmatprep.subr.mxu0 0.0
        %2618 = vmatpush1.msra.mxu0 0.0
        %2619 = vmatprep.subr.mxu0 0.0
        %2620 = vmatpush1.msra.mxu0 0.0
        %2621 = vmatprep.subr.mxu0 0.0
        %2622 = vmatpush1.msra.mxu0 0.0
        %2623 = vmatprep.subr.mxu0 0.0
        %2624 = vmatpush1.msra.mxu0 0.0
        %2625 = vmatprep.subr.mxu0 0.0
        %2626 = vmatpush1.msra.mxu0 0.0
        %2627 = vmatprep.subr.mxu0 0.0
        %2628 = vmatpush1.msra.mxu0 0.0
        %2629 = vmatprep.subr.mxu0 0.0
        %2630 = vmatpush1.msra.mxu0 0.0
        %2631 = vmatprep.subr.mxu0 0.0
        %2632 = vmatpush1.msra.mxu0 0.0
        %2633 = vmatprep.subr.mxu0 0.0
        %2634 = vmatpush1.msra.mxu0 0.0
        %2635 = vmatprep.subr.mxu0 0.0
        %2636 = vmatpush1.msra.mxu0 0.0
        %2637 = vmatprep.subr.mxu0 0.0
        %2638 = vmatpush1.msra.mxu0 0.0
        %2639 = vmatprep.subr.mxu0 0.0
        %2640 = vmatpush1.msra.mxu0 0.0
        %2641 = vmatprep.subr.mxu0 0.0
        %2642 = vmatpush1.msra.mxu0 0.0
        %2643 = vmatprep.subr.mxu0 0.0
        %2644 = vmatpush1.msra.mxu0 0.0
        %2645 = vmatprep.subr.mxu0 0.0
        %2646 = vmatpush1.msra.mxu0 0.0
        %2647 = vmatprep.subr.mxu0 0.0
        %2648 = vmatpush1.msra.mxu0 0.0
        %2649 = vmatprep.subr.mxu0 0.0
        %2650 = vmatpush1.msra.mxu0 0.0
        %2651 = vmatprep.mubr.f32.mxu0 0.0
        %2652 = vmatmul.mubr.f32.gmra.mrb[0].mxu0 %v2582
        %v2653 = vpop.f32.mrb[0].mxu0
        %v2654 = vadd.f32 0.0, %v2653
        %v2655 = vpop.f32.mrb[0].mxu0
        %2656 = vmatprep.mubr.f32.mxu0 0.0
        %2657 = vmatmul.mubr.f32.gmra.mrb[0].mxu0 %v2585
        %v2658 = vpop.f32.mrb[0].mxu0
        %v2659 = vadd.f32 0.0, %v2658
        %v2660 = vpop.f32.mrb[0].mxu0
        %2661 = vdwg.mxu0
        %v2662 = vrcp.pop %v2577
        %v2663 = vmul.f32 %v2654, %v2662
        %v2664 = vrcp.pop %v2580
        %v2665 = vmul.f32 %v2659, %v2664
        %s2666 = scalar_lea.vmem %s5, 96
        %v2667 = vld [vmem:[%s2666] sm:$0xff]
        %v2668 = vld [vmem:[%s2666 + $0x8] sm:$0xff]
        %v2669 = vld [vmem:[%s2666 + $0x10] sm:$0xff]
        %v2670 = vld [vmem:[%s2666 + $0x18] sm:$0xff]
        %v2672 = vsel %vm723, %v2663, 0
        %v2675 = vsel %vm723, %v2665, 0
        %2677 = vmatprep.subr.mxu0 0.0
        %2678 = vmatpush1.msra.mxu0 %v2667
        %2679 = vmatprep.subr.mxu0 0.0
        %2680 = vmatpush1.msra.mxu0 %v2668
        %2681 = vmatprep.subr.mxu0 0.0
        %2682 = vmatpush1.msra.mxu0 %v2669
        %2683 = vmatprep.subr.mxu0 0.0
        %2684 = vmatpush1.msra.mxu0 %v2670
        %2685 = vmatprep.subr.mxu0 0.0
        %2686 = vmatpush1.msra.mxu0 0.0
        %2687 = vmatprep.subr.mxu0 0.0
        %2688 = vmatpush1.msra.mxu0 0.0
        %2689 = vmatprep.subr.mxu0 0.0
        %2690 = vmatpush1.msra.mxu0 0.0
        %2691 = vmatprep.subr.mxu0 0.0
        %2692 = vmatpush1.msra.mxu0 0.0
        %2693 = vmatprep.subr.mxu0 0.0
        %2694 = vmatpush1.msra.mxu0 0.0
        %2695 = vmatprep.subr.mxu0 0.0
        %2696 = vmatpush1.msra.mxu0 0.0
        %2697 = vmatprep.subr.mxu0 0.0
        %2698 = vmatpush1.msra.mxu0 0.0
        %2699 = vmatprep.subr.mxu0 0.0
        %2700 = vmatpush1.msra.mxu0 0.0
        %2701 = vmatprep.subr.mxu0 0.0
        %2702 = vmatpush1.msra.mxu0 0.0
        %2703 = vmatprep.subr.mxu0 0.0
        %2704 = vmatpush1.msra.mxu0 0.0
        %2705 = vmatprep.subr.mxu0 0.0
        %2706 = vmatpush1.msra.mxu0 0.0
        %2707 = vmatprep.subr.mxu0 0.0
        %2708 = vmatpush1.msra.mxu0 0.0
        %2709 = vmatprep.subr.mxu0 0.0
        %2710 = vmatpush1.msra.mxu0 0.0
        %2711 = vmatprep.subr.mxu0 0.0
        %2712 = vmatpush1.msra.mxu0 0.0
        %2713 = vmatprep.subr.mxu0 0.0
        %2714 = vmatpush1.msra.mxu0 0.0
        %2715 = vmatprep.subr.mxu0 0.0
        %2716 = vmatpush1.msra.mxu0 0.0
        %2717 = vmatprep.subr.mxu0 0.0
        %2718 = vmatpush1.msra.mxu0 0.0
        %2719 = vmatprep.subr.mxu0 0.0
        %2720 = vmatpush1.msra.mxu0 0.0
        %2721 = vmatprep.subr.mxu0 0.0
        %2722 = vmatpush1.msra.mxu0 0.0
        %2723 = vmatprep.subr.mxu0 0.0
        %2724 = vmatpush1.msra.mxu0 0.0
        %2725 = vmatprep.subr.mxu0 0.0
        %2726 = vmatpush1.msra.mxu0 0.0
        %2727 = vmatprep.subr.mxu0 0.0
        %2728 = vmatpush1.msra.mxu0 0.0
        %2729 = vmatprep.subr.mxu0 0.0
        %2730 = vmatpush1.msra.mxu0 0.0
        %2731 = vmatprep.subr.mxu0 0.0
        %2732 = vmatpush1.msra.mxu0 0.0
        %2733 = vmatprep.subr.mxu0 0.0
        %2734 = vmatpush1.msra.mxu0 0.0
        %2735 = vmatprep.subr.mxu0 0.0
        %2736 = vmatpush1.msra.mxu0 0.0
        %2737 = vmatprep.subr.mxu0 0.0
        %2738 = vmatpush1.msra.mxu0 0.0
        %2739 = vmatprep.subr.mxu0 0.0
        %2740 = vmatpush1.msra.mxu0 0.0
        %2741 = vmatprep.mubr.f32.mxu0 0.0
        %2742 = vmatmul.mubr.f32.gmra.mrb[0].mxu0 %v2672
        %v2743 = vpop.f32.mrb[0].mxu0
        %v2744 = vadd.f32 0.0, %v2743
        %v2745 = vpop.f32.mrb[0].mxu0
        %2746 = vmatprep.mubr.f32.mxu0 0.0
        %2747 = vmatmul.mubr.f32.gmra.mrb[0].mxu0 %v2675
        %v2748 = vpop.f32.mrb[0].mxu0
        %v2749 = vadd.f32 0.0, %v2748
        %v2750 = vpop.f32.mrb[0].mxu0
        %2751 = vdwg.mxu0
        %v2752 = vadd.f32 %v2170, %v2744
        %v2753 = vadd.f32 %v2171, %v2749
        %v2754 = vld [vmem:[%s9] sm:$0x1]
        %v2756 = vlaneseq
        %v2757 = vshrl.u32 %v2756, 7
        %v2758 = vsub.s32 0, %v2757
        %v2759 = vrot.slane %v2754, %v2758
        %v2761 = vadd.f32 %v2752, %v2759
        %v2762 = vadd.f32 %v2753, %v2759
        %v2763 = vadd.f32 %v2761, %v426
        %v2764 = vadd.f32 %v2762, %v427
        %2765 = vadd.xlane.f32.xlu0 %v2763
        %v2766 = vpop.xlane.xlu0 %2765
        %2767 = vadd.xlane.f32.xlu0 %v2764
        %v2768 = vpop.xlane.xlu0 %2767
        %v2769 = vmul.f32 %v2763, %v2763
        %v2770 = vmul.f32 %v2764, %v2764
        %2771 = vadd.xlane.f32.xlu0 %v2769
        %v2772 = vpop.xlane.xlu0 %2771
        %2773 = vadd.xlane.f32.xlu0 %v2770
        %v2774 = vpop.xlane.xlu0 %2773
        %v2775 = vmul.f32 %v2766, 0.0078125
        %v2776 = vmul.f32 %v2768, 0.0078125
        %v2777 = vmul.f32 %v2772, 0.0078125
        %v2778 = vmul.f32 %v2774, 0.0078125
        %v2779 = vmul.f32 %v2775, %v2775
        %v2780 = vmul.f32 %v2776, %v2776
        %v2781 = vsub.f32 %v2777, %v2779
        %v2782 = vsub.f32 %v2778, %v2780
        %v2783 = vadd.f32 %v2781, 1e-05
        %v2784 = vadd.f32 %v2782, 1e-05
        %v2785 = vrsqrt.pop %v2783
        %v2786 = vrsqrt.pop %v2784
        %v2787 = vsub.f32 %v2763, %v2775
        %v2788 = vsub.f32 %v2764, %v2776
        %v2789 = vmul.f32 %v2787, %v2785
        %v2790 = vmul.f32 %v2788, %v2786
        %v2791 = vld [vmem:[%s10] sm:$0x1]
        %v2793 = vlaneseq
        %v2794 = vshrl.u32 %v2793, 7
        %v2795 = vsub.s32 0, %v2794
        %v2796 = vrot.slane %v2791, %v2795
        %v2798 = vmul.f32 %v2789, %v2796
        %v2799 = vmul.f32 %v2790, %v2796
        %v2800 = vld [vmem:[%s11] sm:$0x1]
        %v2802 = vlaneseq
        %v2803 = vshrl.u32 %v2802, 7
        %v2804 = vsub.s32 0, %v2803
        %v2805 = vrot.slane %v2800, %v2804
        %v2807 = vadd.f32 %v2798, %v2805
        %v2808 = vadd.f32 %v2799, %v2805
        %2809 = vst [vmem:[%s417] sm:$0xff] %v2807
        %2810 = vst [vmem:[%s417 + $0x8] sm:$0xff] %v2808
        %s2811 = sand.u32 %s296, 1
        %s2812 = scalar_lea.sflag [#allocation3], %s2811
        %s2813 = sand.u32 %s296, 1
        %s2814 = smul.addr %s2813, 16
        %s2815 = scalar_lea.vmem [#allocation2], %s2814
        // Predicated region
        $region69: #{tpu_custom_call.1} parent=67 // pred_check
          %p2816 = pneg %p306
        $region70: #{tpu_custom_call.1} parent=67 // pred_check_branch
          %2818 = sbr.rel (%p2816) target = $region72
        $region71: #{tpu_custom_call.1} parent=67 // pred_region
          %s2820 = ssub.s32 256, 256
          %2821 = vsyncadd %s2812, %s2820
          %s2822 = smul.addr %s26, 2
          %s2823 = smul.addr %s2822, 128
          %s2824 = scalar_lea.hbm %s12, %s2823
          %s2825 = sshll.u32 %s2815, 4
          %s2826 = int_to_ptr.vmem [resolvable:$true] %s2825
          %2831 = dma.vmem_to_hbm [thread:$0]  %s2826, 256, %s2824, %s2812, 128, 128, 8
        $region72: #{tpu_custom_call.1} parent=67 // pred_fallthru
          _
      $region68: #{tpu_custom_call.1} parent=5 // pred_fallthru
        _
      %p2832 = scmp.le.s32.totalorder 2, %s21
      // Predicated region
      $region73: #{tpu_custom_call.1} parent=5 // pred_check
        %p2833 = pneg %p2832
      $region74: #{tpu_custom_call.1} parent=5 // pred_check_branch
        %2835 = sbr.rel (%p2833) target = $region76
      $region75: #{tpu_custom_call.1} parent=5 // pred_region
        %s2836 = ssub.s32 %s21, 2
        // Predicated region
        $region77: #{tpu_custom_call.1} parent=75 // pred_check
          %p2837 = pneg %p312
        $region78: #{tpu_custom_call.1} parent=75 // pred_check_branch
          %2839 = sbr.rel (%p2837) target = $region80
        $region79: #{tpu_custom_call.1} parent=75 // pred_region
          %s2840 = sand.u32 %s297, 1
          %s2841 = scalar_lea.sflag [#allocation3], %s2840
          %s2842 = sand.u32 %s297, 1
          %s2843 = smul.addr %s2842, 16
          %s2844 = scalar_lea.vmem [#allocation2], %s2843
          %2845 = dma.done %s2841, 256
        $region80: #{tpu_custom_call.1} parent=75 // pred_fallthru
          _
      $region76: #{tpu_custom_call.1} parent=5 // pred_fallthru
        _
    $region6: #{tpu_custom_call.1} parent=1 // loop_footer
      %s25 = sadd.s32 1, %s21
    $region7: #{tpu_custom_call.1} parent=1 // loop_footer_branch
      %20 = sbr.rel target = $region3
    $region8: #{tpu_custom_call.1} parent=1 // loop_exit
      _
    %2846 = vsyncpa [#allocation3], 1
    %s2847 = scalar_lea.sflag [#allocation3], 1
    %2848 = vsyncpa %s2847, 1

</llo_original>
